<compile_context>
chip_gen: v5e
topology: v5e:2x2
jax: 0.10.0
libtpu: 0.0.40
codegen_flags: <defaults>
</compile_context>

<pallas_src>
import jax
import jax.numpy as jnp
from jax.experimental import pallas as pl
from jax.experimental.pallas import tpu as pltpu

BN_EPS = 1e-5
C_PAD = 8  # xyz channel dim 3 zero-padded to 8 (sublane-friendly; numerically a no-op)


# ----------------------------------------------------------------------------
# Fused kernel: per-point MLP + running max over points + both FC heads
# ----------------------------------------------------------------------------
def _encoder_kernel(x_ref,
                    w1_ref, t1_ref, w2_ref, t2_ref,
                    w3_ref, t3_ref, w4_ref, t4_ref,
                    wh1_ref, th1_ref, wh2_ref, th2_ref,
                    wh3_ref, bh3_ref,
                    out_ref,
                    feat_acc):
    k = pl.program_id(1)

    @pl.when(k == 0)
    def _():
        feat_acc[...] = jnp.full_like(feat_acc, -jnp.inf)

    bt, tn, cp = x_ref.shape
    x = x_ref[...].reshape(bt * tn, cp)  # (Bt*TN, Cpad): M >= 256 for the MXU

    def mm(h, w_ref, shift_ref, relu=True):
        # BN scale already folded into W; only the +shift remains here.
        y = jnp.dot(h.astype(w_ref.dtype), w_ref[...],
                    preferred_element_type=jnp.float32) + shift_ref[...]
        return jnp.maximum(y, 0.0) if relu else y

    h = mm(x, w1_ref, t1_ref)                       # (Bt*TN, 128)
    h = mm(h, w2_ref, t2_ref)                       # (Bt*TN, 128)
    h = mm(h, w3_ref, t3_ref)                       # (Bt*TN, 256)
    h = mm(h, w4_ref, t4_ref, relu=False)           # (Bt*TN, 512), no ReLU pre-max

    tile_max = jnp.max(h.reshape(bt, tn, -1), axis=1)        # (Bt, 512)
    feat_acc[...] = jnp.maximum(feat_acc[...], tile_max)

    @pl.when(k == pl.num_programs(1) - 1)
    def _():
        f = feat_acc[...]                                    # (Bt, 512)
        g = mm(f, wh1_ref, th1_ref)                          # (Bt, 512)  [mu|sigma]
        g = mm(g, wh2_ref, th2_ref)                          # (Bt, 256)  block-diag
        y = mm(g, wh3_ref, bh3_ref, relu=False)              # (Bt, OUT_PAD)
        out_ref[...] = y[:, None, :]


# ----------------------------------------------------------------------------
# Host-side parameter packing (BN folding, branch concat, bf16 cast)
# ----------------------------------------------------------------------------
def _fold_bn(w, b, gamma, beta, mean, var):
    # (x@W + b - mean) * scale + beta == x @ (W*scale) + ((b - mean)*scale + beta)
    scale = gamma / jnp.sqrt(var + BN_EPS)
    return w * scale[None, :], ((b - mean) * scale + beta)[None, :]


def _block_diag(a, b):
    m1, n1 = a.shape
    m2, n2 = b.shape
    out = jnp.zeros((m1 + m2, n1 + n2), a.dtype)
    out = out.at[:m1, :n1].set(a)
    out = out.at[m1:, n1:].set(b)
    return out


def _pack_params(params, compute_dtype):
    w1, t1 = _fold_bn(*params['conv1'])
    w1 = jnp.pad(w1, ((0, C_PAD - w1.shape[0]), (0, 0)))     # zero rows: no-op
    w2, t2 = _fold_bn(*params['conv2'])
    w3, t3 = _fold_bn(*params['conv3'])
    w4, t4 = _fold_bn(*params['conv4'])

    wm1, tm1 = _fold_bn(*params['fc1_m'])
    wv1, tv1 = _fold_bn(*params['fc1_v'])
    wm2, tm2 = _fold_bn(*params['fc2_m'])
    wv2, tv2 = _fold_bn(*params['fc2_v'])
    wm3, bm3 = params['fc3_m']
    wv3, bv3 = params['fc3_v']

    zdim = wm3.shape[1]
    out_pad = max(128, -(-2 * zdim // 128) * 128)            # lane-dense output

    # layer 1 of both heads: concatenated columns -> one (512, 512) matmul
    wh1 = jnp.concatenate([wm1, wv1], axis=1)
    th1 = jnp.concatenate([tm1, tv1], axis=1)
    # layer 2: block-diagonal -> one (512, 256) matmul
    wh2 = _block_diag(wm2, wv2)
    th2 = jnp.concatenate([tm2, tv2], axis=1)
    # layer 3: block-diagonal, zero-padded to OUT_PAD lanes -> one (256, 128) matmul
    wh3 = jnp.zeros((wm3.shape[0] + wv3.shape[0], out_pad), jnp.float32)
    wh3 = wh3.at[:wm3.shape[0], :zdim].set(wm3)
    wh3 = wh3.at[wm3.shape[0]:, zdim:2 * zdim].set(wv3)
    bh3 = jnp.zeros((1, out_pad), jnp.float32)
    bh3 = bh3.at[0, :zdim].set(bm3).at[0, zdim:2 * zdim].set(bv3)

    weights = [w1, w2, w3, w4, wh1, wh2, wh3]
    shifts = [t1, t2, t3, t4, th1, th2, bh3]
    weights = [w.astype(compute_dtype) for w in weights]      # bf16 MXU inputs
    shifts = [s.astype(jnp.float32) for s in shifts]          # f32 epilogue

    flat = []
    for w, s in zip(weights, shifts):
        flat += [w, s]
    return flat, zdim, out_pad


def _choose_tiles(B, N):
    # Tile the point axis only for large N so the (Bt*TN, 512) f32 activation slab
    # stays small (v7x VMEM is 64 MiB / 32 MiB scoped); at small N keep the whole axis.
    tn = N
    if N > 2048:
        for cand in (2048, 1024, 512, 256, 128):
            if N % cand == 0:
                tn = cand
                break
    # Batch several point clouds per grid step so the matmul M-dim is >= 256.
    bt = 1
    while bt < B and bt * tn < 256:
        bt *= 2
    return bt, tn


# ----------------------------------------------------------------------------
# Forward wrapper (single pallas_call)
# ----------------------------------------------------------------------------
def autoencoder_forward(pcd, params, compute_dtype=jnp.bfloat16):
    """Autoencoder.forward: pcd (B, N, 3) -> (code_mu, code_sigma), each (B, zdim)."""
    B, N, C = pcd.shape
    flat, zdim, out_pad = _pack_params(params, compute_dtype)
    feat_dim = flat[6].shape[1]  # conv4 output channels (512)

    bt, tn = _choose_tiles(B, N)
    b_pad = -(-B // bt) * bt
    x = jnp.pad(pcd, ((0, b_pad - B), (0, 0), (0, C_PAD - C)))

    in_specs = [pl.BlockSpec((bt, tn, C_PAD), lambda b, k: (b, k, 0))]
    for a in flat:
        in_specs.append(
            pl.BlockSpec(a.shape, lambda b, k, _nd=a.ndim: (0,) * _nd))

    out = pl.pallas_call(
        _encoder_kernel,
        out_shape=jax.ShapeDtypeStruct((b_pad, 1, out_pad), jnp.float32),
        grid=(b_pad // bt, N // tn),
        in_specs=in_specs,
        out_specs=pl.BlockSpec((bt, 1, out_pad), lambda b, k: (b, 0, 0)),
        scratch_shapes=[pltpu.VMEM((bt, feat_dim), jnp.float32)],
        compiler_params=pltpu.CompilerParams(
            dimension_semantics=("parallel", "arbitrary")),
    )(x, *flat)

    out = out[:B, 0, :]
    return out[:, :zdim], out[:, zdim:2 * zdim]


# TODO(synk): get_loss (reparameterize_gaussian, PointNetDecoder, chamfer) is not
# part of forward() and is not implemented here.


# ----------------------------------------------------------------------------
# Parameter setup (deterministic, synthetic)
# ----------------------------------------------------------------------------
def init_params(key, latent_dim=32, in_dim=3):
    ks = iter(jax.random.split(key, 64))

    def lin(cin, cout):
        w = jax.random.normal(next(ks), (cin, cout), jnp.float32) / jnp.sqrt(cin)
        b = 0.01 * jax.random.normal(next(ks), (cout,), jnp.float32)
        return w, b

    def bn(c):
        gamma = 1.0 + 0.1 * jax.random.normal(next(ks), (c,), jnp.float32)
        beta = 0.1 * jax.random.normal(next(ks), (c,), jnp.float32)
        mean = 0.05 * jax.random.normal(next(ks), (c,), jnp.float32)
        var = 0.5 + jax.random.uniform(next(ks), (c,), jnp.float32)
        return gamma, beta, mean, var

    p = {}
    p['conv1'] = (*lin(in_dim, 128), *bn(128))
    p['conv2'] = (*lin(128, 128), *bn(128))
    p['conv3'] = (*lin(128, 256), *bn(256))
    p['conv4'] = (*lin(256, 512), *bn(512))
    p['fc1_m'] = (*lin(512, 256), *bn(256))
    p['fc2_m'] = (*lin(256, 128), *bn(128))
    p['fc3_m'] = lin(128, latent_dim)
    p['fc1_v'] = (*lin(512, 256), *bn(256))
    p['fc2_v'] = (*lin(256, 128), *bn(128))
    p['fc3_v'] = lin(128, latent_dim)
    return p


# ----------------------------------------------------------------------------
# Pure-JAX (f32) reference for verification
# ----------------------------------------------------------------------------
def reference_forward(pcd, params):
    def layer(h, name, relu=True):
        w, b, gamma, beta, mean, var = params[name]
        y = h @ w + b
        y = (y - mean) / jnp.sqrt(var + BN_EPS) * gamma + beta
        return jnp.maximum(y, 0.0) if relu else y

    h = layer(pcd, 'conv1')
    h = layer(h, 'conv2')
    h = layer(h, 'conv3')
    h = layer(h, 'conv4', relu=False)
    feat = jnp.max(h, axis=1)  # (B, 512)

    def head(f, sfx):
        h = layer(f, 'fc1_' + sfx)
        h = layer(h, 'fc2_' + sfx)
        w, b = params['fc3_' + sfx]
        return h @ w + b

    return head(feat, 'm'), head(feat, 'v')


if __name__ == "__main__":
    key = jax.random.PRNGKey(0)
    kparam, kdata = jax.random.split(key)

    B, N, latent_dim = 2, 128, 32
    params = init_params(kparam, latent_dim=latent_dim, in_dim=3)
    pcd = jax.random.normal(kdata, (B, N, 3), jnp.float32)

    mu, sigma = jax.jit(lambda x: autoencoder_forward(x, params))(pcd)
    jax.block_until_ready((mu, sigma))

    mu_ref, sigma_ref = reference_forward(pcd, params)
    assert mu.shape == (B, latent_dim) and sigma.shape == (B, latent_dim)
    # Kernel uses bf16 MXU inputs (f32 accumulation); compare against f32 reference.
    assert jnp.allclose(mu, mu_ref, atol=5e-2, rtol=5e-2), \
        float(jnp.max(jnp.abs(mu - mu_ref)))
    assert jnp.allclose(sigma, sigma_ref, atol=5e-2, rtol=5e-2), \
        float(jnp.max(jnp.abs(sigma - sigma_ref)))

    print("KERNEL_OK")
</pallas_src>

<mosaic_0001>
module attributes {stable_mosaic.version = 11 : i64} {
  func.func @_encoder_kernel(%arg0: i32, %arg1: i32, %arg2: memref<2x128x8xf32, #tpu.memory_space<vmem>>, %arg3: memref<8x128xbf16, #tpu.memory_space<vmem>>, %arg4: memref<1x128xf32, #tpu.memory_space<vmem>>, %arg5: memref<128x128xbf16, #tpu.memory_space<vmem>>, %arg6: memref<1x128xf32, #tpu.memory_space<vmem>>, %arg7: memref<128x256xbf16, #tpu.memory_space<vmem>>, %arg8: memref<1x256xf32, #tpu.memory_space<vmem>>, %arg9: memref<256x512xbf16, #tpu.memory_space<vmem>>, %arg10: memref<1x512xf32, #tpu.memory_space<vmem>>, %arg11: memref<512x512xbf16, #tpu.memory_space<vmem>>, %arg12: memref<1x512xf32, #tpu.memory_space<vmem>>, %arg13: memref<512x256xbf16, #tpu.memory_space<vmem>>, %arg14: memref<1x256xf32, #tpu.memory_space<vmem>>, %arg15: memref<256x128xbf16, #tpu.memory_space<vmem>>, %arg16: memref<1x128xf32, #tpu.memory_space<vmem>>, %arg17: memref<2x1x128xf32, #tpu.memory_space<vmem>>, %arg18: memref<2x512xf32, #tpu.memory_space<vmem>>) attributes {dimension_semantics = [#tpu.dimension_semantics<parallel>, #tpu.dimension_semantics<arbitrary>], iteration_bounds = array<i64: 1, 1>, scalar_prefetch = 0 : i64, scratch_operands = 1 : i64, tpu.core_type = #tpu.core_type<tc>, window_params = [{transform_indices = @transform_0, window_bounds = array<i64: 2, 128, 8>}, {pipeline_mode = #tpu.pipeline_mode<synchronous>, transform_indices = @transform_1, window_bounds = array<i64: 8, 128>}, {pipeline_mode = #tpu.pipeline_mode<synchronous>, transform_indices = @transform_2, window_bounds = array<i64: 1, 128>}, {pipeline_mode = #tpu.pipeline_mode<synchronous>, transform_indices = @transform_3, window_bounds = array<i64: 128, 128>}, {pipeline_mode = #tpu.pipeline_mode<synchronous>, transform_indices = @transform_4, window_bounds = array<i64: 1, 128>}, {pipeline_mode = #tpu.pipeline_mode<synchronous>, transform_indices = @transform_5, window_bounds = array<i64: 128, 256>}, {pipeline_mode = #tpu.pipeline_mode<synchronous>, transform_indices = @transform_6, window_bounds = array<i64: 1, 256>}, {pipeline_mode = #tpu.pipeline_mode<synchronous>, transform_indices = @transform_7, window_bounds = array<i64: 256, 512>}, {pipeline_mode = #tpu.pipeline_mode<synchronous>, transform_indices = @transform_8, window_bounds = array<i64: 1, 512>}, {pipeline_mode = #tpu.pipeline_mode<synchronous>, transform_indices = @transform_9, window_bounds = array<i64: 512, 512>}, {pipeline_mode = #tpu.pipeline_mode<synchronous>, transform_indices = @transform_10, window_bounds = array<i64: 1, 512>}, {pipeline_mode = #tpu.pipeline_mode<synchronous>, transform_indices = @transform_11, window_bounds = array<i64: 512, 256>}, {pipeline_mode = #tpu.pipeline_mode<synchronous>, transform_indices = @transform_12, window_bounds = array<i64: 1, 256>}, {pipeline_mode = #tpu.pipeline_mode<synchronous>, transform_indices = @transform_13, window_bounds = array<i64: 256, 128>}, {pipeline_mode = #tpu.pipeline_mode<synchronous>, transform_indices = @transform_14, window_bounds = array<i64: 1, 128>}, {transform_indices = @transform_15, window_bounds = array<i64: 2, 1, 128>}]} {
    %c0_i32 = arith.constant 0 : i32
    %0 = arith.cmpi eq, %arg1, %c0_i32 : i32
    %1 = arith.extui %0 : i1 to i32
    %c0_i32_0 = arith.constant 0 : i32
    %2 = arith.cmpi ne, %1, %c0_i32_0 : i32
    scf.if %2 {
      %cst_32 = arith.constant 0xFF800000 : f32
      %43 = vector.broadcast %cst_32 : f32 to vector<2x512xf32>
      %c0_33 = arith.constant 0 : index
      %c0_34 = arith.constant 0 : index
      %44 = vector.load %arg18[%c0_33, %c0_34] : memref<2x512xf32, #tpu.memory_space<vmem>>, vector<2x512xf32>
      tpu.vector_store %arg18[%c0_33, %c0_34], %43 {strides = array<i32>} : memref<2x512xf32, #tpu.memory_space<vmem>>, vector<2x512xf32>,
    } else {
    }
    %c0 = arith.constant 0 : index
    %c0_1 = arith.constant 0 : index
    %c0_2 = arith.constant 0 : index
    %3 = vector.load %arg2[%c0, %c0_1, %c0_2] : memref<2x128x8xf32, #tpu.memory_space<vmem>>, vector<2x128x8xf32>
    %4 = vector.shape_cast %3 : vector<2x128x8xf32> to vector<256x8xf32>
    %5 = arith.truncf %4 : vector<256x8xf32> to vector<256x8xbf16>
    %c0_3 = arith.constant 0 : index
    %c0_4 = arith.constant 0 : index
    %6 = vector.load %arg3[%c0_3, %c0_4] : memref<8x128xbf16, #tpu.memory_space<vmem>>, vector<8x128xbf16>
    %cst = arith.constant dense<0.000000e+00> : vector<256x128xf32>
    %7 = tpu.matmul %5, %6, %cst {dimension_numbers = #tpu.dot_dimension_numbers<[1], [0], [0], [1], [0, 0, 1, 1], [], []>} : vector<256x8xbf16>, vector<8x128xbf16>, vector<256x128xf32> -> vector<256x128xf32>
    %c0_5 = arith.constant 0 : index
    %c0_6 = arith.constant 0 : index
    %8 = vector.load %arg4[%c0_5, %c0_6] : memref<1x128xf32, #tpu.memory_space<vmem>>, vector<1x128xf32>
    %9 = vector.broadcast %8 : vector<1x128xf32> to vector<256x128xf32>
    %10 = arith.addf %7, %9 : vector<256x128xf32>
    %cst_7 = arith.constant 0.000000e+00 : f32
    %11 = vector.broadcast %cst_7 : f32 to vector<256x128xf32>
    %12 = arith.maximumf %10, %11 : vector<256x128xf32>
    %13 = arith.truncf %12 : vector<256x128xf32> to vector<256x128xbf16>
    %c0_8 = arith.constant 0 : index
    %c0_9 = arith.constant 0 : index
    %14 = vector.load %arg5[%c0_8, %c0_9] : memref<128x128xbf16, #tpu.memory_space<vmem>>, vector<128x128xbf16>
    %cst_10 = arith.constant dense<0.000000e+00> : vector<256x128xf32>
    %15 = tpu.matmul %13, %14, %cst_10 {dimension_numbers = #tpu.dot_dimension_numbers<[1], [0], [0], [1], [0, 0, 1, 1], [], []>} : vector<256x128xbf16>, vector<128x128xbf16>, vector<256x128xf32> -> vector<256x128xf32>
    %c0_11 = arith.constant 0 : index
    %c0_12 = arith.constant 0 : index
    %16 = vector.load %arg6[%c0_11, %c0_12] : memref<1x128xf32, #tpu.memory_space<vmem>>, vector<1x128xf32>
    %17 = vector.broadcast %16 : vector<1x128xf32> to vector<256x128xf32>
    %18 = arith.addf %15, %17 : vector<256x128xf32>
    %cst_13 = arith.constant 0.000000e+00 : f32
    %19 = vector.broadcast %cst_13 : f32 to vector<256x128xf32>
    %20 = arith.maximumf %18, %19 : vector<256x128xf32>
    %21 = arith.truncf %20 : vector<256x128xf32> to vector<256x128xbf16>
    %c0_14 = arith.constant 0 : index
    %c0_15 = arith.constant 0 : index
    %22 = vector.load %arg7[%c0_14, %c0_15] : memref<128x256xbf16, #tpu.memory_space<vmem>>, vector<128x256xbf16>
    %cst_16 = arith.constant dense<0.000000e+00> : vector<256x256xf32>
    %23 = tpu.matmul %21, %22, %cst_16 {dimension_numbers = #tpu.dot_dimension_numbers<[1], [0], [0], [1], [0, 0, 1, 1], [], []>} : vector<256x128xbf16>, vector<128x256xbf16>, vector<256x256xf32> -> vector<256x256xf32>
    %c0_17 = arith.constant 0 : index
    %c0_18 = arith.constant 0 : index
    %24 = vector.load %arg8[%c0_17, %c0_18] : memref<1x256xf32, #tpu.memory_space<vmem>>, vector<1x256xf32>
    %25 = vector.broadcast %24 : vector<1x256xf32> to vector<256x256xf32>
    %26 = arith.addf %23, %25 : vector<256x256xf32>
    %cst_19 = arith.constant 0.000000e+00 : f32
    %27 = vector.broadcast %cst_19 : f32 to vector<256x256xf32>
    %28 = arith.maximumf %26, %27 : vector<256x256xf32>
    %29 = arith.truncf %28 : vector<256x256xf32> to vector<256x256xbf16>
    %c0_20 = arith.constant 0 : index
    %c0_21 = arith.constant 0 : index
    %30 = vector.load %arg9[%c0_20, %c0_21] : memref<256x512xbf16, #tpu.memory_space<vmem>>, vector<256x512xbf16>
    %cst_22 = arith.constant dense<0.000000e+00> : vector<256x512xf32>
    %31 = tpu.matmul %29, %30, %cst_22 {dimension_numbers = #tpu.dot_dimension_numbers<[1], [0], [0], [1], [0, 0, 1, 1], [], []>} : vector<256x256xbf16>, vector<256x512xbf16>, vector<256x512xf32> -> vector<256x512xf32>
    %c0_23 = arith.constant 0 : index
    %c0_24 = arith.constant 0 : index
    %32 = vector.load %arg10[%c0_23, %c0_24] : memref<1x512xf32, #tpu.memory_space<vmem>>, vector<1x512xf32>
    %33 = vector.broadcast %32 : vector<1x512xf32> to vector<256x512xf32>
    %34 = arith.addf %31, %33 : vector<256x512xf32>
    %35 = vector.shape_cast %34 : vector<256x512xf32> to vector<2x128x512xf32>
    %cst_25 = arith.constant dense<0xFF800000> : vector<2x512xf32>
    %36 = vector.multi_reduction <maximumf>, %35, %cst_25 [1] : vector<2x128x512xf32> to vector<2x512xf32>
    %c0_26 = arith.constant 0 : index
    %c0_27 = arith.constant 0 : index
    %37 = vector.load %arg18[%c0_26, %c0_27] : memref<2x512xf32, #tpu.memory_space<vmem>>, vector<2x512xf32>
    %38 = arith.maximumf %37, %36 : vector<2x512xf32>
    %c0_28 = arith.constant 0 : index
    %c0_29 = arith.constant 0 : index
    %39 = vector.load %arg18[%c0_28, %c0_29] : memref<2x512xf32, #tpu.memory_space<vmem>>, vector<2x512xf32>
    tpu.vector_store %arg18[%c0_28, %c0_29], %38 {strides = array<i32>} : memref<2x512xf32, #tpu.memory_space<vmem>>, vector<2x512xf32>,
    %c0_i32_30 = arith.constant 0 : i32
    %40 = arith.cmpi eq, %arg1, %c0_i32_30 : i32
    %41 = arith.extui %40 : i1 to i32
    %c0_i32_31 = arith.constant 0 : i32
    %42 = arith.cmpi ne, %41, %c0_i32_31 : i32
    scf.if %42 {
      %c0_32 = arith.constant 0 : index
      %c0_33 = arith.constant 0 : index
      %43 = vector.load %arg18[%c0_32, %c0_33] : memref<2x512xf32, #tpu.memory_space<vmem>>, vector<2x512xf32>
      %44 = arith.truncf %43 : vector<2x512xf32> to vector<2x512xbf16>
      %c0_34 = arith.constant 0 : index
      %c0_35 = arith.constant 0 : index
      %45 = vector.load %arg11[%c0_34, %c0_35] : memref<512x512xbf16, #tpu.memory_space<vmem>>, vector<512x512xbf16>
      %cst_36 = arith.constant dense<0.000000e+00> : vector<2x512xf32>
      %46 = tpu.matmul %44, %45, %cst_36 {dimension_numbers = #tpu.dot_dimension_numbers<[1], [0], [0], [1], [0, 0, 1, 1], [], []>} : vector<2x512xbf16>, vector<512x512xbf16>, vector<2x512xf32> -> vector<2x512xf32>
      %c0_37 = arith.constant 0 : index
      %c0_38 = arith.constant 0 : index
      %47 = vector.load %arg12[%c0_37, %c0_38] : memref<1x512xf32, #tpu.memory_space<vmem>>, vector<1x512xf32>
      %48 = vector.broadcast %47 : vector<1x512xf32> to vector<2x512xf32>
      %49 = arith.addf %46, %48 : vector<2x512xf32>
      %cst_39 = arith.constant 0.000000e+00 : f32
      %50 = vector.broadcast %cst_39 : f32 to vector<2x512xf32>
      %51 = arith.maximumf %49, %50 : vector<2x512xf32>
      %52 = arith.truncf %51 : vector<2x512xf32> to vector<2x512xbf16>
      %c0_40 = arith.constant 0 : index
      %c0_41 = arith.constant 0 : index
      %53 = vector.load %arg13[%c0_40, %c0_41] : memref<512x256xbf16, #tpu.memory_space<vmem>>, vector<512x256xbf16>
      %cst_42 = arith.constant dense<0.000000e+00> : vector<2x256xf32>
      %54 = tpu.matmul %52, %53, %cst_42 {dimension_numbers = #tpu.dot_dimension_numbers<[1], [0], [0], [1], [0, 0, 1, 1], [], []>} : vector<2x512xbf16>, vector<512x256xbf16>, vector<2x256xf32> -> vector<2x256xf32>
      %c0_43 = arith.constant 0 : index
      %c0_44 = arith.constant 0 : index
      %55 = vector.load %arg14[%c0_43, %c0_44] : memref<1x256xf32, #tpu.memory_space<vmem>>, vector<1x256xf32>
      %56 = vector.broadcast %55 : vector<1x256xf32> to vector<2x256xf32>
      %57 = arith.addf %54, %56 : vector<2x256xf32>
      %cst_45 = arith.constant 0.000000e+00 : f32
      %58 = vector.broadcast %cst_45 : f32 to vector<2x256xf32>
      %59 = arith.maximumf %57, %58 : vector<2x256xf32>
      %60 = arith.truncf %59 : vector<2x256xf32> to vector<2x256xbf16>
      %c0_46 = arith.constant 0 : index
      %c0_47 = arith.constant 0 : index
      %61 = vector.load %arg15[%c0_46, %c0_47] : memref<256x128xbf16, #tpu.memory_space<vmem>>, vector<256x128xbf16>
      %cst_48 = arith.constant dense<0.000000e+00> : vector<2x128xf32>
      %62 = tpu.matmul %60, %61, %cst_48 {dimension_numbers = #tpu.dot_dimension_numbers<[1], [0], [0], [1], [0, 0, 1, 1], [], []>} : vector<2x256xbf16>, vector<256x128xbf16>, vector<2x128xf32> -> vector<2x128xf32>
      %c0_49 = arith.constant 0 : index
      %c0_50 = arith.constant 0 : index
      %63 = vector.load %arg16[%c0_49, %c0_50] : memref<1x128xf32, #tpu.memory_space<vmem>>, vector<1x128xf32>
      %64 = vector.broadcast %63 : vector<1x128xf32> to vector<2x128xf32>
      %65 = arith.addf %62, %64 : vector<2x128xf32>
      %66 = vector.shape_cast %65 : vector<2x128xf32> to vector<2x1x128xf32>
      %c0_51 = arith.constant 0 : index
      %c0_52 = arith.constant 0 : index
      %c0_53 = arith.constant 0 : index
      %67 = vector.load %arg17[%c0_51, %c0_52, %c0_53] : memref<2x1x128xf32, #tpu.memory_space<vmem>>, vector<2x1x128xf32>
      tpu.vector_store %arg17[%c0_51, %c0_52, %c0_53], %66 {strides = array<i32>} : memref<2x1x128xf32, #tpu.memory_space<vmem>>, vector<2x1x128xf32>,
    } else {
    }
    return
  }
  func.func @transform_0(%arg0: i32, %arg1: i32) -> (i32, i32, i32) {
    %c0_i32 = arith.constant 0 : i32
    %c0_i32_0 = arith.constant 0 : i32
    return %arg0, %arg1, %c0_i32 : i32, i32, i32
  }
  func.func @transform_1(%arg0: i32, %arg1: i32) -> (i32, i32) {
    %c0_i32 = arith.constant 0 : i32
    %c0_i32_0 = arith.constant 0 : i32
    %c0_i32_1 = arith.constant 0 : i32
    return %c0_i32, %c0_i32_0 : i32, i32
  }
  func.func @transform_2(%arg0: i32, %arg1: i32) -> (i32, i32) {
    %c0_i32 = arith.constant 0 : i32
    %c0_i32_0 = arith.constant 0 : i32
    %c0_i32_1 = arith.constant 0 : i32
    return %c0_i32, %c0_i32_0 : i32, i32
  }
  func.func @transform_3(%arg0: i32, %arg1: i32) -> (i32, i32) {
    %c0_i32 = arith.constant 0 : i32
    %c0_i32_0 = arith.constant 0 : i32
    %c0_i32_1 = arith.constant 0 : i32
    return %c0_i32, %c0_i32_0 : i32, i32
  }
  func.func @transform_4(%arg0: i32, %arg1: i32) -> (i32, i32) {
    %c0_i32 = arith.constant 0 : i32
    %c0_i32_0 = arith.constant 0 : i32
    %c0_i32_1 = arith.constant 0 : i32
    return %c0_i32, %c0_i32_0 : i32, i32
  }
  func.func @transform_5(%arg0: i32, %arg1: i32) -> (i32, i32) {
    %c0_i32 = arith.constant 0 : i32
    %c0_i32_0 = arith.constant 0 : i32
    %c0_i32_1 = arith.constant 0 : i32
    return %c0_i32, %c0_i32_0 : i32, i32
  }
  func.func @transform_6(%arg0: i32, %arg1: i32) -> (i32, i32) {
    %c0_i32 = arith.constant 0 : i32
    %c0_i32_0 = arith.constant 0 : i32
    %c0_i32_1 = arith.constant 0 : i32
    return %c0_i32, %c0_i32_0 : i32, i32
  }
  func.func @transform_7(%arg0: i32, %arg1: i32) -> (i32, i32) {
    %c0_i32 = arith.constant 0 : i32
    %c0_i32_0 = arith.constant 0 : i32
    %c0_i32_1 = arith.constant 0 : i32
    return %c0_i32, %c0_i32_0 : i32, i32
  }
  func.func @transform_8(%arg0: i32, %arg1: i32) -> (i32, i32) {
    %c0_i32 = arith.constant 0 : i32
    %c0_i32_0 = arith.constant 0 : i32
    %c0_i32_1 = arith.constant 0 : i32
    return %c0_i32, %c0_i32_0 : i32, i32
  }
  func.func @transform_9(%arg0: i32, %arg1: i32) -> (i32, i32) {
    %c0_i32 = arith.constant 0 : i32
    %c0_i32_0 = arith.constant 0 : i32
    %c0_i32_1 = arith.constant 0 : i32
    return %c0_i32, %c0_i32_0 : i32, i32
  }
  func.func @transform_10(%arg0: i32, %arg1: i32) -> (i32, i32) {
    %c0_i32 = arith.constant 0 : i32
    %c0_i32_0 = arith.constant 0 : i32
    %c0_i32_1 = arith.constant 0 : i32
    return %c0_i32, %c0_i32_0 : i32, i32
  }
  func.func @transform_11(%arg0: i32, %arg1: i32) -> (i32, i32) {
    %c0_i32 = arith.constant 0 : i32
    %c0_i32_0 = arith.constant 0 : i32
    %c0_i32_1 = arith.constant 0 : i32
    return %c0_i32, %c0_i32_0 : i32, i32
  }
  func.func @transform_12(%arg0: i32, %arg1: i32) -> (i32, i32) {
    %c0_i32 = arith.constant 0 : i32
    %c0_i32_0 = arith.constant 0 : i32
    %c0_i32_1 = arith.constant 0 : i32
    return %c0_i32, %c0_i32_0 : i32, i32
  }
  func.func @transform_13(%arg0: i32, %arg1: i32) -> (i32, i32) {
    %c0_i32 = arith.constant 0 : i32
    %c0_i32_0 = arith.constant 0 : i32
    %c0_i32_1 = arith.constant 0 : i32
    return %c0_i32, %c0_i32_0 : i32, i32
  }
  func.func @transform_14(%arg0: i32, %arg1: i32) -> (i32, i32) {
    %c0_i32 = arith.constant 0 : i32
    %c0_i32_0 = arith.constant 0 : i32
    %c0_i32_1 = arith.constant 0 : i32
    return %c0_i32, %c0_i32_0 : i32, i32
  }
  func.func @transform_15(%arg0: i32, %arg1: i32) -> (i32, i32, i32) {
    %c0_i32 = arith.constant 0 : i32
    %c0_i32_0 = arith.constant 0 : i32
    %c0_i32_1 = arith.constant 0 : i32
    return %arg0, %c0_i32, %c0_i32_0 : i32, i32, i32
  }
}

</mosaic_0001>

<llo_original>
// kernel: _lambda_.1
$region0: #{_lambda_.1}
  #allocation0 [shape = 'u32[]', space=smem, size = 0x4, offset = 0x4, fixed_abs, tag = 'smem constant byte address 0x4 - core index']
  #allocation1 [shape = 'u32[72,128]{1,0:T(1,128)}', space=vmem, size = 0x9000, scoped, tag = 'internal scratch']
  #allocation2 [shape = 'f32[2,512]{1,0:T(2,128)}', space=vmem, size = 0x1000, scoped, tag = 'scratch operand']
  %s0 = inlined_call_operand.vmem [shape: f32[2,128,8], index: 0, kind: input, shape index: {}]
  %s1 = inlined_call_operand.vmem [shape: bf16[8,128], index: 1, kind: input, shape index: {}]
  %s2 = inlined_call_operand.vmem [shape: f32[1,128], index: 2, kind: input, shape index: {}]
  %s3 = inlined_call_operand.hbm [shape: bf16[128,128], index: 3, kind: input, shape index: {}]
  %s4 = inlined_call_operand.vmem [shape: f32[1,128], index: 4, kind: input, shape index: {}]
  %s5 = inlined_call_operand.vmem [shape: bf16[128,256], index: 5, kind: input, shape index: {}]
  %s6 = inlined_call_operand.vmem [shape: f32[1,256], index: 6, kind: input, shape index: {}]
  %s7 = inlined_call_operand.vmem [shape: bf16[256,512], index: 7, kind: input, shape index: {}]
  %s8 = inlined_call_operand.vmem [shape: f32[1,512], index: 8, kind: input, shape index: {}]
  %s9 = inlined_call_operand.hbm [shape: bf16[512,512], index: 9, kind: input, shape index: {}]
  %s10 = inlined_call_operand.vmem [shape: f32[1,512], index: 10, kind: input, shape index: {}]
  %s11 = inlined_call_operand.hbm [shape: bf16[512,256], index: 11, kind: input, shape index: {}]
  %s12 = inlined_call_operand.vmem [shape: f32[1,256], index: 12, kind: input, shape index: {}]
  %s13 = inlined_call_operand.vmem [shape: bf16[256,128], index: 13, kind: input, shape index: {}]
  %s14 = inlined_call_operand.vmem [shape: f32[1,128], index: 14, kind: input, shape index: {}]
  %s15 = inlined_call_operand.vmem [shape: f32[2,1,128], index: 15, kind: output, shape index: {}]
  %s16 = sld [smem:[#allocation0]]
  $region90: #{_lambda_.1} parent=0
    _
  %s18 = ssub.s32 1, %s16
  %s19 = scalar_select 0, %s18, %s16
  $region1: #{_lambda_.1} parent=0
    #allocation3 [shape = 'u8[32768]{0}', space=vmem, size = 0x8000, scoped, tag = 'input window, operand 3, single buffered']
    #allocation4 [shape = 's32[1]{0}', space=sflag, size = 0x4, scoped, tag = 'scoped memory for _lambda_.1']
    #allocation5 [shape = 'u8[524288]{0}', space=vmem, size = 0x80000, scoped, tag = 'input window, operand 9, single buffered']
    #allocation6 [shape = 's32[1]{0}', space=sflag, size = 0x4, scoped, tag = 'scoped memory for _lambda_.1']
    #allocation7 [shape = 'u8[262144]{0}', space=vmem, size = 0x40000, scoped, tag = 'input window, operand 11, single buffered']
    %20 = vsyncpa [#allocation4], 0
    %21 = vsyncpa [#allocation6], 0
    // Predicated region
    $region2: #{_lambda_.1} parent=1 // pred_check
      _
    $region3: #{_lambda_.1} parent=1 // pred_check_branch
      %23 = sbr.rel (0) target = $region5
    $region4: #{_lambda_.1} parent=1 // pred_region
      _
    $region5: #{_lambda_.1} parent=1 // pred_fallthru
      _
    // Predicated region
    $region6: #{_lambda_.1} parent=1 // pred_check
      _
    $region7: #{_lambda_.1} parent=1 // pred_check_branch
      %25 = sbr.rel (0) target = $region9
    $region8: #{_lambda_.1} parent=1 // pred_region
      _
    $region9: #{_lambda_.1} parent=1 // pred_fallthru
      _
    // Predicated region
    $region10: #{_lambda_.1} parent=1 // pred_check
      _
    $region11: #{_lambda_.1} parent=1 // pred_check_branch
      %27 = sbr.rel (0) target = $region13
    $region12: #{_lambda_.1} parent=1 // pred_region
      _
    $region13: #{_lambda_.1} parent=1 // pred_fallthru
      _
    // Predicated region
    $region14: #{_lambda_.1} parent=1 // pred_check
      _
    $region15: #{_lambda_.1} parent=1 // pred_check_branch
      %29 = sbr.rel (0) target = $region17
    $region16: #{_lambda_.1} parent=1 // pred_region
      %31 = vsyncadd [#allocation4], 0
      %s32 = sshll.u32 %s3, 4
      %s33 = int_to_ptr.hbm [resolvable:$true] %s32
      %s34 = sshll.u32 [#allocation3], 4
      %s35 = int_to_ptr.vmem [resolvable:$true] %s34
      %40 = dma.hbm_to_vmem [thread:$0]  %s33, 1024, %s35, [#allocation4], 64, 64, 4
    $region17: #{_lambda_.1} parent=1 // pred_fallthru
      _
    // Predicated region
    $region18: #{_lambda_.1} parent=1 // pred_check
      _
    $region19: #{_lambda_.1} parent=1 // pred_check_branch
      %42 = sbr.rel (0) target = $region21
    $region20: #{_lambda_.1} parent=1 // pred_region
      _
    $region21: #{_lambda_.1} parent=1 // pred_fallthru
      _
    // Predicated region
    $region22: #{_lambda_.1} parent=1 // pred_check
      _
    $region23: #{_lambda_.1} parent=1 // pred_check_branch
      %44 = sbr.rel (0) target = $region25
    $region24: #{_lambda_.1} parent=1 // pred_region
      _
    $region25: #{_lambda_.1} parent=1 // pred_fallthru
      _
    // Predicated region
    $region26: #{_lambda_.1} parent=1 // pred_check
      _
    $region27: #{_lambda_.1} parent=1 // pred_check_branch
      %46 = sbr.rel (0) target = $region29
    $region28: #{_lambda_.1} parent=1 // pred_region
      _
    $region29: #{_lambda_.1} parent=1 // pred_fallthru
      _
    // Predicated region
    $region30: #{_lambda_.1} parent=1 // pred_check
      _
    $region31: #{_lambda_.1} parent=1 // pred_check_branch
      %48 = sbr.rel (0) target = $region33
    $region32: #{_lambda_.1} parent=1 // pred_region
      _
    $region33: #{_lambda_.1} parent=1 // pred_fallthru
      _
    // Predicated region
    $region34: #{_lambda_.1} parent=1 // pred_check
      _
    $region35: #{_lambda_.1} parent=1 // pred_check_branch
      %50 = sbr.rel (0) target = $region37
    $region36: #{_lambda_.1} parent=1 // pred_region
      _
    $region37: #{_lambda_.1} parent=1 // pred_fallthru
      _
    // Predicated region
    $region38: #{_lambda_.1} parent=1 // pred_check
      _
    $region39: #{_lambda_.1} parent=1 // pred_check_branch
      %52 = sbr.rel (0) target = $region41
    $region40: #{_lambda_.1} parent=1 // pred_region
      %54 = vsyncadd [#allocation6], 0
      %s55 = sshll.u32 %s9, 4
      %s56 = int_to_ptr.hbm [resolvable:$true] %s55
      %s57 = sshll.u32 [#allocation5], 4
      %s58 = int_to_ptr.vmem [resolvable:$true] %s57
      %63 = dma.hbm_to_vmem [thread:$0]  %s56, 16384, %s58, [#allocation6], 256, 256, 16
    $region41: #{_lambda_.1} parent=1 // pred_fallthru
      _
    // Predicated region
    $region42: #{_lambda_.1} parent=1 // pred_check
      _
    $region43: #{_lambda_.1} parent=1 // pred_check_branch
      %65 = sbr.rel (0) target = $region45
    $region44: #{_lambda_.1} parent=1 // pred_region
      _
    $region45: #{_lambda_.1} parent=1 // pred_fallthru
      _
    // Predicated region
    $region46: #{_lambda_.1} parent=1 // pred_check
      _
    $region47: #{_lambda_.1} parent=1 // pred_check_branch
      %67 = sbr.rel (0) target = $region49
    $region48: #{_lambda_.1} parent=1 // pred_region
      %69 = vsyncadd [#allocation6], 0
      %s70 = sshll.u32 %s11, 4
      %s71 = int_to_ptr.hbm [resolvable:$true] %s70
      %s72 = sshll.u32 [#allocation7], 4
      %s73 = int_to_ptr.vmem [resolvable:$true] %s72
      %78 = dma.hbm_to_vmem [thread:$0]  %s71, 8192, %s73, [#allocation6], 128, 128, 8
    $region49: #{_lambda_.1} parent=1 // pred_fallthru
      _
    // Predicated region
    $region50: #{_lambda_.1} parent=1 // pred_check
      _
    $region51: #{_lambda_.1} parent=1 // pred_check_branch
      %80 = sbr.rel (0) target = $region53
    $region52: #{_lambda_.1} parent=1 // pred_region
      _
    $region53: #{_lambda_.1} parent=1 // pred_fallthru
      _
    // Predicated region
    $region54: #{_lambda_.1} parent=1 // pred_check
      _
    $region55: #{_lambda_.1} parent=1 // pred_check_branch
      %82 = sbr.rel (0) target = $region57
    $region56: #{_lambda_.1} parent=1 // pred_region
      _
    $region57: #{_lambda_.1} parent=1 // pred_fallthru
      _
    // Predicated region
    $region58: #{_lambda_.1} parent=1 // pred_check
      _
    $region59: #{_lambda_.1} parent=1 // pred_check_branch
      %84 = sbr.rel (0) target = $region61
    $region60: #{_lambda_.1} parent=1 // pred_region
      _
    $region61: #{_lambda_.1} parent=1 // pred_fallthru
      _
    // Predicated region
    $region62: #{_lambda_.1} parent=1 // pred_check
      _
    $region63: #{_lambda_.1} parent=1 // pred_check_branch
      %86 = sbr.rel (0) target = $region65
    $region64: #{_lambda_.1} parent=1 // pred_region
      %88 = dma.done [#allocation4], 1024
    $region65: #{_lambda_.1} parent=1 // pred_fallthru
      _
    // Predicated region
    $region66: #{_lambda_.1} parent=1 // pred_check
      _
    $region67: #{_lambda_.1} parent=1 // pred_check_branch
      %90 = sbr.rel (0) target = $region69
    $region68: #{_lambda_.1} parent=1 // pred_region
      %92 = dma.done [#allocation6], 16384
    $region69: #{_lambda_.1} parent=1 // pred_fallthru
      _
    // Predicated region
    $region70: #{_lambda_.1} parent=1 // pred_check
      _
    $region71: #{_lambda_.1} parent=1 // pred_check_branch
      %94 = sbr.rel (0) target = $region73
    $region72: #{_lambda_.1} parent=1 // pred_region
      %96 = dma.done [#allocation6], 8192
    $region73: #{_lambda_.1} parent=1 // pred_fallthru
      _
    %p98 = scmp.eq.s32.totalorder 0, 0
    // Predicated region
    $region74: #{_lambda_.1} parent=1 // pred_check
      %p99 = pneg %p98
    $region75: #{_lambda_.1} parent=1 // pred_check_branch
      %101 = sbr.rel (%p99) target = $region77
    $region76: #{_lambda_.1} parent=1 // pred_region
      %102 = vst [vmem:[#allocation2] sm:$0xff] -inf
    $region77: #{_lambda_.1} parent=1 // pred_fallthru
      _
    %v103 = vld [vmem:[%s0] sm:$0xff]
    %v104 = vld [vmem:[%s0 + $0x8] sm:$0xff]
    %v105 = vld [vmem:[%s0 + $0x10] sm:$0xff]
    %v106 = vld [vmem:[%s0 + $0x18] sm:$0xff]
    %v107 = vld [vmem:[%s0 + $0x20] sm:$0xff]
    %v108 = vld [vmem:[%s0 + $0x28] sm:$0xff]
    %v109 = vld [vmem:[%s0 + $0x30] sm:$0xff]
    %v110 = vld [vmem:[%s0 + $0x38] sm:$0xff]
    %v111 = vld [vmem:[%s0 + $0x40] sm:$0xff]
    %v112 = vld [vmem:[%s0 + $0x48] sm:$0xff]
    %v113 = vld [vmem:[%s0 + $0x50] sm:$0xff]
    %v114 = vld [vmem:[%s0 + $0x58] sm:$0xff]
    %v115 = vld [vmem:[%s0 + $0x60] sm:$0xff]
    %v116 = vld [vmem:[%s0 + $0x68] sm:$0xff]
    %v117 = vld [vmem:[%s0 + $0x70] sm:$0xff]
    %v118 = vld [vmem:[%s0 + $0x78] sm:$0xff]
    %v119 = vld [vmem:[%s0 + $0x80] sm:$0xff]
    %v120 = vld [vmem:[%s0 + $0x88] sm:$0xff]
    %v121 = vld [vmem:[%s0 + $0x90] sm:$0xff]
    %v122 = vld [vmem:[%s0 + $0x98] sm:$0xff]
    %v123 = vld [vmem:[%s0 + $0xa0] sm:$0xff]
    %v124 = vld [vmem:[%s0 + $0xa8] sm:$0xff]
    %v125 = vld [vmem:[%s0 + $0xb0] sm:$0xff]
    %v126 = vld [vmem:[%s0 + $0xb8] sm:$0xff]
    %v127 = vld [vmem:[%s0 + $0xc0] sm:$0xff]
    %v128 = vld [vmem:[%s0 + $0xc8] sm:$0xff]
    %v129 = vld [vmem:[%s0 + $0xd0] sm:$0xff]
    %v130 = vld [vmem:[%s0 + $0xd8] sm:$0xff]
    %v131 = vld [vmem:[%s0 + $0xe0] sm:$0xff]
    %v132 = vld [vmem:[%s0 + $0xe8] sm:$0xff]
    %v133 = vld [vmem:[%s0 + $0xf0] sm:$0xff]
    %v134 = vld [vmem:[%s0 + $0xf8] sm:$0xff]
    %v135 = vpack.c.bf16 %v104, %v103
    %v136 = vpack.c.bf16 %v106, %v105
    %v137 = vpack.c.bf16 %v108, %v107
    %v138 = vpack.c.bf16 %v110, %v109
    %v139 = vpack.c.bf16 %v112, %v111
    %v140 = vpack.c.bf16 %v114, %v113
    %v141 = vpack.c.bf16 %v116, %v115
    %v142 = vpack.c.bf16 %v118, %v117
    %v143 = vpack.c.bf16 %v120, %v119
    %v144 = vpack.c.bf16 %v122, %v121
    %v145 = vpack.c.bf16 %v124, %v123
    %v146 = vpack.c.bf16 %v126, %v125
    %v147 = vpack.c.bf16 %v128, %v127
    %v148 = vpack.c.bf16 %v130, %v129
    %v149 = vpack.c.bf16 %v132, %v131
    %v150 = vpack.c.bf16 %v134, %v133
    %v151 = vld [vmem:[%s1] sm:$0xf]
    %v152 = vld [vmem:[%s2] sm:$0x1]
    %v154 = vperm.slane %v152, 0
    %vm156 = vcmask 64512
    %v158 = vsel %vm156, %v135, 0
    %v161 = vsel %vm156, %v136, 0
    %v164 = vsel %vm156, %v137, 0
    %v167 = vsel %vm156, %v138, 0
    %v170 = vsel %vm156, %v139, 0
    %v173 = vsel %vm156, %v140, 0
    %v176 = vsel %vm156, %v141, 0
    %v179 = vsel %vm156, %v142, 0
    %v182 = vsel %vm156, %v143, 0
    %v185 = vsel %vm156, %v144, 0
    %v188 = vsel %vm156, %v145, 0
    %v191 = vsel %vm156, %v146, 0
    %v194 = vsel %vm156, %v147, 0
    %v197 = vsel %vm156, %v148, 0
    %v200 = vsel %vm156, %v149, 0
    %v203 = vsel %vm156, %v150, 0
    %vm205 = vcmask 1043456
    %v207 = vsel %vm205, %v151, 0
    %209 = vmatpush.bf16.msra.mxu0 0
    %210 = vmatpush.bf16.msra.mxu0 0
    %211 = vmatpush.bf16.msra.mxu0 0
    %212 = vmatpush.bf16.msra.mxu0 0
    %213 = vmatpush.bf16.msra.mxu0 0
    %214 = vmatpush.bf16.msra.mxu0 0
    %215 = vmatpush.bf16.msra.mxu0 0
    %216 = vmatpush.bf16.msra.mxu0 %v207
    %217 = vmatmul.bf16.gmra.mxu0 %v158
    %v218 = vpop.f32.mrf.mxu0
    %v219 = vadd.f32 %v154, %v218
    %v220 = vpop.f32.mrf.mxu0
    %v221 = vadd.f32 %v154, %v220
    %222 = vmatmul.bf16.gmra.mxu0 %v161
    %v223 = vpop.f32.mrf.mxu0
    %v224 = vadd.f32 %v154, %v223
    %v225 = vpop.f32.mrf.mxu0
    %v226 = vadd.f32 %v154, %v225
    %227 = vmatmul.bf16.gmra.mxu0 %v164
    %v228 = vpop.f32.mrf.mxu0
    %v229 = vadd.f32 %v154, %v228
    %v230 = vpop.f32.mrf.mxu0
    %v231 = vadd.f32 %v154, %v230
    %232 = vmatmul.bf16.gmra.mxu0 %v167
    %v233 = vpop.f32.mrf.mxu0
    %v234 = vadd.f32 %v154, %v233
    %v235 = vpop.f32.mrf.mxu0
    %v236 = vadd.f32 %v154, %v235
    %237 = vmatmul.bf16.gmra.mxu0 %v170
    %v238 = vpop.f32.mrf.mxu0
    %v239 = vadd.f32 %v154, %v238
    %v240 = vpop.f32.mrf.mxu0
    %v241 = vadd.f32 %v154, %v240
    %242 = vmatmul.bf16.gmra.mxu0 %v173
    %v243 = vpop.f32.mrf.mxu0
    %v244 = vadd.f32 %v154, %v243
    %v245 = vpop.f32.mrf.mxu0
    %v246 = vadd.f32 %v154, %v245
    %247 = vmatmul.bf16.gmra.mxu0 %v176
    %v248 = vpop.f32.mrf.mxu0
    %v249 = vadd.f32 %v154, %v248
    %v250 = vpop.f32.mrf.mxu0
    %v251 = vadd.f32 %v154, %v250
    %252 = vmatmul.bf16.gmra.mxu0 %v179
    %v253 = vpop.f32.mrf.mxu0
    %v254 = vadd.f32 %v154, %v253
    %v255 = vpop.f32.mrf.mxu0
    %v256 = vadd.f32 %v154, %v255
    %257 = vmatmul.bf16.gmra.mxu0 %v182
    %v258 = vpop.f32.mrf.mxu0
    %v259 = vadd.f32 %v154, %v258
    %v260 = vpop.f32.mrf.mxu0
    %v261 = vadd.f32 %v154, %v260
    %262 = vmatmul.bf16.gmra.mxu0 %v185
    %v263 = vpop.f32.mrf.mxu0
    %v264 = vadd.f32 %v154, %v263
    %v265 = vpop.f32.mrf.mxu0
    %v266 = vadd.f32 %v154, %v265
    %267 = vmatmul.bf16.gmra.mxu0 %v188
    %v268 = vpop.f32.mrf.mxu0
    %v269 = vadd.f32 %v154, %v268
    %v270 = vpop.f32.mrf.mxu0
    %v271 = vadd.f32 %v154, %v270
    %272 = vmatmul.bf16.gmra.mxu0 %v191
    %v273 = vpop.f32.mrf.mxu0
    %v274 = vadd.f32 %v154, %v273
    %v275 = vpop.f32.mrf.mxu0
    %v276 = vadd.f32 %v154, %v275
    %277 = vmatmul.bf16.gmra.mxu0 %v194
    %v278 = vpop.f32.mrf.mxu0
    %v279 = vadd.f32 %v154, %v278
    %v280 = vpop.f32.mrf.mxu0
    %v281 = vadd.f32 %v154, %v280
    %282 = vmatmul.bf16.gmra.mxu0 %v197
    %v283 = vpop.f32.mrf.mxu0
    %v284 = vadd.f32 %v154, %v283
    %v285 = vpop.f32.mrf.mxu0
    %v286 = vadd.f32 %v154, %v285
    %287 = vmatmul.bf16.gmra.mxu0 %v200
    %v288 = vpop.f32.mrf.mxu0
    %v289 = vadd.f32 %v154, %v288
    %v290 = vpop.f32.mrf.mxu0
    %v291 = vadd.f32 %v154, %v290
    %292 = vmatmul.bf16.gmra.mxu0 %v203
    %v293 = vpop.f32.mrf.mxu0
    %v294 = vadd.f32 %v154, %v293
    %v295 = vpop.f32.mrf.mxu0
    %v296 = vadd.f32 %v154, %v295
    %297 = vdwg.mxu0
    %v298 = vmax.f32 %v219, 0.0
    %v299 = vmax.f32 %v221, 0.0
    %v300 = vmax.f32 %v224, 0.0
    %v301 = vmax.f32 %v226, 0.0
    %v302 = vmax.f32 %v229, 0.0
    %v303 = vmax.f32 %v231, 0.0
    %v304 = vmax.f32 %v234, 0.0
    %v305 = vmax.f32 %v236, 0.0
    %v306 = vmax.f32 %v239, 0.0
    %v307 = vmax.f32 %v241, 0.0
    %v308 = vmax.f32 %v244, 0.0
    %v309 = vmax.f32 %v246, 0.0
    %v310 = vmax.f32 %v249, 0.0
    %v311 = vmax.f32 %v251, 0.0
    %v312 = vmax.f32 %v254, 0.0
    %v313 = vmax.f32 %v256, 0.0
    %v314 = vmax.f32 %v259, 0.0
    %v315 = vmax.f32 %v261, 0.0
    %v316 = vmax.f32 %v264, 0.0
    %v317 = vmax.f32 %v266, 0.0
    %v318 = vmax.f32 %v269, 0.0
    %v319 = vmax.f32 %v271, 0.0
    %v320 = vmax.f32 %v274, 0.0
    %v321 = vmax.f32 %v276, 0.0
    %v322 = vmax.f32 %v279, 0.0
    %v323 = vmax.f32 %v281, 0.0
    %v324 = vmax.f32 %v284, 0.0
    %v325 = vmax.f32 %v286, 0.0
    %v326 = vmax.f32 %v289, 0.0
    %v327 = vmax.f32 %v291, 0.0
    %v328 = vmax.f32 %v294, 0.0
    %v329 = vmax.f32 %v296, 0.0
    %v330 = vpack.c.bf16 %v299, %v298
    %v331 = vpack.c.bf16 %v301, %v300
    %v332 = vpack.c.bf16 %v303, %v302
    %v333 = vpack.c.bf16 %v305, %v304
    %v334 = vpack.c.bf16 %v307, %v306
    %v335 = vpack.c.bf16 %v309, %v308
    %v336 = vpack.c.bf16 %v311, %v310
    %v337 = vpack.c.bf16 %v313, %v312
    %v338 = vpack.c.bf16 %v315, %v314
    %v339 = vpack.c.bf16 %v317, %v316
    %v340 = vpack.c.bf16 %v319, %v318
    %v341 = vpack.c.bf16 %v321, %v320
    %v342 = vpack.c.bf16 %v323, %v322
    %v343 = vpack.c.bf16 %v325, %v324
    %v344 = vpack.c.bf16 %v327, %v326
    %v345 = vpack.c.bf16 %v329, %v328
    %v346 = vld [vmem:[#allocation3] sm:$0xf]
    %v347 = vld [vmem:[#allocation3 + $0x4] sm:$0xf]
    %v348 = vld [vmem:[#allocation3 + $0x8] sm:$0xf]
    %v349 = vld [vmem:[#allocation3 + $0xc] sm:$0xf]
    %v350 = vld [vmem:[#allocation3 + $0x10] sm:$0xf]
    %v351 = vld [vmem:[#allocation3 + $0x14] sm:$0xf]
    %v352 = vld [vmem:[#allocation3 + $0x18] sm:$0xf]
    %v353 = vld [vmem:[#allocation3 + $0x1c] sm:$0xf]
    %v354 = vld [vmem:[#allocation3 + $0x20] sm:$0xf]
    %v355 = vld [vmem:[#allocation3 + $0x24] sm:$0xf]
    %v356 = vld [vmem:[#allocation3 + $0x28] sm:$0xf]
    %v357 = vld [vmem:[#allocation3 + $0x2c] sm:$0xf]
    %v358 = vld [vmem:[#allocation3 + $0x30] sm:$0xf]
    %v359 = vld [vmem:[#allocation3 + $0x34] sm:$0xf]
    %v360 = vld [vmem:[#allocation3 + $0x38] sm:$0xf]
    %v361 = vld [vmem:[#allocation3 + $0x3c] sm:$0xf]
    %v362 = vld [vmem:[%s4] sm:$0x1]
    %v364 = vperm.slane %v362, 0
    %v382 = vunpack.c.l.b16 %v346
    %v383 = vunpack.c.l.b16 %v347
    %v384 = vunpack.c.l.b16 %v348
    %v385 = vunpack.c.l.b16 %v349
    %v386 = vunpack.c.l.b16 %v350
    %v387 = vunpack.c.l.b16 %v351
    %v388 = vunpack.c.l.b16 %v352
    %v389 = vunpack.c.l.b16 %v353
    %v390 = vunpack.c.l.b16 %v354
    %v391 = vunpack.c.l.b16 %v355
    %v392 = vunpack.c.l.b16 %v356
    %v393 = vunpack.c.l.b16 %v357
    %v394 = vunpack.c.l.b16 %v358
    %v395 = vunpack.c.l.b16 %v359
    %v396 = vunpack.c.l.b16 %v360
    %v397 = vunpack.c.l.b16 %v361
    %v398 = vpack.c.b16 %v383, %v382
    %v399 = vpack.c.b16 %v385, %v384
    %v400 = vpack.c.b16 %v387, %v386
    %v401 = vpack.c.b16 %v389, %v388
    %v402 = vpack.c.b16 %v391, %v390
    %v403 = vpack.c.b16 %v393, %v392
    %v404 = vpack.c.b16 %v395, %v394
    %v405 = vpack.c.b16 %v397, %v396
    %414 = vmatpush.bf16.msra.mxu0 %v405
    %415 = vmatpush.bf16.msra.mxu0 %v404
    %416 = vmatpush.bf16.msra.mxu0 %v403
    %417 = vmatpush.bf16.msra.mxu0 %v402
    %418 = vmatpush.bf16.msra.mxu0 %v401
    %419 = vmatpush.bf16.msra.mxu0 %v400
    %420 = vmatpush.bf16.msra.mxu0 %v399
    %421 = vmatpush.bf16.msra.mxu0 %v398
    %422 = vmatmul.bf16.gmra.mxu0 %v330
    %v423 = vpop.f32.mrf.mxu0
    %v424 = vadd.f32 %v364, %v423
    %v425 = vpop.f32.mrf.mxu0
    %v426 = vadd.f32 %v364, %v425
    %427 = vmatmul.bf16.gmra.mxu0 %v331
    %v428 = vpop.f32.mrf.mxu0
    %v429 = vadd.f32 %v364, %v428
    %v430 = vpop.f32.mrf.mxu0
    %v431 = vadd.f32 %v364, %v430
    %432 = vmatmul.bf16.gmra.mxu0 %v332
    %v433 = vpop.f32.mrf.mxu0
    %v434 = vadd.f32 %v364, %v433
    %v435 = vpop.f32.mrf.mxu0
    %v436 = vadd.f32 %v364, %v435
    %437 = vmatmul.bf16.gmra.mxu0 %v333
    %v438 = vpop.f32.mrf.mxu0
    %v439 = vadd.f32 %v364, %v438
    %v440 = vpop.f32.mrf.mxu0
    %v441 = vadd.f32 %v364, %v440
    %442 = vmatmul.bf16.gmra.mxu0 %v334
    %v443 = vpop.f32.mrf.mxu0
    %v444 = vadd.f32 %v364, %v443
    %v445 = vpop.f32.mrf.mxu0
    %v446 = vadd.f32 %v364, %v445
    %447 = vmatmul.bf16.gmra.mxu0 %v335
    %v448 = vpop.f32.mrf.mxu0
    %v449 = vadd.f32 %v364, %v448
    %v450 = vpop.f32.mrf.mxu0
    %v451 = vadd.f32 %v364, %v450
    %452 = vmatmul.bf16.gmra.mxu0 %v336
    %v453 = vpop.f32.mrf.mxu0
    %v454 = vadd.f32 %v364, %v453
    %v455 = vpop.f32.mrf.mxu0
    %v456 = vadd.f32 %v364, %v455
    %457 = vmatmul.bf16.gmra.mxu0 %v337
    %v458 = vpop.f32.mrf.mxu0
    %v459 = vadd.f32 %v364, %v458
    %v460 = vpop.f32.mrf.mxu0
    %v461 = vadd.f32 %v364, %v460
    %462 = vmatmul.bf16.gmra.mxu0 %v338
    %v463 = vpop.f32.mrf.mxu0
    %v464 = vadd.f32 %v364, %v463
    %v465 = vpop.f32.mrf.mxu0
    %v466 = vadd.f32 %v364, %v465
    %467 = vmatmul.bf16.gmra.mxu0 %v339
    %v468 = vpop.f32.mrf.mxu0
    %v469 = vadd.f32 %v364, %v468
    %v470 = vpop.f32.mrf.mxu0
    %v471 = vadd.f32 %v364, %v470
    %472 = vmatmul.bf16.gmra.mxu0 %v340
    %v473 = vpop.f32.mrf.mxu0
    %v474 = vadd.f32 %v364, %v473
    %v475 = vpop.f32.mrf.mxu0
    %v476 = vadd.f32 %v364, %v475
    %477 = vmatmul.bf16.gmra.mxu0 %v341
    %v478 = vpop.f32.mrf.mxu0
    %v479 = vadd.f32 %v364, %v478
    %v480 = vpop.f32.mrf.mxu0
    %v481 = vadd.f32 %v364, %v480
    %482 = vmatmul.bf16.gmra.mxu0 %v342
    %v483 = vpop.f32.mrf.mxu0
    %v484 = vadd.f32 %v364, %v483
    %v485 = vpop.f32.mrf.mxu0
    %v486 = vadd.f32 %v364, %v485
    %487 = vmatmul.bf16.gmra.mxu0 %v343
    %v488 = vpop.f32.mrf.mxu0
    %v489 = vadd.f32 %v364, %v488
    %v490 = vpop.f32.mrf.mxu0
    %v491 = vadd.f32 %v364, %v490
    %492 = vmatmul.bf16.gmra.mxu0 %v344
    %v493 = vpop.f32.mrf.mxu0
    %v494 = vadd.f32 %v364, %v493
    %v495 = vpop.f32.mrf.mxu0
    %v496 = vadd.f32 %v364, %v495
    %497 = vmatmul.bf16.gmra.mxu0 %v345
    %v498 = vpop.f32.mrf.mxu0
    %v499 = vadd.f32 %v364, %v498
    %v500 = vpop.f32.mrf.mxu0
    %v501 = vadd.f32 %v364, %v500
    %502 = vdwg.mxu0
    %v503 = vmax.f32 %v424, 0.0
    %v504 = vmax.f32 %v426, 0.0
    %v505 = vmax.f32 %v429, 0.0
    %v506 = vmax.f32 %v431, 0.0
    %v507 = vmax.f32 %v434, 0.0
    %v508 = vmax.f32 %v436, 0.0
    %v509 = vmax.f32 %v439, 0.0
    %v510 = vmax.f32 %v441, 0.0
    %v511 = vmax.f32 %v444, 0.0
    %v512 = vmax.f32 %v446, 0.0
    %v513 = vmax.f32 %v449, 0.0
    %v514 = vmax.f32 %v451, 0.0
    %v515 = vmax.f32 %v454, 0.0
    %v516 = vmax.f32 %v456, 0.0
    %v517 = vmax.f32 %v459, 0.0
    %v518 = vmax.f32 %v461, 0.0
    %v519 = vmax.f32 %v464, 0.0
    %v520 = vmax.f32 %v466, 0.0
    %v521 = vmax.f32 %v469, 0.0
    %v522 = vmax.f32 %v471, 0.0
    %v523 = vmax.f32 %v474, 0.0
    %v524 = vmax.f32 %v476, 0.0
    %v525 = vmax.f32 %v479, 0.0
    %v526 = vmax.f32 %v481, 0.0
    %v527 = vmax.f32 %v484, 0.0
    %v528 = vmax.f32 %v486, 0.0
    %v529 = vmax.f32 %v489, 0.0
    %v530 = vmax.f32 %v491, 0.0
    %v531 = vmax.f32 %v494, 0.0
    %v532 = vmax.f32 %v496, 0.0
    %v533 = vmax.f32 %v499, 0.0
    %v534 = vmax.f32 %v501, 0.0
    %v535 = vpack.c.bf16 %v504, %v503
    %v536 = vpack.c.bf16 %v506, %v505
    %v537 = vpack.c.bf16 %v508, %v507
    %v538 = vpack.c.bf16 %v510, %v509
    %v539 = vpack.c.bf16 %v512, %v511
    %v540 = vpack.c.bf16 %v514, %v513
    %v541 = vpack.c.bf16 %v516, %v515
    %v542 = vpack.c.bf16 %v518, %v517
    %v543 = vpack.c.bf16 %v520, %v519
    %v544 = vpack.c.bf16 %v522, %v521
    %v545 = vpack.c.bf16 %v524, %v523
    %v546 = vpack.c.bf16 %v526, %v525
    %v547 = vpack.c.bf16 %v528, %v527
    %v548 = vpack.c.bf16 %v530, %v529
    %v549 = vpack.c.bf16 %v532, %v531
    %v550 = vpack.c.bf16 %v534, %v533
    %v551 = vld [vmem:[%s5] sm:$0xff]
    %v552 = vld [vmem:[%s5 + $0x8] sm:$0xff]
    %v553 = vld [vmem:[%s5 + $0x10] sm:$0xff]
    %v554 = vld [vmem:[%s5 + $0x18] sm:$0xff]
    %v555 = vld [vmem:[%s5 + $0x20] sm:$0xff]
    %v556 = vld [vmem:[%s5 + $0x28] sm:$0xff]
    %v557 = vld [vmem:[%s5 + $0x30] sm:$0xff]
    %v558 = vld [vmem:[%s5 + $0x38] sm:$0xff]
    %v559 = vld [vmem:[%s5 + $0x40] sm:$0xff]
    %v560 = vld [vmem:[%s5 + $0x48] sm:$0xff]
    %v561 = vld [vmem:[%s5 + $0x50] sm:$0xff]
    %v562 = vld [vmem:[%s5 + $0x58] sm:$0xff]
    %v563 = vld [vmem:[%s5 + $0x60] sm:$0xff]
    %v564 = vld [vmem:[%s5 + $0x68] sm:$0xff]
    %v565 = vld [vmem:[%s5 + $0x70] sm:$0xff]
    %v566 = vld [vmem:[%s5 + $0x78] sm:$0xff]
    %v567 = vld [vmem:[%s6] sm:$0x3]
    %v569 = vperm.slane %v567, 0
    %v570 = vperm.slane %v567, 1
    %v589 = vunpack.c.l.b16 %v551
    %v590 = vunpack.c.h.b16 %v551
    %v591 = vunpack.c.l.b16 %v552
    %v592 = vunpack.c.h.b16 %v552
    %v593 = vunpack.c.l.b16 %v553
    %v594 = vunpack.c.h.b16 %v553
    %v595 = vunpack.c.l.b16 %v554
    %v596 = vunpack.c.h.b16 %v554
    %v597 = vunpack.c.l.b16 %v555
    %v598 = vunpack.c.h.b16 %v555
    %v599 = vunpack.c.l.b16 %v556
    %v600 = vunpack.c.h.b16 %v556
    %v601 = vunpack.c.l.b16 %v557
    %v602 = vunpack.c.h.b16 %v557
    %v603 = vunpack.c.l.b16 %v558
    %v604 = vunpack.c.h.b16 %v558
    %v605 = vunpack.c.l.b16 %v559
    %v606 = vunpack.c.h.b16 %v559
    %v607 = vunpack.c.l.b16 %v560
    %v608 = vunpack.c.h.b16 %v560
    %v609 = vunpack.c.l.b16 %v561
    %v610 = vunpack.c.h.b16 %v561
    %v611 = vunpack.c.l.b16 %v562
    %v612 = vunpack.c.h.b16 %v562
    %v613 = vunpack.c.l.b16 %v563
    %v614 = vunpack.c.h.b16 %v563
    %v615 = vunpack.c.l.b16 %v564
    %v616 = vunpack.c.h.b16 %v564
    %v617 = vunpack.c.l.b16 %v565
    %v618 = vunpack.c.h.b16 %v565
    %v619 = vunpack.c.l.b16 %v566
    %v620 = vunpack.c.h.b16 %v566
    %v621 = vpack.c.b16 %v591, %v589
    %v622 = vpack.c.b16 %v592, %v590
    %v623 = vpack.c.b16 %v595, %v593
    %v624 = vpack.c.b16 %v596, %v594
    %v625 = vpack.c.b16 %v599, %v597
    %v626 = vpack.c.b16 %v600, %v598
    %v627 = vpack.c.b16 %v603, %v601
    %v628 = vpack.c.b16 %v604, %v602
    %v629 = vpack.c.b16 %v607, %v605
    %v630 = vpack.c.b16 %v608, %v606
    %v631 = vpack.c.b16 %v611, %v609
    %v632 = vpack.c.b16 %v612, %v610
    %v633 = vpack.c.b16 %v615, %v613
    %v634 = vpack.c.b16 %v616, %v614
    %v635 = vpack.c.b16 %v619, %v617
    %v636 = vpack.c.b16 %v620, %v618
    %653 = vmatpush.bf16.msra.mxu0 %v635
    %654 = vmatpush.bf16.msra.mxu0 %v633
    %655 = vmatpush.bf16.msra.mxu0 %v631
    %656 = vmatpush.bf16.msra.mxu0 %v629
    %657 = vmatpush.bf16.msra.mxu0 %v627
    %658 = vmatpush.bf16.msra.mxu0 %v625
    %659 = vmatpush.bf16.msra.mxu0 %v623
    %660 = vmatpush.bf16.msra.mxu0 %v621
    %661 = vmatmul.bf16.gmra.mxu0 %v535
    %v662 = vpop.f32.mrf.mxu0
    %v663 = vadd.f32 %v569, %v662
    %v664 = vpop.f32.mrf.mxu0
    %v665 = vadd.f32 %v569, %v664
    %666 = vmatmul.bf16.gmra.mxu0 %v536
    %v667 = vpop.f32.mrf.mxu0
    %v668 = vadd.f32 %v569, %v667
    %v669 = vpop.f32.mrf.mxu0
    %v670 = vadd.f32 %v569, %v669
    %671 = vmatmul.bf16.gmra.mxu0 %v537
    %v672 = vpop.f32.mrf.mxu0
    %v673 = vadd.f32 %v569, %v672
    %v674 = vpop.f32.mrf.mxu0
    %v675 = vadd.f32 %v569, %v674
    %676 = vmatmul.bf16.gmra.mxu0 %v538
    %v677 = vpop.f32.mrf.mxu0
    %v678 = vadd.f32 %v569, %v677
    %v679 = vpop.f32.mrf.mxu0
    %v680 = vadd.f32 %v569, %v679
    %681 = vmatmul.bf16.gmra.mxu0 %v539
    %v682 = vpop.f32.mrf.mxu0
    %v683 = vadd.f32 %v569, %v682
    %v684 = vpop.f32.mrf.mxu0
    %v685 = vadd.f32 %v569, %v684
    %686 = vmatmul.bf16.gmra.mxu0 %v540
    %v687 = vpop.f32.mrf.mxu0
    %v688 = vadd.f32 %v569, %v687
    %v689 = vpop.f32.mrf.mxu0
    %v690 = vadd.f32 %v569, %v689
    %691 = vmatmul.bf16.gmra.mxu0 %v541
    %v692 = vpop.f32.mrf.mxu0
    %v693 = vadd.f32 %v569, %v692
    %v694 = vpop.f32.mrf.mxu0
    %v695 = vadd.f32 %v569, %v694
    %696 = vmatmul.bf16.gmra.mxu0 %v542
    %v697 = vpop.f32.mrf.mxu0
    %v698 = vadd.f32 %v569, %v697
    %v699 = vpop.f32.mrf.mxu0
    %v700 = vadd.f32 %v569, %v699
    %701 = vmatmul.bf16.gmra.mxu0 %v543
    %v702 = vpop.f32.mrf.mxu0
    %v703 = vadd.f32 %v569, %v702
    %v704 = vpop.f32.mrf.mxu0
    %v705 = vadd.f32 %v569, %v704
    %706 = vmatmul.bf16.gmra.mxu0 %v544
    %v707 = vpop.f32.mrf.mxu0
    %v708 = vadd.f32 %v569, %v707
    %v709 = vpop.f32.mrf.mxu0
    %v710 = vadd.f32 %v569, %v709
    %711 = vmatmul.bf16.gmra.mxu0 %v545
    %v712 = vpop.f32.mrf.mxu0
    %v713 = vadd.f32 %v569, %v712
    %v714 = vpop.f32.mrf.mxu0
    %v715 = vadd.f32 %v569, %v714
    %716 = vmatmul.bf16.gmra.mxu0 %v546
    %v717 = vpop.f32.mrf.mxu0
    %v718 = vadd.f32 %v569, %v717
    %v719 = vpop.f32.mrf.mxu0
    %v720 = vadd.f32 %v569, %v719
    %721 = vmatmul.bf16.gmra.mxu0 %v547
    %v722 = vpop.f32.mrf.mxu0
    %v723 = vadd.f32 %v569, %v722
    %v724 = vpop.f32.mrf.mxu0
    %v725 = vadd.f32 %v569, %v724
    %726 = vmatmul.bf16.gmra.mxu0 %v548
    %v727 = vpop.f32.mrf.mxu0
    %v728 = vadd.f32 %v569, %v727
    %v729 = vpop.f32.mrf.mxu0
    %v730 = vadd.f32 %v569, %v729
    %731 = vmatmul.bf16.gmra.mxu0 %v549
    %v732 = vpop.f32.mrf.mxu0
    %v733 = vadd.f32 %v569, %v732
    %v734 = vpop.f32.mrf.mxu0
    %v735 = vadd.f32 %v569, %v734
    %736 = vmatmul.bf16.gmra.mxu0 %v550
    %v737 = vpop.f32.mrf.mxu0
    %v738 = vadd.f32 %v569, %v737
    %v739 = vpop.f32.mrf.mxu0
    %v740 = vadd.f32 %v569, %v739
    %741 = vdwg.mxu0
    %742 = vmatpush.bf16.msra.mxu0 %v636
    %743 = vmatpush.bf16.msra.mxu0 %v634
    %744 = vmatpush.bf16.msra.mxu0 %v632
    %745 = vmatpush.bf16.msra.mxu0 %v630
    %746 = vmatpush.bf16.msra.mxu0 %v628
    %747 = vmatpush.bf16.msra.mxu0 %v626
    %748 = vmatpush.bf16.msra.mxu0 %v624
    %749 = vmatpush.bf16.msra.mxu0 %v622
    %750 = vmatmul.bf16.gmra.mxu0 %v535
    %v751 = vpop.f32.mrf.mxu0
    %v752 = vadd.f32 %v570, %v751
    %v753 = vpop.f32.mrf.mxu0
    %v754 = vadd.f32 %v570, %v753
    %755 = vmatmul.bf16.gmra.mxu0 %v536
    %v756 = vpop.f32.mrf.mxu0
    %v757 = vadd.f32 %v570, %v756
    %v758 = vpop.f32.mrf.mxu0
    %v759 = vadd.f32 %v570, %v758
    %760 = vmatmul.bf16.gmra.mxu0 %v537
    %v761 = vpop.f32.mrf.mxu0
    %v762 = vadd.f32 %v570, %v761
    %v763 = vpop.f32.mrf.mxu0
    %v764 = vadd.f32 %v570, %v763
    %765 = vmatmul.bf16.gmra.mxu0 %v538
    %v766 = vpop.f32.mrf.mxu0
    %v767 = vadd.f32 %v570, %v766
    %v768 = vpop.f32.mrf.mxu0
    %v769 = vadd.f32 %v570, %v768
    %770 = vmatmul.bf16.gmra.mxu0 %v539
    %v771 = vpop.f32.mrf.mxu0
    %v772 = vadd.f32 %v570, %v771
    %v773 = vpop.f32.mrf.mxu0
    %v774 = vadd.f32 %v570, %v773
    %775 = vmatmul.bf16.gmra.mxu0 %v540
    %v776 = vpop.f32.mrf.mxu0
    %v777 = vadd.f32 %v570, %v776
    %v778 = vpop.f32.mrf.mxu0
    %v779 = vadd.f32 %v570, %v778
    %780 = vmatmul.bf16.gmra.mxu0 %v541
    %v781 = vpop.f32.mrf.mxu0
    %v782 = vadd.f32 %v570, %v781
    %v783 = vpop.f32.mrf.mxu0
    %v784 = vadd.f32 %v570, %v783
    %785 = vmatmul.bf16.gmra.mxu0 %v542
    %v786 = vpop.f32.mrf.mxu0
    %v787 = vadd.f32 %v570, %v786
    %v788 = vpop.f32.mrf.mxu0
    %v789 = vadd.f32 %v570, %v788
    %790 = vmatmul.bf16.gmra.mxu0 %v543
    %v791 = vpop.f32.mrf.mxu0
    %v792 = vadd.f32 %v570, %v791
    %v793 = vpop.f32.mrf.mxu0
    %v794 = vadd.f32 %v570, %v793
    %795 = vmatmul.bf16.gmra.mxu0 %v544
    %v796 = vpop.f32.mrf.mxu0
    %v797 = vadd.f32 %v570, %v796
    %v798 = vpop.f32.mrf.mxu0
    %v799 = vadd.f32 %v570, %v798
    %800 = vmatmul.bf16.gmra.mxu0 %v545
    %v801 = vpop.f32.mrf.mxu0
    %v802 = vadd.f32 %v570, %v801
    %v803 = vpop.f32.mrf.mxu0
    %v804 = vadd.f32 %v570, %v803
    %805 = vmatmul.bf16.gmra.mxu0 %v546
    %v806 = vpop.f32.mrf.mxu0
    %v807 = vadd.f32 %v570, %v806
    %v808 = vpop.f32.mrf.mxu0
    %v809 = vadd.f32 %v570, %v808
    %810 = vmatmul.bf16.gmra.mxu0 %v547
    %v811 = vpop.f32.mrf.mxu0
    %v812 = vadd.f32 %v570, %v811
    %v813 = vpop.f32.mrf.mxu0
    %v814 = vadd.f32 %v570, %v813
    %815 = vmatmul.bf16.gmra.mxu0 %v548
    %v816 = vpop.f32.mrf.mxu0
    %v817 = vadd.f32 %v570, %v816
    %v818 = vpop.f32.mrf.mxu0
    %v819 = vadd.f32 %v570, %v818
    %820 = vmatmul.bf16.gmra.mxu0 %v549
    %v821 = vpop.f32.mrf.mxu0
    %v822 = vadd.f32 %v570, %v821
    %v823 = vpop.f32.mrf.mxu0
    %v824 = vadd.f32 %v570, %v823
    %825 = vmatmul.bf16.gmra.mxu0 %v550
    %v826 = vpop.f32.mrf.mxu0
    %v827 = vadd.f32 %v570, %v826
    %v828 = vpop.f32.mrf.mxu0
    %v829 = vadd.f32 %v570, %v828
    %830 = vdwg.mxu0
    %v831 = vmax.f32 %v663, 0.0
    %v832 = vmax.f32 %v752, 0.0
    %v833 = vmax.f32 %v665, 0.0
    %v834 = vmax.f32 %v754, 0.0
    %v835 = vmax.f32 %v668, 0.0
    %v836 = vmax.f32 %v757, 0.0
    %v837 = vmax.f32 %v670, 0.0
    %v838 = vmax.f32 %v759, 0.0
    %v839 = vmax.f32 %v673, 0.0
    %v840 = vmax.f32 %v762, 0.0
    %v841 = vmax.f32 %v675, 0.0
    %v842 = vmax.f32 %v764, 0.0
    %v843 = vmax.f32 %v678, 0.0
    %v844 = vmax.f32 %v767, 0.0
    %v845 = vmax.f32 %v680, 0.0
    %v846 = vmax.f32 %v769, 0.0
    %v847 = vmax.f32 %v683, 0.0
    %v848 = vmax.f32 %v772, 0.0
    %v849 = vmax.f32 %v685, 0.0
    %v850 = vmax.f32 %v774, 0.0
    %v851 = vmax.f32 %v688, 0.0
    %v852 = vmax.f32 %v777, 0.0
    %v853 = vmax.f32 %v690, 0.0
    %v854 = vmax.f32 %v779, 0.0
    %v855 = vmax.f32 %v693, 0.0
    %v856 = vmax.f32 %v782, 0.0
    %v857 = vmax.f32 %v695, 0.0
    %v858 = vmax.f32 %v784, 0.0
    %v859 = vmax.f32 %v698, 0.0
    %v860 = vmax.f32 %v787, 0.0
    %v861 = vmax.f32 %v700, 0.0
    %v862 = vmax.f32 %v789, 0.0
    %v863 = vmax.f32 %v703, 0.0
    %v864 = vmax.f32 %v792, 0.0
    %v865 = vmax.f32 %v705, 0.0
    %v866 = vmax.f32 %v794, 0.0
    %v867 = vmax.f32 %v708, 0.0
    %v868 = vmax.f32 %v797, 0.0
    %v869 = vmax.f32 %v710, 0.0
    %v870 = vmax.f32 %v799, 0.0
    %v871 = vmax.f32 %v713, 0.0
    %v872 = vmax.f32 %v802, 0.0
    %v873 = vmax.f32 %v715, 0.0
    %v874 = vmax.f32 %v804, 0.0
    %v875 = vmax.f32 %v718, 0.0
    %v876 = vmax.f32 %v807, 0.0
    %v877 = vmax.f32 %v720, 0.0
    %v878 = vmax.f32 %v809, 0.0
    %v879 = vmax.f32 %v723, 0.0
    %v880 = vmax.f32 %v812, 0.0
    %v881 = vmax.f32 %v725, 0.0
    %v882 = vmax.f32 %v814, 0.0
    %v883 = vmax.f32 %v728, 0.0
    %v884 = vmax.f32 %v817, 0.0
    %v885 = vmax.f32 %v730, 0.0
    %v886 = vmax.f32 %v819, 0.0
    %v887 = vmax.f32 %v733, 0.0
    %v888 = vmax.f32 %v822, 0.0
    %v889 = vmax.f32 %v735, 0.0
    %v890 = vmax.f32 %v824, 0.0
    %v891 = vmax.f32 %v738, 0.0
    %v892 = vmax.f32 %v827, 0.0
    %v893 = vmax.f32 %v740, 0.0
    %v894 = vmax.f32 %v829, 0.0
    %v895 = vpack.c.bf16 %v833, %v831
    %v896 = vpack.c.bf16 %v834, %v832
    %v897 = vpack.c.bf16 %v837, %v835
    %v898 = vpack.c.bf16 %v838, %v836
    %v899 = vpack.c.bf16 %v841, %v839
    %v900 = vpack.c.bf16 %v842, %v840
    %v901 = vpack.c.bf16 %v845, %v843
    %v902 = vpack.c.bf16 %v846, %v844
    %v903 = vpack.c.bf16 %v849, %v847
    %v904 = vpack.c.bf16 %v850, %v848
    %v905 = vpack.c.bf16 %v853, %v851
    %v906 = vpack.c.bf16 %v854, %v852
    %v907 = vpack.c.bf16 %v857, %v855
    %v908 = vpack.c.bf16 %v858, %v856
    %v909 = vpack.c.bf16 %v861, %v859
    %v910 = vpack.c.bf16 %v862, %v860
    %v911 = vpack.c.bf16 %v865, %v863
    %v912 = vpack.c.bf16 %v866, %v864
    %v913 = vpack.c.bf16 %v869, %v867
    %v914 = vpack.c.bf16 %v870, %v868
    %v915 = vpack.c.bf16 %v873, %v871
    %v916 = vpack.c.bf16 %v874, %v872
    %v917 = vpack.c.bf16 %v877, %v875
    %v918 = vpack.c.bf16 %v878, %v876
    %v919 = vpack.c.bf16 %v881, %v879
    %v920 = vpack.c.bf16 %v882, %v880
    %v921 = vpack.c.bf16 %v885, %v883
    %v922 = vpack.c.bf16 %v886, %v884
    %v923 = vpack.c.bf16 %v889, %v887
    %v924 = vpack.c.bf16 %v890, %v888
    %v925 = vpack.c.bf16 %v893, %v891
    %v926 = vpack.c.bf16 %v894, %v892
    %v927 = vld [vmem:[%s7] sm:$0xff]
    %v928 = vld [vmem:[%s7 + $0x8] sm:$0xff]
    %v929 = vld [vmem:[%s7 + $0x10] sm:$0xff]
    %v930 = vld [vmem:[%s7 + $0x18] sm:$0xff]
    %v931 = vld [vmem:[%s7 + $0x20] sm:$0xff]
    %v932 = vld [vmem:[%s7 + $0x28] sm:$0xff]
    %v933 = vld [vmem:[%s7 + $0x30] sm:$0xff]
    %v934 = vld [vmem:[%s7 + $0x38] sm:$0xff]
    %v935 = vld [vmem:[%s7 + $0x40] sm:$0xff]
    %v936 = vld [vmem:[%s7 + $0x48] sm:$0xff]
    %v937 = vld [vmem:[%s7 + $0x50] sm:$0xff]
    %v938 = vld [vmem:[%s7 + $0x58] sm:$0xff]
    %v939 = vld [vmem:[%s7 + $0x60] sm:$0xff]
    %v940 = vld [vmem:[%s7 + $0x68] sm:$0xff]
    %v941 = vld [vmem:[%s7 + $0x70] sm:$0xff]
    %v942 = vld [vmem:[%s7 + $0x78] sm:$0xff]
    %v943 = vld [vmem:[%s7 + $0x80] sm:$0xff]
    %v944 = vld [vmem:[%s7 + $0x88] sm:$0xff]
    %v945 = vld [vmem:[%s7 + $0x90] sm:$0xff]
    %v946 = vld [vmem:[%s7 + $0x98] sm:$0xff]
    %v947 = vld [vmem:[%s7 + $0xa0] sm:$0xff]
    %v948 = vld [vmem:[%s7 + $0xa8] sm:$0xff]
    %v949 = vld [vmem:[%s7 + $0xb0] sm:$0xff]
    %v950 = vld [vmem:[%s7 + $0xb8] sm:$0xff]
    %v951 = vld [vmem:[%s7 + $0xc0] sm:$0xff]
    %v952 = vld [vmem:[%s7 + $0xc8] sm:$0xff]
    %v953 = vld [vmem:[%s7 + $0xd0] sm:$0xff]
    %v954 = vld [vmem:[%s7 + $0xd8] sm:$0xff]
    %v955 = vld [vmem:[%s7 + $0xe0] sm:$0xff]
    %v956 = vld [vmem:[%s7 + $0xe8] sm:$0xff]
    %v957 = vld [vmem:[%s7 + $0xf0] sm:$0xff]
    %v958 = vld [vmem:[%s7 + $0xf8] sm:$0xff]
    %v959 = vld [vmem:[%s7 + $0x100] sm:$0xff]
    %v960 = vld [vmem:[%s7 + $0x108] sm:$0xff]
    %v961 = vld [vmem:[%s7 + $0x110] sm:$0xff]
    %v962 = vld [vmem:[%s7 + $0x118] sm:$0xff]
    %v963 = vld [vmem:[%s7 + $0x120] sm:$0xff]
    %v964 = vld [vmem:[%s7 + $0x128] sm:$0xff]
    %v965 = vld [vmem:[%s7 + $0x130] sm:$0xff]
    %v966 = vld [vmem:[%s7 + $0x138] sm:$0xff]
    %v967 = vld [vmem:[%s7 + $0x140] sm:$0xff]
    %v968 = vld [vmem:[%s7 + $0x148] sm:$0xff]
    %v969 = vld [vmem:[%s7 + $0x150] sm:$0xff]
    %v970 = vld [vmem:[%s7 + $0x158] sm:$0xff]
    %v971 = vld [vmem:[%s7 + $0x160] sm:$0xff]
    %v972 = vld [vmem:[%s7 + $0x168] sm:$0xff]
    %v973 = vld [vmem:[%s7 + $0x170] sm:$0xff]
    %v974 = vld [vmem:[%s7 + $0x178] sm:$0xff]
    %v975 = vld [vmem:[%s7 + $0x180] sm:$0xff]
    %v976 = vld [vmem:[%s7 + $0x188] sm:$0xff]
    %v977 = vld [vmem:[%s7 + $0x190] sm:$0xff]
    %v978 = vld [vmem:[%s7 + $0x198] sm:$0xff]
    %v979 = vld [vmem:[%s7 + $0x1a0] sm:$0xff]
    %v980 = vld [vmem:[%s7 + $0x1a8] sm:$0xff]
    %v981 = vld [vmem:[%s7 + $0x1b0] sm:$0xff]
    %v982 = vld [vmem:[%s7 + $0x1b8] sm:$0xff]
    %v983 = vld [vmem:[%s7 + $0x1c0] sm:$0xff]
    %v984 = vld [vmem:[%s7 + $0x1c8] sm:$0xff]
    %v985 = vld [vmem:[%s7 + $0x1d0] sm:$0xff]
    %v986 = vld [vmem:[%s7 + $0x1d8] sm:$0xff]
    %v987 = vld [vmem:[%s7 + $0x1e0] sm:$0xff]
    %v988 = vld [vmem:[%s7 + $0x1e8] sm:$0xff]
    %v989 = vld [vmem:[%s7 + $0x1f0] sm:$0xff]
    %v990 = vld [vmem:[%s7 + $0x1f8] sm:$0xff]
    %v991 = vld [vmem:[%s8] sm:$0xf]
    %v993 = vperm.slane %v991, 0
    %v994 = vperm.slane %v991, 1
    %v995 = vperm.slane %v991, 2
    %v996 = vperm.slane %v991, 3
    %v1065 = vunpack.c.l.b16 %v927
    %v1066 = vunpack.c.h.b16 %v927
    %v1067 = vunpack.c.l.b16 %v928
    %v1068 = vunpack.c.h.b16 %v928
    %v1069 = vunpack.c.l.b16 %v929
    %v1070 = vunpack.c.h.b16 %v929
    %v1071 = vunpack.c.l.b16 %v930
    %v1072 = vunpack.c.h.b16 %v930
    %v1073 = vunpack.c.l.b16 %v931
    %v1074 = vunpack.c.h.b16 %v931
    %v1075 = vunpack.c.l.b16 %v932
    %v1076 = vunpack.c.h.b16 %v932
    %v1077 = vunpack.c.l.b16 %v933
    %v1078 = vunpack.c.h.b16 %v933
    %v1079 = vunpack.c.l.b16 %v934
    %v1080 = vunpack.c.h.b16 %v934
    %v1081 = vunpack.c.l.b16 %v935
    %v1082 = vunpack.c.h.b16 %v935
    %v1083 = vunpack.c.l.b16 %v936
    %v1084 = vunpack.c.h.b16 %v936
    %v1085 = vunpack.c.l.b16 %v937
    %v1086 = vunpack.c.h.b16 %v937
    %v1087 = vunpack.c.l.b16 %v938
    %v1088 = vunpack.c.h.b16 %v938
    %v1089 = vunpack.c.l.b16 %v939
    %v1090 = vunpack.c.h.b16 %v939
    %v1091 = vunpack.c.l.b16 %v940
    %v1092 = vunpack.c.h.b16 %v940
    %v1093 = vunpack.c.l.b16 %v941
    %v1094 = vunpack.c.h.b16 %v941
    %v1095 = vunpack.c.l.b16 %v942
    %v1096 = vunpack.c.h.b16 %v942
    %v1097 = vunpack.c.l.b16 %v943
    %v1098 = vunpack.c.h.b16 %v943
    %v1099 = vunpack.c.l.b16 %v944
    %v1100 = vunpack.c.h.b16 %v944
    %v1101 = vunpack.c.l.b16 %v945
    %v1102 = vunpack.c.h.b16 %v945
    %v1103 = vunpack.c.l.b16 %v946
    %v1104 = vunpack.c.h.b16 %v946
    %v1105 = vunpack.c.l.b16 %v947
    %v1106 = vunpack.c.h.b16 %v947
    %v1107 = vunpack.c.l.b16 %v948
    %v1108 = vunpack.c.h.b16 %v948
    %v1109 = vunpack.c.l.b16 %v949
    %v1110 = vunpack.c.h.b16 %v949
    %v1111 = vunpack.c.l.b16 %v950
    %v1112 = vunpack.c.h.b16 %v950
    %v1113 = vunpack.c.l.b16 %v951
    %v1114 = vunpack.c.h.b16 %v951
    %v1115 = vunpack.c.l.b16 %v952
    %v1116 = vunpack.c.h.b16 %v952
    %v1117 = vunpack.c.l.b16 %v953
    %v1118 = vunpack.c.h.b16 %v953
    %v1119 = vunpack.c.l.b16 %v954
    %v1120 = vunpack.c.h.b16 %v954
    %v1121 = vunpack.c.l.b16 %v955
    %v1122 = vunpack.c.h.b16 %v955
    %v1123 = vunpack.c.l.b16 %v956
    %v1124 = vunpack.c.h.b16 %v956
    %v1125 = vunpack.c.l.b16 %v957
    %v1126 = vunpack.c.h.b16 %v957
    %v1127 = vunpack.c.l.b16 %v958
    %v1128 = vunpack.c.h.b16 %v958
    %v1129 = vunpack.c.l.b16 %v959
    %v1130 = vunpack.c.h.b16 %v959
    %v1131 = vunpack.c.l.b16 %v960
    %v1132 = vunpack.c.h.b16 %v960
    %v1133 = vunpack.c.l.b16 %v961
    %v1134 = vunpack.c.h.b16 %v961
    %v1135 = vunpack.c.l.b16 %v962
    %v1136 = vunpack.c.h.b16 %v962
    %v1137 = vunpack.c.l.b16 %v963
    %v1138 = vunpack.c.h.b16 %v963
    %v1139 = vunpack.c.l.b16 %v964
    %v1140 = vunpack.c.h.b16 %v964
    %v1141 = vunpack.c.l.b16 %v965
    %v1142 = vunpack.c.h.b16 %v965
    %v1143 = vunpack.c.l.b16 %v966
    %v1144 = vunpack.c.h.b16 %v966
    %v1145 = vunpack.c.l.b16 %v967
    %v1146 = vunpack.c.h.b16 %v967
    %v1147 = vunpack.c.l.b16 %v968
    %v1148 = vunpack.c.h.b16 %v968
    %v1149 = vunpack.c.l.b16 %v969
    %v1150 = vunpack.c.h.b16 %v969
    %v1151 = vunpack.c.l.b16 %v970
    %v1152 = vunpack.c.h.b16 %v970
    %v1153 = vunpack.c.l.b16 %v971
    %v1154 = vunpack.c.h.b16 %v971
    %v1155 = vunpack.c.l.b16 %v972
    %v1156 = vunpack.c.h.b16 %v972
    %v1157 = vunpack.c.l.b16 %v973
    %v1158 = vunpack.c.h.b16 %v973
    %v1159 = vunpack.c.l.b16 %v974
    %v1160 = vunpack.c.h.b16 %v974
    %v1161 = vunpack.c.l.b16 %v975
    %v1162 = vunpack.c.h.b16 %v975
    %v1163 = vunpack.c.l.b16 %v976
    %v1164 = vunpack.c.h.b16 %v976
    %v1165 = vunpack.c.l.b16 %v977
    %v1166 = vunpack.c.h.b16 %v977
    %v1167 = vunpack.c.l.b16 %v978
    %v1168 = vunpack.c.h.b16 %v978
    %v1169 = vunpack.c.l.b16 %v979
    %v1170 = vunpack.c.h.b16 %v979
    %v1171 = vunpack.c.l.b16 %v980
    %v1172 = vunpack.c.h.b16 %v980
    %v1173 = vunpack.c.l.b16 %v981
    %v1174 = vunpack.c.h.b16 %v981
    %v1175 = vunpack.c.l.b16 %v982
    %v1176 = vunpack.c.h.b16 %v982
    %v1177 = vunpack.c.l.b16 %v983
    %v1178 = vunpack.c.h.b16 %v983
    %v1179 = vunpack.c.l.b16 %v984
    %v1180 = vunpack.c.h.b16 %v984
    %v1181 = vunpack.c.l.b16 %v985
    %v1182 = vunpack.c.h.b16 %v985
    %v1183 = vunpack.c.l.b16 %v986
    %v1184 = vunpack.c.h.b16 %v986
    %v1185 = vunpack.c.l.b16 %v987
    %v1186 = vunpack.c.h.b16 %v987
    %v1187 = vunpack.c.l.b16 %v988
    %v1188 = vunpack.c.h.b16 %v988
    %v1189 = vunpack.c.l.b16 %v989
    %v1190 = vunpack.c.h.b16 %v989
    %v1191 = vunpack.c.l.b16 %v990
    %v1192 = vunpack.c.h.b16 %v990
    %v1193 = vpack.c.b16 %v1069, %v1065
    %v1194 = vpack.c.b16 %v1070, %v1066
    %v1195 = vpack.c.b16 %v1071, %v1067
    %v1196 = vpack.c.b16 %v1072, %v1068
    %v1197 = vpack.c.b16 %v1077, %v1073
    %v1198 = vpack.c.b16 %v1078, %v1074
    %v1199 = vpack.c.b16 %v1079, %v1075
    %v1200 = vpack.c.b16 %v1080, %v1076
    %v1201 = vpack.c.b16 %v1085, %v1081
    %v1202 = vpack.c.b16 %v1086, %v1082
    %v1203 = vpack.c.b16 %v1087, %v1083
    %v1204 = vpack.c.b16 %v1088, %v1084
    %v1205 = vpack.c.b16 %v1093, %v1089
    %v1206 = vpack.c.b16 %v1094, %v1090
    %v1207 = vpack.c.b16 %v1095, %v1091
    %v1208 = vpack.c.b16 %v1096, %v1092
    %v1209 = vpack.c.b16 %v1101, %v1097
    %v1210 = vpack.c.b16 %v1102, %v1098
    %v1211 = vpack.c.b16 %v1103, %v1099
    %v1212 = vpack.c.b16 %v1104, %v1100
    %v1213 = vpack.c.b16 %v1109, %v1105
    %v1214 = vpack.c.b16 %v1110, %v1106
    %v1215 = vpack.c.b16 %v1111, %v1107
    %v1216 = vpack.c.b16 %v1112, %v1108
    %v1217 = vpack.c.b16 %v1117, %v1113
    %v1218 = vpack.c.b16 %v1118, %v1114
    %v1219 = vpack.c.b16 %v1119, %v1115
    %v1220 = vpack.c.b16 %v1120, %v1116
    %v1221 = vpack.c.b16 %v1125, %v1121
    %v1222 = vpack.c.b16 %v1126, %v1122
    %v1223 = vpack.c.b16 %v1127, %v1123
    %v1224 = vpack.c.b16 %v1128, %v1124
    %v1225 = vpack.c.b16 %v1133, %v1129
    %v1226 = vpack.c.b16 %v1134, %v1130
    %v1227 = vpack.c.b16 %v1135, %v1131
    %v1228 = vpack.c.b16 %v1136, %v1132
    %v1229 = vpack.c.b16 %v1141, %v1137
    %v1230 = vpack.c.b16 %v1142, %v1138
    %v1231 = vpack.c.b16 %v1143, %v1139
    %v1232 = vpack.c.b16 %v1144, %v1140
    %v1233 = vpack.c.b16 %v1149, %v1145
    %v1234 = vpack.c.b16 %v1150, %v1146
    %v1235 = vpack.c.b16 %v1151, %v1147
    %v1236 = vpack.c.b16 %v1152, %v1148
    %v1237 = vpack.c.b16 %v1157, %v1153
    %v1238 = vpack.c.b16 %v1158, %v1154
    %v1239 = vpack.c.b16 %v1159, %v1155
    %v1240 = vpack.c.b16 %v1160, %v1156
    %v1241 = vpack.c.b16 %v1165, %v1161
    %v1242 = vpack.c.b16 %v1166, %v1162
    %v1243 = vpack.c.b16 %v1167, %v1163
    %v1244 = vpack.c.b16 %v1168, %v1164
    %v1245 = vpack.c.b16 %v1173, %v1169
    %v1246 = vpack.c.b16 %v1174, %v1170
    %v1247 = vpack.c.b16 %v1175, %v1171
    %v1248 = vpack.c.b16 %v1176, %v1172
    %v1249 = vpack.c.b16 %v1181, %v1177
    %v1250 = vpack.c.b16 %v1182, %v1178
    %v1251 = vpack.c.b16 %v1183, %v1179
    %v1252 = vpack.c.b16 %v1184, %v1180
    %v1253 = vpack.c.b16 %v1189, %v1185
    %v1254 = vpack.c.b16 %v1190, %v1186
    %v1255 = vpack.c.b16 %v1191, %v1187
    %v1256 = vpack.c.b16 %v1192, %v1188
    %1321 = vmatpush.bf16.msra.mxu0 %v1221
    %1322 = vmatpush.bf16.msra.mxu0 %v1217
    %1323 = vmatpush.bf16.msra.mxu0 %v1213
    %1324 = vmatpush.bf16.msra.mxu0 %v1209
    %1325 = vmatpush.bf16.msra.mxu0 %v1205
    %1326 = vmatpush.bf16.msra.mxu0 %v1201
    %1327 = vmatpush.bf16.msra.mxu0 %v1197
    %1328 = vmatpush.bf16.msra.mxu0 %v1193
    %1329 = vmatmul.bf16.gmra.mxu0 %v895
    %v1330 = vpop.f32.mrf.mxu0
    %v1331 = vadd.f32 %v993, %v1330
    %v1332 = vpop.f32.mrf.mxu0
    %v1333 = vadd.f32 %v993, %v1332
    %1334 = vmatmul.bf16.gmra.mxu0 %v897
    %v1335 = vpop.f32.mrf.mxu0
    %v1336 = vadd.f32 %v993, %v1335
    %v1337 = vpop.f32.mrf.mxu0
    %v1338 = vadd.f32 %v993, %v1337
    %1339 = vmatmul.bf16.gmra.mxu0 %v899
    %v1340 = vpop.f32.mrf.mxu0
    %v1341 = vadd.f32 %v993, %v1340
    %v1342 = vpop.f32.mrf.mxu0
    %v1343 = vadd.f32 %v993, %v1342
    %1344 = vmatmul.bf16.gmra.mxu0 %v901
    %v1345 = vpop.f32.mrf.mxu0
    %v1346 = vadd.f32 %v993, %v1345
    %v1347 = vpop.f32.mrf.mxu0
    %v1348 = vadd.f32 %v993, %v1347
    %1349 = vmatmul.bf16.gmra.mxu0 %v903
    %v1350 = vpop.f32.mrf.mxu0
    %v1351 = vadd.f32 %v993, %v1350
    %v1352 = vpop.f32.mrf.mxu0
    %v1353 = vadd.f32 %v993, %v1352
    %1354 = vmatmul.bf16.gmra.mxu0 %v905
    %v1355 = vpop.f32.mrf.mxu0
    %v1356 = vadd.f32 %v993, %v1355
    %v1357 = vpop.f32.mrf.mxu0
    %v1358 = vadd.f32 %v993, %v1357
    %1359 = vmatmul.bf16.gmra.mxu0 %v907
    %v1360 = vpop.f32.mrf.mxu0
    %v1361 = vadd.f32 %v993, %v1360
    %v1362 = vpop.f32.mrf.mxu0
    %v1363 = vadd.f32 %v993, %v1362
    %1364 = vmatmul.bf16.gmra.mxu0 %v909
    %v1365 = vpop.f32.mrf.mxu0
    %v1366 = vadd.f32 %v993, %v1365
    %v1367 = vpop.f32.mrf.mxu0
    %v1368 = vadd.f32 %v993, %v1367
    %1369 = vmatmul.bf16.gmra.mxu0 %v911
    %v1370 = vpop.f32.mrf.mxu0
    %v1371 = vadd.f32 %v993, %v1370
    %v1372 = vpop.f32.mrf.mxu0
    %v1373 = vadd.f32 %v993, %v1372
    %1374 = vmatmul.bf16.gmra.mxu0 %v913
    %v1375 = vpop.f32.mrf.mxu0
    %v1376 = vadd.f32 %v993, %v1375
    %v1377 = vpop.f32.mrf.mxu0
    %v1378 = vadd.f32 %v993, %v1377
    %1379 = vmatmul.bf16.gmra.mxu0 %v915
    %v1380 = vpop.f32.mrf.mxu0
    %v1381 = vadd.f32 %v993, %v1380
    %v1382 = vpop.f32.mrf.mxu0
    %v1383 = vadd.f32 %v993, %v1382
    %1384 = vmatmul.bf16.gmra.mxu0 %v917
    %v1385 = vpop.f32.mrf.mxu0
    %v1386 = vadd.f32 %v993, %v1385
    %v1387 = vpop.f32.mrf.mxu0
    %v1388 = vadd.f32 %v993, %v1387
    %1389 = vmatmul.bf16.gmra.mxu0 %v919
    %v1390 = vpop.f32.mrf.mxu0
    %v1391 = vadd.f32 %v993, %v1390
    %v1392 = vpop.f32.mrf.mxu0
    %v1393 = vadd.f32 %v993, %v1392
    %1394 = vmatmul.bf16.gmra.mxu0 %v921
    %v1395 = vpop.f32.mrf.mxu0
    %v1396 = vadd.f32 %v993, %v1395
    %v1397 = vpop.f32.mrf.mxu0
    %v1398 = vadd.f32 %v993, %v1397
    %1399 = vmatmul.bf16.gmra.mxu0 %v923
    %v1400 = vpop.f32.mrf.mxu0
    %v1401 = vadd.f32 %v993, %v1400
    %v1402 = vpop.f32.mrf.mxu0
    %v1403 = vadd.f32 %v993, %v1402
    %1404 = vmatmul.bf16.gmra.mxu0 %v925
    %v1405 = vpop.f32.mrf.mxu0
    %v1406 = vadd.f32 %v993, %v1405
    %v1407 = vpop.f32.mrf.mxu0
    %v1408 = vadd.f32 %v993, %v1407
    %1409 = vdwg.mxu0
    %1410 = vmatpush.bf16.msra.mxu0 %v1253
    %1411 = vmatpush.bf16.msra.mxu0 %v1249
    %1412 = vmatpush.bf16.msra.mxu0 %v1245
    %1413 = vmatpush.bf16.msra.mxu0 %v1241
    %1414 = vmatpush.bf16.msra.mxu0 %v1237
    %1415 = vmatpush.bf16.msra.mxu0 %v1233
    %1416 = vmatpush.bf16.msra.mxu0 %v1229
    %1417 = vmatpush.bf16.msra.mxu0 %v1225
    %1418 = vmatmul.bf16.gmra.mxu0 %v896
    %v1419 = vpop.f32.mrf.mxu0
    %v1420 = vadd.f32 %v1331, %v1419
    %v1421 = vpop.f32.mrf.mxu0
    %v1422 = vadd.f32 %v1333, %v1421
    %1423 = vmatmul.bf16.gmra.mxu0 %v898
    %v1424 = vpop.f32.mrf.mxu0
    %v1425 = vadd.f32 %v1336, %v1424
    %v1426 = vpop.f32.mrf.mxu0
    %v1427 = vadd.f32 %v1338, %v1426
    %1428 = vmatmul.bf16.gmra.mxu0 %v900
    %v1429 = vpop.f32.mrf.mxu0
    %v1430 = vadd.f32 %v1341, %v1429
    %v1431 = vpop.f32.mrf.mxu0
    %v1432 = vadd.f32 %v1343, %v1431
    %1433 = vmatmul.bf16.gmra.mxu0 %v902
    %v1434 = vpop.f32.mrf.mxu0
    %v1435 = vadd.f32 %v1346, %v1434
    %v1436 = vpop.f32.mrf.mxu0
    %v1437 = vadd.f32 %v1348, %v1436
    %1438 = vmatmul.bf16.gmra.mxu0 %v904
    %v1439 = vpop.f32.mrf.mxu0
    %v1440 = vadd.f32 %v1351, %v1439
    %v1441 = vpop.f32.mrf.mxu0
    %v1442 = vadd.f32 %v1353, %v1441
    %1443 = vmatmul.bf16.gmra.mxu0 %v906
    %v1444 = vpop.f32.mrf.mxu0
    %v1445 = vadd.f32 %v1356, %v1444
    %v1446 = vpop.f32.mrf.mxu0
    %v1447 = vadd.f32 %v1358, %v1446
    %1448 = vmatmul.bf16.gmra.mxu0 %v908
    %v1449 = vpop.f32.mrf.mxu0
    %v1450 = vadd.f32 %v1361, %v1449
    %v1451 = vpop.f32.mrf.mxu0
    %v1452 = vadd.f32 %v1363, %v1451
    %1453 = vmatmul.bf16.gmra.mxu0 %v910
    %v1454 = vpop.f32.mrf.mxu0
    %v1455 = vadd.f32 %v1366, %v1454
    %v1456 = vpop.f32.mrf.mxu0
    %v1457 = vadd.f32 %v1368, %v1456
    %1458 = vmatmul.bf16.gmra.mxu0 %v912
    %v1459 = vpop.f32.mrf.mxu0
    %v1460 = vadd.f32 %v1371, %v1459
    %v1461 = vpop.f32.mrf.mxu0
    %v1462 = vadd.f32 %v1373, %v1461
    %1463 = vmatmul.bf16.gmra.mxu0 %v914
    %v1464 = vpop.f32.mrf.mxu0
    %v1465 = vadd.f32 %v1376, %v1464
    %v1466 = vpop.f32.mrf.mxu0
    %v1467 = vadd.f32 %v1378, %v1466
    %1468 = vmatmul.bf16.gmra.mxu0 %v916
    %v1469 = vpop.f32.mrf.mxu0
    %v1470 = vadd.f32 %v1381, %v1469
    %v1471 = vpop.f32.mrf.mxu0
    %v1472 = vadd.f32 %v1383, %v1471
    %1473 = vmatmul.bf16.gmra.mxu0 %v918
    %v1474 = vpop.f32.mrf.mxu0
    %v1475 = vadd.f32 %v1386, %v1474
    %v1476 = vpop.f32.mrf.mxu0
    %v1477 = vadd.f32 %v1388, %v1476
    %1478 = vmatmul.bf16.gmra.mxu0 %v920
    %v1479 = vpop.f32.mrf.mxu0
    %v1480 = vadd.f32 %v1391, %v1479
    %v1481 = vpop.f32.mrf.mxu0
    %v1482 = vadd.f32 %v1393, %v1481
    %1483 = vmatmul.bf16.gmra.mxu0 %v922
    %v1484 = vpop.f32.mrf.mxu0
    %v1485 = vadd.f32 %v1396, %v1484
    %v1486 = vpop.f32.mrf.mxu0
    %v1487 = vadd.f32 %v1398, %v1486
    %1488 = vmatmul.bf16.gmra.mxu0 %v924
    %v1489 = vpop.f32.mrf.mxu0
    %v1490 = vadd.f32 %v1401, %v1489
    %v1491 = vpop.f32.mrf.mxu0
    %v1492 = vadd.f32 %v1403, %v1491
    %1493 = vmatmul.bf16.gmra.mxu0 %v926
    %v1494 = vpop.f32.mrf.mxu0
    %v1495 = vadd.f32 %v1406, %v1494
    %v1496 = vpop.f32.mrf.mxu0
    %v1497 = vadd.f32 %v1408, %v1496
    %1498 = vdwg.mxu0
    %1499 = vmatpush.bf16.msra.mxu0 %v1222
    %1500 = vmatpush.bf16.msra.mxu0 %v1218
    %1501 = vmatpush.bf16.msra.mxu0 %v1214
    %1502 = vmatpush.bf16.msra.mxu0 %v1210
    %1503 = vmatpush.bf16.msra.mxu0 %v1206
    %1504 = vmatpush.bf16.msra.mxu0 %v1202
    %1505 = vmatpush.bf16.msra.mxu0 %v1198
    %1506 = vmatpush.bf16.msra.mxu0 %v1194
    %1507 = vmatmul.bf16.gmra.mxu0 %v895
    %v1508 = vpop.f32.mrf.mxu0
    %v1509 = vadd.f32 %v994, %v1508
    %v1510 = vpop.f32.mrf.mxu0
    %v1511 = vadd.f32 %v994, %v1510
    %1512 = vmatmul.bf16.gmra.mxu0 %v897
    %v1513 = vpop.f32.mrf.mxu0
    %v1514 = vadd.f32 %v994, %v1513
    %v1515 = vpop.f32.mrf.mxu0
    %v1516 = vadd.f32 %v994, %v1515
    %1517 = vmatmul.bf16.gmra.mxu0 %v899
    %v1518 = vpop.f32.mrf.mxu0
    %v1519 = vadd.f32 %v994, %v1518
    %v1520 = vpop.f32.mrf.mxu0
    %v1521 = vadd.f32 %v994, %v1520
    %1522 = vmatmul.bf16.gmra.mxu0 %v901
    %v1523 = vpop.f32.mrf.mxu0
    %v1524 = vadd.f32 %v994, %v1523
    %v1525 = vpop.f32.mrf.mxu0
    %v1526 = vadd.f32 %v994, %v1525
    %1527 = vmatmul.bf16.gmra.mxu0 %v903
    %v1528 = vpop.f32.mrf.mxu0
    %v1529 = vadd.f32 %v994, %v1528
    %v1530 = vpop.f32.mrf.mxu0
    %v1531 = vadd.f32 %v994, %v1530
    %1532 = vmatmul.bf16.gmra.mxu0 %v905
    %v1533 = vpop.f32.mrf.mxu0
    %v1534 = vadd.f32 %v994, %v1533
    %v1535 = vpop.f32.mrf.mxu0
    %v1536 = vadd.f32 %v994, %v1535
    %1537 = vmatmul.bf16.gmra.mxu0 %v907
    %v1538 = vpop.f32.mrf.mxu0
    %v1539 = vadd.f32 %v994, %v1538
    %v1540 = vpop.f32.mrf.mxu0
    %v1541 = vadd.f32 %v994, %v1540
    %1542 = vmatmul.bf16.gmra.mxu0 %v909
    %v1543 = vpop.f32.mrf.mxu0
    %v1544 = vadd.f32 %v994, %v1543
    %v1545 = vpop.f32.mrf.mxu0
    %v1546 = vadd.f32 %v994, %v1545
    %1547 = vmatmul.bf16.gmra.mxu0 %v911
    %v1548 = vpop.f32.mrf.mxu0
    %v1549 = vadd.f32 %v994, %v1548
    %v1550 = vpop.f32.mrf.mxu0
    %v1551 = vadd.f32 %v994, %v1550
    %1552 = vmatmul.bf16.gmra.mxu0 %v913
    %v1553 = vpop.f32.mrf.mxu0
    %v1554 = vadd.f32 %v994, %v1553
    %v1555 = vpop.f32.mrf.mxu0
    %v1556 = vadd.f32 %v994, %v1555
    %1557 = vmatmul.bf16.gmra.mxu0 %v915
    %v1558 = vpop.f32.mrf.mxu0
    %v1559 = vadd.f32 %v994, %v1558
    %v1560 = vpop.f32.mrf.mxu0
    %v1561 = vadd.f32 %v994, %v1560
    %1562 = vmatmul.bf16.gmra.mxu0 %v917
    %v1563 = vpop.f32.mrf.mxu0
    %v1564 = vadd.f32 %v994, %v1563
    %v1565 = vpop.f32.mrf.mxu0
    %v1566 = vadd.f32 %v994, %v1565
    %1567 = vmatmul.bf16.gmra.mxu0 %v919
    %v1568 = vpop.f32.mrf.mxu0
    %v1569 = vadd.f32 %v994, %v1568
    %v1570 = vpop.f32.mrf.mxu0
    %v1571 = vadd.f32 %v994, %v1570
    %1572 = vmatmul.bf16.gmra.mxu0 %v921
    %v1573 = vpop.f32.mrf.mxu0
    %v1574 = vadd.f32 %v994, %v1573
    %v1575 = vpop.f32.mrf.mxu0
    %v1576 = vadd.f32 %v994, %v1575
    %1577 = vmatmul.bf16.gmra.mxu0 %v923
    %v1578 = vpop.f32.mrf.mxu0
    %v1579 = vadd.f32 %v994, %v1578
    %v1580 = vpop.f32.mrf.mxu0
    %v1581 = vadd.f32 %v994, %v1580
    %1582 = vmatmul.bf16.gmra.mxu0 %v925
    %v1583 = vpop.f32.mrf.mxu0
    %v1584 = vadd.f32 %v994, %v1583
    %v1585 = vpop.f32.mrf.mxu0
    %v1586 = vadd.f32 %v994, %v1585
    %1587 = vdwg.mxu0
    %1588 = vmatpush.bf16.msra.mxu0 %v1254
    %1589 = vmatpush.bf16.msra.mxu0 %v1250
    %1590 = vmatpush.bf16.msra.mxu0 %v1246
    %1591 = vmatpush.bf16.msra.mxu0 %v1242
    %1592 = vmatpush.bf16.msra.mxu0 %v1238
    %1593 = vmatpush.bf16.msra.mxu0 %v1234
    %1594 = vmatpush.bf16.msra.mxu0 %v1230
    %1595 = vmatpush.bf16.msra.mxu0 %v1226
    %1596 = vmatmul.bf16.gmra.mxu0 %v896
    %v1597 = vpop.f32.mrf.mxu0
    %v1598 = vadd.f32 %v1509, %v1597
    %v1599 = vpop.f32.mrf.mxu0
    %v1600 = vadd.f32 %v1511, %v1599
    %1601 = vmatmul.bf16.gmra.mxu0 %v898
    %v1602 = vpop.f32.mrf.mxu0
    %v1603 = vadd.f32 %v1514, %v1602
    %v1604 = vpop.f32.mrf.mxu0
    %v1605 = vadd.f32 %v1516, %v1604
    %1606 = vmatmul.bf16.gmra.mxu0 %v900
    %v1607 = vpop.f32.mrf.mxu0
    %v1608 = vadd.f32 %v1519, %v1607
    %v1609 = vpop.f32.mrf.mxu0
    %v1610 = vadd.f32 %v1521, %v1609
    %1611 = vmatmul.bf16.gmra.mxu0 %v902
    %v1612 = vpop.f32.mrf.mxu0
    %v1613 = vadd.f32 %v1524, %v1612
    %v1614 = vpop.f32.mrf.mxu0
    %v1615 = vadd.f32 %v1526, %v1614
    %1616 = vmatmul.bf16.gmra.mxu0 %v904
    %v1617 = vpop.f32.mrf.mxu0
    %v1618 = vadd.f32 %v1529, %v1617
    %v1619 = vpop.f32.mrf.mxu0
    %v1620 = vadd.f32 %v1531, %v1619
    %1621 = vmatmul.bf16.gmra.mxu0 %v906
    %v1622 = vpop.f32.mrf.mxu0
    %v1623 = vadd.f32 %v1534, %v1622
    %v1624 = vpop.f32.mrf.mxu0
    %v1625 = vadd.f32 %v1536, %v1624
    %1626 = vmatmul.bf16.gmra.mxu0 %v908
    %v1627 = vpop.f32.mrf.mxu0
    %v1628 = vadd.f32 %v1539, %v1627
    %v1629 = vpop.f32.mrf.mxu0
    %v1630 = vadd.f32 %v1541, %v1629
    %1631 = vmatmul.bf16.gmra.mxu0 %v910
    %v1632 = vpop.f32.mrf.mxu0
    %v1633 = vadd.f32 %v1544, %v1632
    %v1634 = vpop.f32.mrf.mxu0
    %v1635 = vadd.f32 %v1546, %v1634
    %1636 = vmatmul.bf16.gmra.mxu0 %v912
    %v1637 = vpop.f32.mrf.mxu0
    %v1638 = vadd.f32 %v1549, %v1637
    %v1639 = vpop.f32.mrf.mxu0
    %v1640 = vadd.f32 %v1551, %v1639
    %1641 = vmatmul.bf16.gmra.mxu0 %v914
    %v1642 = vpop.f32.mrf.mxu0
    %v1643 = vadd.f32 %v1554, %v1642
    %v1644 = vpop.f32.mrf.mxu0
    %v1645 = vadd.f32 %v1556, %v1644
    %1646 = vmatmul.bf16.gmra.mxu0 %v916
    %v1647 = vpop.f32.mrf.mxu0
    %v1648 = vadd.f32 %v1559, %v1647
    %v1649 = vpop.f32.mrf.mxu0
    %v1650 = vadd.f32 %v1561, %v1649
    %1651 = vmatmul.bf16.gmra.mxu0 %v918
    %v1652 = vpop.f32.mrf.mxu0
    %v1653 = vadd.f32 %v1564, %v1652
    %v1654 = vpop.f32.mrf.mxu0
    %v1655 = vadd.f32 %v1566, %v1654
    %1656 = vmatmul.bf16.gmra.mxu0 %v920
    %v1657 = vpop.f32.mrf.mxu0
    %v1658 = vadd.f32 %v1569, %v1657
    %v1659 = vpop.f32.mrf.mxu0
    %v1660 = vadd.f32 %v1571, %v1659
    %1661 = vmatmul.bf16.gmra.mxu0 %v922
    %v1662 = vpop.f32.mrf.mxu0
    %v1663 = vadd.f32 %v1574, %v1662
    %v1664 = vpop.f32.mrf.mxu0
    %v1665 = vadd.f32 %v1576, %v1664
    %1666 = vmatmul.bf16.gmra.mxu0 %v924
    %v1667 = vpop.f32.mrf.mxu0
    %v1668 = vadd.f32 %v1579, %v1667
    %v1669 = vpop.f32.mrf.mxu0
    %v1670 = vadd.f32 %v1581, %v1669
    %1671 = vmatmul.bf16.gmra.mxu0 %v926
    %v1672 = vpop.f32.mrf.mxu0
    %v1673 = vadd.f32 %v1584, %v1672
    %v1674 = vpop.f32.mrf.mxu0
    %v1675 = vadd.f32 %v1586, %v1674
    %1676 = vdwg.mxu0
    %1677 = vmatpush.bf16.msra.mxu0 %v1223
    %1678 = vmatpush.bf16.msra.mxu0 %v1219
    %1679 = vmatpush.bf16.msra.mxu0 %v1215
    %1680 = vmatpush.bf16.msra.mxu0 %v1211
    %1681 = vmatpush.bf16.msra.mxu0 %v1207
    %1682 = vmatpush.bf16.msra.mxu0 %v1203
    %1683 = vmatpush.bf16.msra.mxu0 %v1199
    %1684 = vmatpush.bf16.msra.mxu0 %v1195
    %1685 = vmatmul.bf16.gmra.mxu0 %v895
    %v1686 = vpop.f32.mrf.mxu0
    %v1687 = vadd.f32 %v995, %v1686
    %v1688 = vpop.f32.mrf.mxu0
    %v1689 = vadd.f32 %v995, %v1688
    %1690 = vmatmul.bf16.gmra.mxu0 %v897
    %v1691 = vpop.f32.mrf.mxu0
    %v1692 = vadd.f32 %v995, %v1691
    %v1693 = vpop.f32.mrf.mxu0
    %v1694 = vadd.f32 %v995, %v1693
    %1695 = vmatmul.bf16.gmra.mxu0 %v899
    %v1696 = vpop.f32.mrf.mxu0
    %v1697 = vadd.f32 %v995, %v1696
    %v1698 = vpop.f32.mrf.mxu0
    %v1699 = vadd.f32 %v995, %v1698
    %1700 = vmatmul.bf16.gmra.mxu0 %v901
    %v1701 = vpop.f32.mrf.mxu0
    %v1702 = vadd.f32 %v995, %v1701
    %v1703 = vpop.f32.mrf.mxu0
    %v1704 = vadd.f32 %v995, %v1703
    %1705 = vmatmul.bf16.gmra.mxu0 %v903
    %v1706 = vpop.f32.mrf.mxu0
    %v1707 = vadd.f32 %v995, %v1706
    %v1708 = vpop.f32.mrf.mxu0
    %v1709 = vadd.f32 %v995, %v1708
    %1710 = vmatmul.bf16.gmra.mxu0 %v905
    %v1711 = vpop.f32.mrf.mxu0
    %v1712 = vadd.f32 %v995, %v1711
    %v1713 = vpop.f32.mrf.mxu0
    %v1714 = vadd.f32 %v995, %v1713
    %1715 = vmatmul.bf16.gmra.mxu0 %v907
    %v1716 = vpop.f32.mrf.mxu0
    %v1717 = vadd.f32 %v995, %v1716
    %v1718 = vpop.f32.mrf.mxu0
    %v1719 = vadd.f32 %v995, %v1718
    %1720 = vmatmul.bf16.gmra.mxu0 %v909
    %v1721 = vpop.f32.mrf.mxu0
    %v1722 = vadd.f32 %v995, %v1721
    %v1723 = vpop.f32.mrf.mxu0
    %v1724 = vadd.f32 %v995, %v1723
    %1725 = vmatmul.bf16.gmra.mxu0 %v911
    %v1726 = vpop.f32.mrf.mxu0
    %v1727 = vadd.f32 %v995, %v1726
    %v1728 = vpop.f32.mrf.mxu0
    %v1729 = vadd.f32 %v995, %v1728
    %1730 = vmatmul.bf16.gmra.mxu0 %v913
    %v1731 = vpop.f32.mrf.mxu0
    %v1732 = vadd.f32 %v995, %v1731
    %v1733 = vpop.f32.mrf.mxu0
    %v1734 = vadd.f32 %v995, %v1733
    %1735 = vmatmul.bf16.gmra.mxu0 %v915
    %v1736 = vpop.f32.mrf.mxu0
    %v1737 = vadd.f32 %v995, %v1736
    %v1738 = vpop.f32.mrf.mxu0
    %v1739 = vadd.f32 %v995, %v1738
    %1740 = vmatmul.bf16.gmra.mxu0 %v917
    %v1741 = vpop.f32.mrf.mxu0
    %v1742 = vadd.f32 %v995, %v1741
    %v1743 = vpop.f32.mrf.mxu0
    %v1744 = vadd.f32 %v995, %v1743
    %1745 = vmatmul.bf16.gmra.mxu0 %v919
    %v1746 = vpop.f32.mrf.mxu0
    %v1747 = vadd.f32 %v995, %v1746
    %v1748 = vpop.f32.mrf.mxu0
    %v1749 = vadd.f32 %v995, %v1748
    %1750 = vmatmul.bf16.gmra.mxu0 %v921
    %v1751 = vpop.f32.mrf.mxu0
    %v1752 = vadd.f32 %v995, %v1751
    %v1753 = vpop.f32.mrf.mxu0
    %v1754 = vadd.f32 %v995, %v1753
    %1755 = vmatmul.bf16.gmra.mxu0 %v923
    %v1756 = vpop.f32.mrf.mxu0
    %v1757 = vadd.f32 %v995, %v1756
    %v1758 = vpop.f32.mrf.mxu0
    %v1759 = vadd.f32 %v995, %v1758
    %1760 = vmatmul.bf16.gmra.mxu0 %v925
    %v1761 = vpop.f32.mrf.mxu0
    %v1762 = vadd.f32 %v995, %v1761
    %v1763 = vpop.f32.mrf.mxu0
    %v1764 = vadd.f32 %v995, %v1763
    %1765 = vdwg.mxu0
    %1766 = vmatpush.bf16.msra.mxu0 %v1255
    %1767 = vmatpush.bf16.msra.mxu0 %v1251
    %1768 = vmatpush.bf16.msra.mxu0 %v1247
    %1769 = vmatpush.bf16.msra.mxu0 %v1243
    %1770 = vmatpush.bf16.msra.mxu0 %v1239
    %1771 = vmatpush.bf16.msra.mxu0 %v1235
    %1772 = vmatpush.bf16.msra.mxu0 %v1231
    %1773 = vmatpush.bf16.msra.mxu0 %v1227
    %1774 = vmatmul.bf16.gmra.mxu0 %v896
    %v1775 = vpop.f32.mrf.mxu0
    %v1776 = vadd.f32 %v1687, %v1775
    %v1777 = vpop.f32.mrf.mxu0
    %v1778 = vadd.f32 %v1689, %v1777
    %1779 = vmatmul.bf16.gmra.mxu0 %v898
    %v1780 = vpop.f32.mrf.mxu0
    %v1781 = vadd.f32 %v1692, %v1780
    %v1782 = vpop.f32.mrf.mxu0
    %v1783 = vadd.f32 %v1694, %v1782
    %1784 = vmatmul.bf16.gmra.mxu0 %v900
    %v1785 = vpop.f32.mrf.mxu0
    %v1786 = vadd.f32 %v1697, %v1785
    %v1787 = vpop.f32.mrf.mxu0
    %v1788 = vadd.f32 %v1699, %v1787
    %1789 = vmatmul.bf16.gmra.mxu0 %v902
    %v1790 = vpop.f32.mrf.mxu0
    %v1791 = vadd.f32 %v1702, %v1790
    %v1792 = vpop.f32.mrf.mxu0
    %v1793 = vadd.f32 %v1704, %v1792
    %1794 = vmatmul.bf16.gmra.mxu0 %v904
    %v1795 = vpop.f32.mrf.mxu0
    %v1796 = vadd.f32 %v1707, %v1795
    %v1797 = vpop.f32.mrf.mxu0
    %v1798 = vadd.f32 %v1709, %v1797
    %1799 = vmatmul.bf16.gmra.mxu0 %v906
    %v1800 = vpop.f32.mrf.mxu0
    %v1801 = vadd.f32 %v1712, %v1800
    %v1802 = vpop.f32.mrf.mxu0
    %v1803 = vadd.f32 %v1714, %v1802
    %1804 = vmatmul.bf16.gmra.mxu0 %v908
    %v1805 = vpop.f32.mrf.mxu0
    %v1806 = vadd.f32 %v1717, %v1805
    %v1807 = vpop.f32.mrf.mxu0
    %v1808 = vadd.f32 %v1719, %v1807
    %1809 = vmatmul.bf16.gmra.mxu0 %v910
    %v1810 = vpop.f32.mrf.mxu0
    %v1811 = vadd.f32 %v1722, %v1810
    %v1812 = vpop.f32.mrf.mxu0
    %v1813 = vadd.f32 %v1724, %v1812
    %1814 = vmatmul.bf16.gmra.mxu0 %v912
    %v1815 = vpop.f32.mrf.mxu0
    %v1816 = vadd.f32 %v1727, %v1815
    %v1817 = vpop.f32.mrf.mxu0
    %v1818 = vadd.f32 %v1729, %v1817
    %1819 = vmatmul.bf16.gmra.mxu0 %v914
    %v1820 = vpop.f32.mrf.mxu0
    %v1821 = vadd.f32 %v1732, %v1820
    %v1822 = vpop.f32.mrf.mxu0
    %v1823 = vadd.f32 %v1734, %v1822
    %1824 = vmatmul.bf16.gmra.mxu0 %v916
    %v1825 = vpop.f32.mrf.mxu0
    %v1826 = vadd.f32 %v1737, %v1825
    %v1827 = vpop.f32.mrf.mxu0
    %v1828 = vadd.f32 %v1739, %v1827
    %1829 = vmatmul.bf16.gmra.mxu0 %v918
    %v1830 = vpop.f32.mrf.mxu0
    %v1831 = vadd.f32 %v1742, %v1830
    %v1832 = vpop.f32.mrf.mxu0
    %v1833 = vadd.f32 %v1744, %v1832
    %1834 = vmatmul.bf16.gmra.mxu0 %v920
    %v1835 = vpop.f32.mrf.mxu0
    %v1836 = vadd.f32 %v1747, %v1835
    %v1837 = vpop.f32.mrf.mxu0
    %v1838 = vadd.f32 %v1749, %v1837
    %1839 = vmatmul.bf16.gmra.mxu0 %v922
    %v1840 = vpop.f32.mrf.mxu0
    %v1841 = vadd.f32 %v1752, %v1840
    %v1842 = vpop.f32.mrf.mxu0
    %v1843 = vadd.f32 %v1754, %v1842
    %1844 = vmatmul.bf16.gmra.mxu0 %v924
    %v1845 = vpop.f32.mrf.mxu0
    %v1846 = vadd.f32 %v1757, %v1845
    %v1847 = vpop.f32.mrf.mxu0
    %v1848 = vadd.f32 %v1759, %v1847
    %1849 = vmatmul.bf16.gmra.mxu0 %v926
    %v1850 = vpop.f32.mrf.mxu0
    %v1851 = vadd.f32 %v1762, %v1850
    %v1852 = vpop.f32.mrf.mxu0
    %v1853 = vadd.f32 %v1764, %v1852
    %1854 = vdwg.mxu0
    %1855 = vmatpush.bf16.msra.mxu0 %v1224
    %1856 = vmatpush.bf16.msra.mxu0 %v1220
    %1857 = vmatpush.bf16.msra.mxu0 %v1216
    %1858 = vmatpush.bf16.msra.mxu0 %v1212
    %1859 = vmatpush.bf16.msra.mxu0 %v1208
    %1860 = vmatpush.bf16.msra.mxu0 %v1204
    %1861 = vmatpush.bf16.msra.mxu0 %v1200
    %1862 = vmatpush.bf16.msra.mxu0 %v1196
    %1863 = vmatmul.bf16.gmra.mxu0 %v895
    %v1864 = vpop.f32.mrf.mxu0
    %v1865 = vadd.f32 %v996, %v1864
    %v1866 = vpop.f32.mrf.mxu0
    %v1867 = vadd.f32 %v996, %v1866
    %1868 = vmatmul.bf16.gmra.mxu0 %v897
    %v1869 = vpop.f32.mrf.mxu0
    %v1870 = vadd.f32 %v996, %v1869
    %v1871 = vpop.f32.mrf.mxu0
    %v1872 = vadd.f32 %v996, %v1871
    %1873 = vmatmul.bf16.gmra.mxu0 %v899
    %v1874 = vpop.f32.mrf.mxu0
    %v1875 = vadd.f32 %v996, %v1874
    %v1876 = vpop.f32.mrf.mxu0
    %v1877 = vadd.f32 %v996, %v1876
    %1878 = vmatmul.bf16.gmra.mxu0 %v901
    %v1879 = vpop.f32.mrf.mxu0
    %v1880 = vadd.f32 %v996, %v1879
    %v1881 = vpop.f32.mrf.mxu0
    %v1882 = vadd.f32 %v996, %v1881
    %1883 = vmatmul.bf16.gmra.mxu0 %v903
    %v1884 = vpop.f32.mrf.mxu0
    %v1885 = vadd.f32 %v996, %v1884
    %v1886 = vpop.f32.mrf.mxu0
    %v1887 = vadd.f32 %v996, %v1886
    %1888 = vmatmul.bf16.gmra.mxu0 %v905
    %v1889 = vpop.f32.mrf.mxu0
    %v1890 = vadd.f32 %v996, %v1889
    %v1891 = vpop.f32.mrf.mxu0
    %v1892 = vadd.f32 %v996, %v1891
    %1893 = vmatmul.bf16.gmra.mxu0 %v907
    %v1894 = vpop.f32.mrf.mxu0
    %v1895 = vadd.f32 %v996, %v1894
    %v1896 = vpop.f32.mrf.mxu0
    %v1897 = vadd.f32 %v996, %v1896
    %1898 = vmatmul.bf16.gmra.mxu0 %v909
    %v1899 = vpop.f32.mrf.mxu0
    %v1900 = vadd.f32 %v996, %v1899
    %v1901 = vpop.f32.mrf.mxu0
    %v1902 = vadd.f32 %v996, %v1901
    %1903 = vmatmul.bf16.gmra.mxu0 %v911
    %v1904 = vpop.f32.mrf.mxu0
    %v1905 = vadd.f32 %v996, %v1904
    %v1906 = vpop.f32.mrf.mxu0
    %v1907 = vadd.f32 %v996, %v1906
    %1908 = vmatmul.bf16.gmra.mxu0 %v913
    %v1909 = vpop.f32.mrf.mxu0
    %v1910 = vadd.f32 %v996, %v1909
    %v1911 = vpop.f32.mrf.mxu0
    %v1912 = vadd.f32 %v996, %v1911
    %1913 = vmatmul.bf16.gmra.mxu0 %v915
    %v1914 = vpop.f32.mrf.mxu0
    %v1915 = vadd.f32 %v996, %v1914
    %v1916 = vpop.f32.mrf.mxu0
    %v1917 = vadd.f32 %v996, %v1916
    %1918 = vmatmul.bf16.gmra.mxu0 %v917
    %v1919 = vpop.f32.mrf.mxu0
    %v1920 = vadd.f32 %v996, %v1919
    %v1921 = vpop.f32.mrf.mxu0
    %v1922 = vadd.f32 %v996, %v1921
    %1923 = vmatmul.bf16.gmra.mxu0 %v919
    %v1924 = vpop.f32.mrf.mxu0
    %v1925 = vadd.f32 %v996, %v1924
    %v1926 = vpop.f32.mrf.mxu0
    %v1927 = vadd.f32 %v996, %v1926
    %1928 = vmatmul.bf16.gmra.mxu0 %v921
    %v1929 = vpop.f32.mrf.mxu0
    %v1930 = vadd.f32 %v996, %v1929
    %v1931 = vpop.f32.mrf.mxu0
    %v1932 = vadd.f32 %v996, %v1931
    %1933 = vmatmul.bf16.gmra.mxu0 %v923
    %v1934 = vpop.f32.mrf.mxu0
    %v1935 = vadd.f32 %v996, %v1934
    %v1936 = vpop.f32.mrf.mxu0
    %v1937 = vadd.f32 %v996, %v1936
    %1938 = vmatmul.bf16.gmra.mxu0 %v925
    %v1939 = vpop.f32.mrf.mxu0
    %v1940 = vadd.f32 %v996, %v1939
    %v1941 = vpop.f32.mrf.mxu0
    %v1942 = vadd.f32 %v996, %v1941
    %1943 = vdwg.mxu0
    %1944 = vmatpush.bf16.msra.mxu0 %v1256
    %1945 = vmatpush.bf16.msra.mxu0 %v1252
    %1946 = vmatpush.bf16.msra.mxu0 %v1248
    %1947 = vmatpush.bf16.msra.mxu0 %v1244
    %1948 = vmatpush.bf16.msra.mxu0 %v1240
    %1949 = vmatpush.bf16.msra.mxu0 %v1236
    %1950 = vmatpush.bf16.msra.mxu0 %v1232
    %1951 = vmatpush.bf16.msra.mxu0 %v1228
    %1952 = vmatmul.bf16.gmra.mxu0 %v896
    %v1953 = vpop.f32.mrf.mxu0
    %v1954 = vadd.f32 %v1865, %v1953
    %v1955 = vpop.f32.mrf.mxu0
    %v1956 = vadd.f32 %v1867, %v1955
    %1957 = vmatmul.bf16.gmra.mxu0 %v898
    %v1958 = vpop.f32.mrf.mxu0
    %v1959 = vadd.f32 %v1870, %v1958
    %v1960 = vpop.f32.mrf.mxu0
    %v1961 = vadd.f32 %v1872, %v1960
    %1962 = vmatmul.bf16.gmra.mxu0 %v900
    %v1963 = vpop.f32.mrf.mxu0
    %v1964 = vadd.f32 %v1875, %v1963
    %v1965 = vpop.f32.mrf.mxu0
    %v1966 = vadd.f32 %v1877, %v1965
    %1967 = vmatmul.bf16.gmra.mxu0 %v902
    %v1968 = vpop.f32.mrf.mxu0
    %v1969 = vadd.f32 %v1880, %v1968
    %v1970 = vpop.f32.mrf.mxu0
    %v1971 = vadd.f32 %v1882, %v1970
    %1972 = vmatmul.bf16.gmra.mxu0 %v904
    %v1973 = vpop.f32.mrf.mxu0
    %v1974 = vadd.f32 %v1885, %v1973
    %v1975 = vpop.f32.mrf.mxu0
    %v1976 = vadd.f32 %v1887, %v1975
    %1977 = vmatmul.bf16.gmra.mxu0 %v906
    %v1978 = vpop.f32.mrf.mxu0
    %v1979 = vadd.f32 %v1890, %v1978
    %v1980 = vpop.f32.mrf.mxu0
    %v1981 = vadd.f32 %v1892, %v1980
    %1982 = vmatmul.bf16.gmra.mxu0 %v908
    %v1983 = vpop.f32.mrf.mxu0
    %v1984 = vadd.f32 %v1895, %v1983
    %v1985 = vpop.f32.mrf.mxu0
    %v1986 = vadd.f32 %v1897, %v1985
    %1987 = vmatmul.bf16.gmra.mxu0 %v910
    %v1988 = vpop.f32.mrf.mxu0
    %v1989 = vadd.f32 %v1900, %v1988
    %v1990 = vpop.f32.mrf.mxu0
    %v1991 = vadd.f32 %v1902, %v1990
    %1992 = vmatmul.bf16.gmra.mxu0 %v912
    %v1993 = vpop.f32.mrf.mxu0
    %v1994 = vadd.f32 %v1905, %v1993
    %v1995 = vpop.f32.mrf.mxu0
    %v1996 = vadd.f32 %v1907, %v1995
    %1997 = vmatmul.bf16.gmra.mxu0 %v914
    %v1998 = vpop.f32.mrf.mxu0
    %v1999 = vadd.f32 %v1910, %v1998
    %v2000 = vpop.f32.mrf.mxu0
    %v2001 = vadd.f32 %v1912, %v2000
    %2002 = vmatmul.bf16.gmra.mxu0 %v916
    %v2003 = vpop.f32.mrf.mxu0
    %v2004 = vadd.f32 %v1915, %v2003
    %v2005 = vpop.f32.mrf.mxu0
    %v2006 = vadd.f32 %v1917, %v2005
    %2007 = vmatmul.bf16.gmra.mxu0 %v918
    %v2008 = vpop.f32.mrf.mxu0
    %v2009 = vadd.f32 %v1920, %v2008
    %v2010 = vpop.f32.mrf.mxu0
    %v2011 = vadd.f32 %v1922, %v2010
    %2012 = vmatmul.bf16.gmra.mxu0 %v920
    %v2013 = vpop.f32.mrf.mxu0
    %v2014 = vadd.f32 %v1925, %v2013
    %v2015 = vpop.f32.mrf.mxu0
    %v2016 = vadd.f32 %v1927, %v2015
    %2017 = vmatmul.bf16.gmra.mxu0 %v922
    %v2018 = vpop.f32.mrf.mxu0
    %v2019 = vadd.f32 %v1930, %v2018
    %v2020 = vpop.f32.mrf.mxu0
    %v2021 = vadd.f32 %v1932, %v2020
    %2022 = vmatmul.bf16.gmra.mxu0 %v924
    %v2023 = vpop.f32.mrf.mxu0
    %v2024 = vadd.f32 %v1935, %v2023
    %v2025 = vpop.f32.mrf.mxu0
    %v2026 = vadd.f32 %v1937, %v2025
    %2027 = vmatmul.bf16.gmra.mxu0 %v926
    %v2028 = vpop.f32.mrf.mxu0
    %v2029 = vadd.f32 %v1940, %v2028
    %v2030 = vpop.f32.mrf.mxu0
    %v2031 = vadd.f32 %v1942, %v2030
    %2032 = vdwg.mxu0
    %v2033 = vmax.f32 %v1420, %v1422
    %v2034 = vmax.f32 %v2033, %v1425
    %v2035 = vmax.f32 %v2034, %v1427
    %v2036 = vmax.f32 %v2035, %v1430
    %v2037 = vmax.f32 %v2036, %v1432
    %v2038 = vmax.f32 %v2037, %v1435
    %v2039 = vmax.f32 %v2038, %v1437
    %v2040 = vmax.f32 %v2039, %v1440
    %v2041 = vmax.f32 %v2040, %v1442
    %v2042 = vmax.f32 %v2041, %v1445
    %v2043 = vmax.f32 %v2042, %v1447
    %v2044 = vmax.f32 %v2043, %v1450
    %v2045 = vmax.f32 %v2044, %v1452
    %v2046 = vmax.f32 %v2045, %v1455
    %v2047 = vmax.f32 %v2046, %v1457
    %v2048 = vrot.slane %v2047, 4
    %v2049 = vmax.f32 %v2047, %v2048
    %v2050 = vrot.slane %v2049, 2
    %v2051 = vmax.f32 %v2049, %v2050
    %v2052 = vrot.slane %v2051, 1
    %v2053 = vmax.f32 %v2051, %v2052
    %v2054 = vmax.f32 %v1598, %v1600
    %v2055 = vmax.f32 %v2054, %v1603
    %v2056 = vmax.f32 %v2055, %v1605
    %v2057 = vmax.f32 %v2056, %v1608
    %v2058 = vmax.f32 %v2057, %v1610
    %v2059 = vmax.f32 %v2058, %v1613
    %v2060 = vmax.f32 %v2059, %v1615
    %v2061 = vmax.f32 %v2060, %v1618
    %v2062 = vmax.f32 %v2061, %v1620
    %v2063 = vmax.f32 %v2062, %v1623
    %v2064 = vmax.f32 %v2063, %v1625
    %v2065 = vmax.f32 %v2064, %v1628
    %v2066 = vmax.f32 %v2065, %v1630
    %v2067 = vmax.f32 %v2066, %v1633
    %v2068 = vmax.f32 %v2067, %v1635
    %v2069 = vrot.slane %v2068, 4
    %v2070 = vmax.f32 %v2068, %v2069
    %v2071 = vrot.slane %v2070, 2
    %v2072 = vmax.f32 %v2070, %v2071
    %v2073 = vrot.slane %v2072, 1
    %v2074 = vmax.f32 %v2072, %v2073
    %v2075 = vmax.f32 %v1776, %v1778
    %v2076 = vmax.f32 %v2075, %v1781
    %v2077 = vmax.f32 %v2076, %v1783
    %v2078 = vmax.f32 %v2077, %v1786
    %v2079 = vmax.f32 %v2078, %v1788
    %v2080 = vmax.f32 %v2079, %v1791
    %v2081 = vmax.f32 %v2080, %v1793
    %v2082 = vmax.f32 %v2081, %v1796
    %v2083 = vmax.f32 %v2082, %v1798
    %v2084 = vmax.f32 %v2083, %v1801
    %v2085 = vmax.f32 %v2084, %v1803
    %v2086 = vmax.f32 %v2085, %v1806
    %v2087 = vmax.f32 %v2086, %v1808
    %v2088 = vmax.f32 %v2087, %v1811
    %v2089 = vmax.f32 %v2088, %v1813
    %v2090 = vrot.slane %v2089, 4
    %v2091 = vmax.f32 %v2089, %v2090
    %v2092 = vrot.slane %v2091, 2
    %v2093 = vmax.f32 %v2091, %v2092
    %v2094 = vrot.slane %v2093, 1
    %v2095 = vmax.f32 %v2093, %v2094
    %v2096 = vmax.f32 %v1954, %v1956
    %v2097 = vmax.f32 %v2096, %v1959
    %v2098 = vmax.f32 %v2097, %v1961
    %v2099 = vmax.f32 %v2098, %v1964
    %v2100 = vmax.f32 %v2099, %v1966
    %v2101 = vmax.f32 %v2100, %v1969
    %v2102 = vmax.f32 %v2101, %v1971
    %v2103 = vmax.f32 %v2102, %v1974
    %v2104 = vmax.f32 %v2103, %v1976
    %v2105 = vmax.f32 %v2104, %v1979
    %v2106 = vmax.f32 %v2105, %v1981
    %v2107 = vmax.f32 %v2106, %v1984
    %v2108 = vmax.f32 %v2107, %v1986
    %v2109 = vmax.f32 %v2108, %v1989
    %v2110 = vmax.f32 %v2109, %v1991
    %v2111 = vrot.slane %v2110, 4
    %v2112 = vmax.f32 %v2110, %v2111
    %v2113 = vrot.slane %v2112, 2
    %v2114 = vmax.f32 %v2112, %v2113
    %v2115 = vrot.slane %v2114, 1
    %v2116 = vmax.f32 %v2114, %v2115
    %v2117 = vmax.f32 %v1460, %v1462
    %v2118 = vmax.f32 %v2117, %v1465
    %v2119 = vmax.f32 %v2118, %v1467
    %v2120 = vmax.f32 %v2119, %v1470
    %v2121 = vmax.f32 %v2120, %v1472
    %v2122 = vmax.f32 %v2121, %v1475
    %v2123 = vmax.f32 %v2122, %v1477
    %v2124 = vmax.f32 %v2123, %v1480
    %v2125 = vmax.f32 %v2124, %v1482
    %v2126 = vmax.f32 %v2125, %v1485
    %v2127 = vmax.f32 %v2126, %v1487
    %v2128 = vmax.f32 %v2127, %v1490
    %v2129 = vmax.f32 %v2128, %v1492
    %v2130 = vmax.f32 %v2129, %v1495
    %v2131 = vmax.f32 %v2130, %v1497
    %v2132 = vrot.slane %v2131, 4
    %v2133 = vmax.f32 %v2131, %v2132
    %v2134 = vrot.slane %v2133, 2
    %v2135 = vmax.f32 %v2133, %v2134
    %v2136 = vrot.slane %v2135, 1
    %v2137 = vmax.f32 %v2135, %v2136
    %v2138 = vmax.f32 %v1638, %v1640
    %v2139 = vmax.f32 %v2138, %v1643
    %v2140 = vmax.f32 %v2139, %v1645
    %v2141 = vmax.f32 %v2140, %v1648
    %v2142 = vmax.f32 %v2141, %v1650
    %v2143 = vmax.f32 %v2142, %v1653
    %v2144 = vmax.f32 %v2143, %v1655
    %v2145 = vmax.f32 %v2144, %v1658
    %v2146 = vmax.f32 %v2145, %v1660
    %v2147 = vmax.f32 %v2146, %v1663
    %v2148 = vmax.f32 %v2147, %v1665
    %v2149 = vmax.f32 %v2148, %v1668
    %v2150 = vmax.f32 %v2149, %v1670
    %v2151 = vmax.f32 %v2150, %v1673
    %v2152 = vmax.f32 %v2151, %v1675
    %v2153 = vrot.slane %v2152, 4
    %v2154 = vmax.f32 %v2152, %v2153
    %v2155 = vrot.slane %v2154, 2
    %v2156 = vmax.f32 %v2154, %v2155
    %v2157 = vrot.slane %v2156, 1
    %v2158 = vmax.f32 %v2156, %v2157
    %v2159 = vmax.f32 %v1816, %v1818
    %v2160 = vmax.f32 %v2159, %v1821
    %v2161 = vmax.f32 %v2160, %v1823
    %v2162 = vmax.f32 %v2161, %v1826
    %v2163 = vmax.f32 %v2162, %v1828
    %v2164 = vmax.f32 %v2163, %v1831
    %v2165 = vmax.f32 %v2164, %v1833
    %v2166 = vmax.f32 %v2165, %v1836
    %v2167 = vmax.f32 %v2166, %v1838
    %v2168 = vmax.f32 %v2167, %v1841
    %v2169 = vmax.f32 %v2168, %v1843
    %v2170 = vmax.f32 %v2169, %v1846
    %v2171 = vmax.f32 %v2170, %v1848
    %v2172 = vmax.f32 %v2171, %v1851
    %v2173 = vmax.f32 %v2172, %v1853
    %v2174 = vrot.slane %v2173, 4
    %v2175 = vmax.f32 %v2173, %v2174
    %v2176 = vrot.slane %v2175, 2
    %v2177 = vmax.f32 %v2175, %v2176
    %v2178 = vrot.slane %v2177, 1
    %v2179 = vmax.f32 %v2177, %v2178
    %v2180 = vmax.f32 %v1994, %v1996
    %v2181 = vmax.f32 %v2180, %v1999
    %v2182 = vmax.f32 %v2181, %v2001
    %v2183 = vmax.f32 %v2182, %v2004
    %v2184 = vmax.f32 %v2183, %v2006
    %v2185 = vmax.f32 %v2184, %v2009
    %v2186 = vmax.f32 %v2185, %v2011
    %v2187 = vmax.f32 %v2186, %v2014
    %v2188 = vmax.f32 %v2187, %v2016
    %v2189 = vmax.f32 %v2188, %v2019
    %v2190 = vmax.f32 %v2189, %v2021
    %v2191 = vmax.f32 %v2190, %v2024
    %v2192 = vmax.f32 %v2191, %v2026
    %v2193 = vmax.f32 %v2192, %v2029
    %v2194 = vmax.f32 %v2193, %v2031
    %v2195 = vrot.slane %v2194, 4
    %v2196 = vmax.f32 %v2194, %v2195
    %v2197 = vrot.slane %v2196, 2
    %v2198 = vmax.f32 %v2196, %v2197
    %v2199 = vrot.slane %v2198, 1
    %v2200 = vmax.f32 %v2198, %v2199
    %v2201 = vld [vmem:[#allocation2] sm:$0xff]
    %v2210 = vrot.slane %v2074, 6
    %v2211 = vrot.slane %v2095, 4
    %v2212 = vrot.slane %v2116, 2
    %v2213 = vrot.slane %v2158, 6
    %v2214 = vrot.slane %v2179, 4
    %v2215 = vrot.slane %v2200, 2
    %vm2216 = vcmask 1041408
    %v2217 = vsel %vm2216, %v2053, %v2210
    %vm2218 = vcmask 1045508
    %v2219 = vsel %vm2218, %v2211, %v2212
    %v2220 = vsel %vm205, %v2217, %v2219
    %v2221 = vsel %vm2216, %v2137, %v2213
    %v2222 = vsel %vm2218, %v2214, %v2215
    %v2223 = vsel %vm205, %v2221, %v2222
    %vm2224 = vcmask 1044484
    %v2225 = vsel %vm2224, %v2220, %v2220
    %vm2226 = vcmask 1046534
    %v2227 = vsel %vm2226, %v2220, %v2225
    %v2228 = vrot.slane %v2223, 7
    %vm2229 = vcmask 1041409
    %v2230 = vsel %vm2229, %v2228, %v2227
    %vm2231 = vcmask 1043459
    %v2232 = vsel %vm2231, %v2228, %v2230
    %vm2233 = vcmask 1045509
    %v2234 = vsel %vm2233, %v2228, %v2232
    %vm2235 = vcmask 1047559
    %v2236 = vsel %vm2235, %v2228, %v2234
    %v2238 = vmax.f32 %v2201, %v2236
    %2239 = vst [vmem:[#allocation2] sm:$0xff] %v2238
    // Predicated region
    $region78: #{_lambda_.1} parent=1 // pred_check
      %p2240 = pneg %p98
    $region79: #{_lambda_.1} parent=1 // pred_check_branch
      %2242 = sbr.rel (%p2240) target = $region81
    $region80: #{_lambda_.1} parent=1 // pred_region
      %v2243 = vld [vmem:[#allocation2] sm:$0xff]
      %2245 = vst [vmem:[#allocation1] ss:$4 sm:$0xff] %v2243
      %v2246 = vld.sshfl [vmem:[#allocation1] sm:$0xff pattern:$0x73625140]
      %v2247 = vld.sshfl [vmem:[#allocation1 + $0x8] sm:$0xff pattern:$0x73625140]
      %v2248 = vld.sshfl [vmem:[#allocation1 + $0x10] sm:$0xff pattern:$0x73625140]
      %v2249 = vld.sshfl [vmem:[#allocation1 + $0x18] sm:$0xff pattern:$0x73625140]
      %v2254 = vpack.c.bf16 %v2246, %v2246
      %v2255 = vpack.c.bf16 %v2247, %v2247
      %v2256 = vpack.c.bf16 %v2248, %v2248
      %v2257 = vpack.c.bf16 %v2249, %v2249
      %v2258 = vld [vmem:[#allocation5] sm:$0xff]
      %v2259 = vld [vmem:[#allocation5 + $0x8] sm:$0xff]
      %v2260 = vld [vmem:[#allocation5 + $0x10] sm:$0xff]
      %v2261 = vld [vmem:[#allocation5 + $0x18] sm:$0xff]
      %v2262 = vld [vmem:[#allocation5 + $0x20] sm:$0xff]
      %v2263 = vld [vmem:[#allocation5 + $0x28] sm:$0xff]
      %v2264 = vld [vmem:[#allocation5 + $0x30] sm:$0xff]
      %v2265 = vld [vmem:[#allocation5 + $0x38] sm:$0xff]
      %v2266 = vld [vmem:[#allocation5 + $0x40] sm:$0xff]
      %v2267 = vld [vmem:[#allocation5 + $0x48] sm:$0xff]
      %v2268 = vld [vmem:[#allocation5 + $0x50] sm:$0xff]
      %v2269 = vld [vmem:[#allocation5 + $0x58] sm:$0xff]
      %v2270 = vld [vmem:[#allocation5 + $0x60] sm:$0xff]
      %v2271 = vld [vmem:[#allocation5 + $0x68] sm:$0xff]
      %v2272 = vld [vmem:[#allocation5 + $0x70] sm:$0xff]
      %v2273 = vld [vmem:[#allocation5 + $0x78] sm:$0xff]
      %v2274 = vld [vmem:[#allocation5 + $0x80] sm:$0xff]
      %v2275 = vld [vmem:[#allocation5 + $0x88] sm:$0xff]
      %v2276 = vld [vmem:[#allocation5 + $0x90] sm:$0xff]
      %v2277 = vld [vmem:[#allocation5 + $0x98] sm:$0xff]
      %v2278 = vld [vmem:[#allocation5 + $0xa0] sm:$0xff]
      %v2279 = vld [vmem:[#allocation5 + $0xa8] sm:$0xff]
      %v2280 = vld [vmem:[#allocation5 + $0xb0] sm:$0xff]
      %v2281 = vld [vmem:[#allocation5 + $0xb8] sm:$0xff]
      %v2282 = vld [vmem:[#allocation5 + $0xc0] sm:$0xff]
      %v2283 = vld [vmem:[#allocation5 + $0xc8] sm:$0xff]
      %v2284 = vld [vmem:[#allocation5 + $0xd0] sm:$0xff]
      %v2285 = vld [vmem:[#allocation5 + $0xd8] sm:$0xff]
      %v2286 = vld [vmem:[#allocation5 + $0xe0] sm:$0xff]
      %v2287 = vld [vmem:[#allocation5 + $0xe8] sm:$0xff]
      %v2288 = vld [vmem:[#allocation5 + $0xf0] sm:$0xff]
      %v2289 = vld [vmem:[#allocation5 + $0xf8] sm:$0xff]
      %v2290 = vld [vmem:[#allocation5 + $0x100] sm:$0xff]
      %v2291 = vld [vmem:[#allocation5 + $0x108] sm:$0xff]
      %v2292 = vld [vmem:[#allocation5 + $0x110] sm:$0xff]
      %v2293 = vld [vmem:[#allocation5 + $0x118] sm:$0xff]
      %v2294 = vld [vmem:[#allocation5 + $0x120] sm:$0xff]
      %v2295 = vld [vmem:[#allocation5 + $0x128] sm:$0xff]
      %v2296 = vld [vmem:[#allocation5 + $0x130] sm:$0xff]
      %v2297 = vld [vmem:[#allocation5 + $0x138] sm:$0xff]
      %v2298 = vld [vmem:[#allocation5 + $0x140] sm:$0xff]
      %v2299 = vld [vmem:[#allocation5 + $0x148] sm:$0xff]
      %v2300 = vld [vmem:[#allocation5 + $0x150] sm:$0xff]
      %v2301 = vld [vmem:[#allocation5 + $0x158] sm:$0xff]
      %v2302 = vld [vmem:[#allocation5 + $0x160] sm:$0xff]
      %v2303 = vld [vmem:[#allocation5 + $0x168] sm:$0xff]
      %v2304 = vld [vmem:[#allocation5 + $0x170] sm:$0xff]
      %v2305 = vld [vmem:[#allocation5 + $0x178] sm:$0xff]
      %v2306 = vld [vmem:[#allocation5 + $0x180] sm:$0xff]
      %v2307 = vld [vmem:[#allocation5 + $0x188] sm:$0xff]
      %v2308 = vld [vmem:[#allocation5 + $0x190] sm:$0xff]
      %v2309 = vld [vmem:[#allocation5 + $0x198] sm:$0xff]
      %v2310 = vld [vmem:[#allocation5 + $0x1a0] sm:$0xff]
      %v2311 = vld [vmem:[#allocation5 + $0x1a8] sm:$0xff]
      %v2312 = vld [vmem:[#allocation5 + $0x1b0] sm:$0xff]
      %v2313 = vld [vmem:[#allocation5 + $0x1b8] sm:$0xff]
      %v2314 = vld [vmem:[#allocation5 + $0x1c0] sm:$0xff]
      %v2315 = vld [vmem:[#allocation5 + $0x1c8] sm:$0xff]
      %v2316 = vld [vmem:[#allocation5 + $0x1d0] sm:$0xff]
      %v2317 = vld [vmem:[#allocation5 + $0x1d8] sm:$0xff]
      %v2318 = vld [vmem:[#allocation5 + $0x1e0] sm:$0xff]
      %v2319 = vld [vmem:[#allocation5 + $0x1e8] sm:$0xff]
      %v2320 = vld [vmem:[#allocation5 + $0x1f0] sm:$0xff]
      %v2321 = vld [vmem:[#allocation5 + $0x1f8] sm:$0xff]
      %v2322 = vld [vmem:[#allocation5 + $0x200] sm:$0xff]
      %v2323 = vld [vmem:[#allocation5 + $0x208] sm:$0xff]
      %v2324 = vld [vmem:[#allocation5 + $0x210] sm:$0xff]
      %v2325 = vld [vmem:[#allocation5 + $0x218] sm:$0xff]
      %v2326 = vld [vmem:[#allocation5 + $0x220] sm:$0xff]
      %v2327 = vld [vmem:[#allocation5 + $0x228] sm:$0xff]
      %v2328 = vld [vmem:[#allocation5 + $0x230] sm:$0xff]
      %v2329 = vld [vmem:[#allocation5 + $0x238] sm:$0xff]
      %v2330 = vld [vmem:[#allocation5 + $0x240] sm:$0xff]
      %v2331 = vld [vmem:[#allocation5 + $0x248] sm:$0xff]
      %v2332 = vld [vmem:[#allocation5 + $0x250] sm:$0xff]
      %v2333 = vld [vmem:[#allocation5 + $0x258] sm:$0xff]
      %v2334 = vld [vmem:[#allocation5 + $0x260] sm:$0xff]
      %v2335 = vld [vmem:[#allocation5 + $0x268] sm:$0xff]
      %v2336 = vld [vmem:[#allocation5 + $0x270] sm:$0xff]
      %v2337 = vld [vmem:[#allocation5 + $0x278] sm:$0xff]
      %v2338 = vld [vmem:[#allocation5 + $0x280] sm:$0xff]
      %v2339 = vld [vmem:[#allocation5 + $0x288] sm:$0xff]
      %v2340 = vld [vmem:[#allocation5 + $0x290] sm:$0xff]
      %v2341 = vld [vmem:[#allocation5 + $0x298] sm:$0xff]
      %v2342 = vld [vmem:[#allocation5 + $0x2a0] sm:$0xff]
      %v2343 = vld [vmem:[#allocation5 + $0x2a8] sm:$0xff]
      %v2344 = vld [vmem:[#allocation5 + $0x2b0] sm:$0xff]
      %v2345 = vld [vmem:[#allocation5 + $0x2b8] sm:$0xff]
      %v2346 = vld [vmem:[#allocation5 + $0x2c0] sm:$0xff]
      %v2347 = vld [vmem:[#allocation5 + $0x2c8] sm:$0xff]
      %v2348 = vld [vmem:[#allocation5 + $0x2d0] sm:$0xff]
      %v2349 = vld [vmem:[#allocation5 + $0x2d8] sm:$0xff]
      %v2350 = vld [vmem:[#allocation5 + $0x2e0] sm:$0xff]
      %v2351 = vld [vmem:[#allocation5 + $0x2e8] sm:$0xff]
      %v2352 = vld [vmem:[#allocation5 + $0x2f0] sm:$0xff]
      %v2353 = vld [vmem:[#allocation5 + $0x2f8] sm:$0xff]
      %v2354 = vld [vmem:[#allocation5 + $0x300] sm:$0xff]
      %v2355 = vld [vmem:[#allocation5 + $0x308] sm:$0xff]
      %v2356 = vld [vmem:[#allocation5 + $0x310] sm:$0xff]
      %v2357 = vld [vmem:[#allocation5 + $0x318] sm:$0xff]
      %v2358 = vld [vmem:[#allocation5 + $0x320] sm:$0xff]
      %v2359 = vld [vmem:[#allocation5 + $0x328] sm:$0xff]
      %v2360 = vld [vmem:[#allocation5 + $0x330] sm:$0xff]
      %v2361 = vld [vmem:[#allocation5 + $0x338] sm:$0xff]
      %v2362 = vld [vmem:[#allocation5 + $0x340] sm:$0xff]
      %v2363 = vld [vmem:[#allocation5 + $0x348] sm:$0xff]
      %v2364 = vld [vmem:[#allocation5 + $0x350] sm:$0xff]
      %v2365 = vld [vmem:[#allocation5 + $0x358] sm:$0xff]
      %v2366 = vld [vmem:[#allocation5 + $0x360] sm:$0xff]
      %v2367 = vld [vmem:[#allocation5 + $0x368] sm:$0xff]
      %v2368 = vld [vmem:[#allocation5 + $0x370] sm:$0xff]
      %v2369 = vld [vmem:[#allocation5 + $0x378] sm:$0xff]
      %v2370 = vld [vmem:[#allocation5 + $0x380] sm:$0xff]
      %v2371 = vld [vmem:[#allocation5 + $0x388] sm:$0xff]
      %v2372 = vld [vmem:[#allocation5 + $0x390] sm:$0xff]
      %v2373 = vld [vmem:[#allocation5 + $0x398] sm:$0xff]
      %v2374 = vld [vmem:[#allocation5 + $0x3a0] sm:$0xff]
      %v2375 = vld [vmem:[#allocation5 + $0x3a8] sm:$0xff]
      %v2376 = vld [vmem:[#allocation5 + $0x3b0] sm:$0xff]
      %v2377 = vld [vmem:[#allocation5 + $0x3b8] sm:$0xff]
      %v2378 = vld [vmem:[#allocation5 + $0x3c0] sm:$0xff]
      %v2379 = vld [vmem:[#allocation5 + $0x3c8] sm:$0xff]
      %v2380 = vld [vmem:[#allocation5 + $0x3d0] sm:$0xff]
      %v2381 = vld [vmem:[#allocation5 + $0x3d8] sm:$0xff]
      %v2382 = vld [vmem:[#allocation5 + $0x3e0] sm:$0xff]
      %v2383 = vld [vmem:[#allocation5 + $0x3e8] sm:$0xff]
      %v2384 = vld [vmem:[#allocation5 + $0x3f0] sm:$0xff]
      %v2385 = vld [vmem:[#allocation5 + $0x3f8] sm:$0xff]
      %v2386 = vld [vmem:[%s10] sm:$0xf]
      %v2388 = vperm.slane %v2386, 0
      %v2389 = vperm.slane %v2386, 1
      %v2390 = vperm.slane %v2386, 2
      %v2391 = vperm.slane %v2386, 3
      %v2524 = vunpack.c.l.b16 %v2258
      %v2525 = vunpack.c.h.b16 %v2258
      %v2526 = vunpack.c.l.b16 %v2259
      %v2527 = vunpack.c.h.b16 %v2259
      %v2528 = vunpack.c.l.b16 %v2260
      %v2529 = vunpack.c.h.b16 %v2260
      %v2530 = vunpack.c.l.b16 %v2261
      %v2531 = vunpack.c.h.b16 %v2261
      %v2532 = vunpack.c.l.b16 %v2262
      %v2533 = vunpack.c.h.b16 %v2262
      %v2534 = vunpack.c.l.b16 %v2263
      %v2535 = vunpack.c.h.b16 %v2263
      %v2536 = vunpack.c.l.b16 %v2264
      %v2537 = vunpack.c.h.b16 %v2264
      %v2538 = vunpack.c.l.b16 %v2265
      %v2539 = vunpack.c.h.b16 %v2265
      %v2540 = vunpack.c.l.b16 %v2266
      %v2541 = vunpack.c.h.b16 %v2266
      %v2542 = vunpack.c.l.b16 %v2267
      %v2543 = vunpack.c.h.b16 %v2267
      %v2544 = vunpack.c.l.b16 %v2268
      %v2545 = vunpack.c.h.b16 %v2268
      %v2546 = vunpack.c.l.b16 %v2269
      %v2547 = vunpack.c.h.b16 %v2269
      %v2548 = vunpack.c.l.b16 %v2270
      %v2549 = vunpack.c.h.b16 %v2270
      %v2550 = vunpack.c.l.b16 %v2271
      %v2551 = vunpack.c.h.b16 %v2271
      %v2552 = vunpack.c.l.b16 %v2272
      %v2553 = vunpack.c.h.b16 %v2272
      %v2554 = vunpack.c.l.b16 %v2273
      %v2555 = vunpack.c.h.b16 %v2273
      %v2556 = vunpack.c.l.b16 %v2274
      %v2557 = vunpack.c.h.b16 %v2274
      %v2558 = vunpack.c.l.b16 %v2275
      %v2559 = vunpack.c.h.b16 %v2275
      %v2560 = vunpack.c.l.b16 %v2276
      %v2561 = vunpack.c.h.b16 %v2276
      %v2562 = vunpack.c.l.b16 %v2277
      %v2563 = vunpack.c.h.b16 %v2277
      %v2564 = vunpack.c.l.b16 %v2278
      %v2565 = vunpack.c.h.b16 %v2278
      %v2566 = vunpack.c.l.b16 %v2279
      %v2567 = vunpack.c.h.b16 %v2279
      %v2568 = vunpack.c.l.b16 %v2280
      %v2569 = vunpack.c.h.b16 %v2280
      %v2570 = vunpack.c.l.b16 %v2281
      %v2571 = vunpack.c.h.b16 %v2281
      %v2572 = vunpack.c.l.b16 %v2282
      %v2573 = vunpack.c.h.b16 %v2282
      %v2574 = vunpack.c.l.b16 %v2283
      %v2575 = vunpack.c.h.b16 %v2283
      %v2576 = vunpack.c.l.b16 %v2284
      %v2577 = vunpack.c.h.b16 %v2284
      %v2578 = vunpack.c.l.b16 %v2285
      %v2579 = vunpack.c.h.b16 %v2285
      %v2580 = vunpack.c.l.b16 %v2286
      %v2581 = vunpack.c.h.b16 %v2286
      %v2582 = vunpack.c.l.b16 %v2287
      %v2583 = vunpack.c.h.b16 %v2287
      %v2584 = vunpack.c.l.b16 %v2288
      %v2585 = vunpack.c.h.b16 %v2288
      %v2586 = vunpack.c.l.b16 %v2289
      %v2587 = vunpack.c.h.b16 %v2289
      %v2588 = vunpack.c.l.b16 %v2290
      %v2589 = vunpack.c.h.b16 %v2290
      %v2590 = vunpack.c.l.b16 %v2291
      %v2591 = vunpack.c.h.b16 %v2291
      %v2592 = vunpack.c.l.b16 %v2292
      %v2593 = vunpack.c.h.b16 %v2292
      %v2594 = vunpack.c.l.b16 %v2293
      %v2595 = vunpack.c.h.b16 %v2293
      %v2596 = vunpack.c.l.b16 %v2294
      %v2597 = vunpack.c.h.b16 %v2294
      %v2598 = vunpack.c.l.b16 %v2295
      %v2599 = vunpack.c.h.b16 %v2295
      %v2600 = vunpack.c.l.b16 %v2296
      %v2601 = vunpack.c.h.b16 %v2296
      %v2602 = vunpack.c.l.b16 %v2297
      %v2603 = vunpack.c.h.b16 %v2297
      %v2604 = vunpack.c.l.b16 %v2298
      %v2605 = vunpack.c.h.b16 %v2298
      %v2606 = vunpack.c.l.b16 %v2299
      %v2607 = vunpack.c.h.b16 %v2299
      %v2608 = vunpack.c.l.b16 %v2300
      %v2609 = vunpack.c.h.b16 %v2300
      %v2610 = vunpack.c.l.b16 %v2301
      %v2611 = vunpack.c.h.b16 %v2301
      %v2612 = vunpack.c.l.b16 %v2302
      %v2613 = vunpack.c.h.b16 %v2302
      %v2614 = vunpack.c.l.b16 %v2303
      %v2615 = vunpack.c.h.b16 %v2303
      %v2616 = vunpack.c.l.b16 %v2304
      %v2617 = vunpack.c.h.b16 %v2304
      %v2618 = vunpack.c.l.b16 %v2305
      %v2619 = vunpack.c.h.b16 %v2305
      %v2620 = vunpack.c.l.b16 %v2306
      %v2621 = vunpack.c.h.b16 %v2306
      %v2622 = vunpack.c.l.b16 %v2307
      %v2623 = vunpack.c.h.b16 %v2307
      %v2624 = vunpack.c.l.b16 %v2308
      %v2625 = vunpack.c.h.b16 %v2308
      %v2626 = vunpack.c.l.b16 %v2309
      %v2627 = vunpack.c.h.b16 %v2309
      %v2628 = vunpack.c.l.b16 %v2310
      %v2629 = vunpack.c.h.b16 %v2310
      %v2630 = vunpack.c.l.b16 %v2311
      %v2631 = vunpack.c.h.b16 %v2311
      %v2632 = vunpack.c.l.b16 %v2312
      %v2633 = vunpack.c.h.b16 %v2312
      %v2634 = vunpack.c.l.b16 %v2313
      %v2635 = vunpack.c.h.b16 %v2313
      %v2636 = vunpack.c.l.b16 %v2314
      %v2637 = vunpack.c.h.b16 %v2314
      %v2638 = vunpack.c.l.b16 %v2315
      %v2639 = vunpack.c.h.b16 %v2315
      %v2640 = vunpack.c.l.b16 %v2316
      %v2641 = vunpack.c.h.b16 %v2316
      %v2642 = vunpack.c.l.b16 %v2317
      %v2643 = vunpack.c.h.b16 %v2317
      %v2644 = vunpack.c.l.b16 %v2318
      %v2645 = vunpack.c.h.b16 %v2318
      %v2646 = vunpack.c.l.b16 %v2319
      %v2647 = vunpack.c.h.b16 %v2319
      %v2648 = vunpack.c.l.b16 %v2320
      %v2649 = vunpack.c.h.b16 %v2320
      %v2650 = vunpack.c.l.b16 %v2321
      %v2651 = vunpack.c.h.b16 %v2321
      %v2652 = vunpack.c.l.b16 %v2322
      %v2653 = vunpack.c.h.b16 %v2322
      %v2654 = vunpack.c.l.b16 %v2323
      %v2655 = vunpack.c.h.b16 %v2323
      %v2656 = vunpack.c.l.b16 %v2324
      %v2657 = vunpack.c.h.b16 %v2324
      %v2658 = vunpack.c.l.b16 %v2325
      %v2659 = vunpack.c.h.b16 %v2325
      %v2660 = vunpack.c.l.b16 %v2326
      %v2661 = vunpack.c.h.b16 %v2326
      %v2662 = vunpack.c.l.b16 %v2327
      %v2663 = vunpack.c.h.b16 %v2327
      %v2664 = vunpack.c.l.b16 %v2328
      %v2665 = vunpack.c.h.b16 %v2328
      %v2666 = vunpack.c.l.b16 %v2329
      %v2667 = vunpack.c.h.b16 %v2329
      %v2668 = vunpack.c.l.b16 %v2330
      %v2669 = vunpack.c.h.b16 %v2330
      %v2670 = vunpack.c.l.b16 %v2331
      %v2671 = vunpack.c.h.b16 %v2331
      %v2672 = vunpack.c.l.b16 %v2332
      %v2673 = vunpack.c.h.b16 %v2332
      %v2674 = vunpack.c.l.b16 %v2333
      %v2675 = vunpack.c.h.b16 %v2333
      %v2676 = vunpack.c.l.b16 %v2334
      %v2677 = vunpack.c.h.b16 %v2334
      %v2678 = vunpack.c.l.b16 %v2335
      %v2679 = vunpack.c.h.b16 %v2335
      %v2680 = vunpack.c.l.b16 %v2336
      %v2681 = vunpack.c.h.b16 %v2336
      %v2682 = vunpack.c.l.b16 %v2337
      %v2683 = vunpack.c.h.b16 %v2337
      %v2684 = vunpack.c.l.b16 %v2338
      %v2685 = vunpack.c.h.b16 %v2338
      %v2686 = vunpack.c.l.b16 %v2339
      %v2687 = vunpack.c.h.b16 %v2339
      %v2688 = vunpack.c.l.b16 %v2340
      %v2689 = vunpack.c.h.b16 %v2340
      %v2690 = vunpack.c.l.b16 %v2341
      %v2691 = vunpack.c.h.b16 %v2341
      %v2692 = vunpack.c.l.b16 %v2342
      %v2693 = vunpack.c.h.b16 %v2342
      %v2694 = vunpack.c.l.b16 %v2343
      %v2695 = vunpack.c.h.b16 %v2343
      %v2696 = vunpack.c.l.b16 %v2344
      %v2697 = vunpack.c.h.b16 %v2344
      %v2698 = vunpack.c.l.b16 %v2345
      %v2699 = vunpack.c.h.b16 %v2345
      %v2700 = vunpack.c.l.b16 %v2346
      %v2701 = vunpack.c.h.b16 %v2346
      %v2702 = vunpack.c.l.b16 %v2347
      %v2703 = vunpack.c.h.b16 %v2347
      %v2704 = vunpack.c.l.b16 %v2348
      %v2705 = vunpack.c.h.b16 %v2348
      %v2706 = vunpack.c.l.b16 %v2349
      %v2707 = vunpack.c.h.b16 %v2349
      %v2708 = vunpack.c.l.b16 %v2350
      %v2709 = vunpack.c.h.b16 %v2350
      %v2710 = vunpack.c.l.b16 %v2351
      %v2711 = vunpack.c.h.b16 %v2351
      %v2712 = vunpack.c.l.b16 %v2352
      %v2713 = vunpack.c.h.b16 %v2352
      %v2714 = vunpack.c.l.b16 %v2353
      %v2715 = vunpack.c.h.b16 %v2353
      %v2716 = vunpack.c.l.b16 %v2354
      %v2717 = vunpack.c.h.b16 %v2354
      %v2718 = vunpack.c.l.b16 %v2355
      %v2719 = vunpack.c.h.b16 %v2355
      %v2720 = vunpack.c.l.b16 %v2356
      %v2721 = vunpack.c.h.b16 %v2356
      %v2722 = vunpack.c.l.b16 %v2357
      %v2723 = vunpack.c.h.b16 %v2357
      %v2724 = vunpack.c.l.b16 %v2358
      %v2725 = vunpack.c.h.b16 %v2358
      %v2726 = vunpack.c.l.b16 %v2359
      %v2727 = vunpack.c.h.b16 %v2359
      %v2728 = vunpack.c.l.b16 %v2360
      %v2729 = vunpack.c.h.b16 %v2360
      %v2730 = vunpack.c.l.b16 %v2361
      %v2731 = vunpack.c.h.b16 %v2361
      %v2732 = vunpack.c.l.b16 %v2362
      %v2733 = vunpack.c.h.b16 %v2362
      %v2734 = vunpack.c.l.b16 %v2363
      %v2735 = vunpack.c.h.b16 %v2363
      %v2736 = vunpack.c.l.b16 %v2364
      %v2737 = vunpack.c.h.b16 %v2364
      %v2738 = vunpack.c.l.b16 %v2365
      %v2739 = vunpack.c.h.b16 %v2365
      %v2740 = vunpack.c.l.b16 %v2366
      %v2741 = vunpack.c.h.b16 %v2366
      %v2742 = vunpack.c.l.b16 %v2367
      %v2743 = vunpack.c.h.b16 %v2367
      %v2744 = vunpack.c.l.b16 %v2368
      %v2745 = vunpack.c.h.b16 %v2368
      %v2746 = vunpack.c.l.b16 %v2369
      %v2747 = vunpack.c.h.b16 %v2369
      %v2748 = vunpack.c.l.b16 %v2370
      %v2749 = vunpack.c.h.b16 %v2370
      %v2750 = vunpack.c.l.b16 %v2371
      %v2751 = vunpack.c.h.b16 %v2371
      %v2752 = vunpack.c.l.b16 %v2372
      %v2753 = vunpack.c.h.b16 %v2372
      %v2754 = vunpack.c.l.b16 %v2373
      %v2755 = vunpack.c.h.b16 %v2373
      %v2756 = vunpack.c.l.b16 %v2374
      %v2757 = vunpack.c.h.b16 %v2374
      %v2758 = vunpack.c.l.b16 %v2375
      %v2759 = vunpack.c.h.b16 %v2375
      %v2760 = vunpack.c.l.b16 %v2376
      %v2761 = vunpack.c.h.b16 %v2376
      %v2762 = vunpack.c.l.b16 %v2377
      %v2763 = vunpack.c.h.b16 %v2377
      %v2764 = vunpack.c.l.b16 %v2378
      %v2765 = vunpack.c.h.b16 %v2378
      %v2766 = vunpack.c.l.b16 %v2379
      %v2767 = vunpack.c.h.b16 %v2379
      %v2768 = vunpack.c.l.b16 %v2380
      %v2769 = vunpack.c.h.b16 %v2380
      %v2770 = vunpack.c.l.b16 %v2381
      %v2771 = vunpack.c.h.b16 %v2381
      %v2772 = vunpack.c.l.b16 %v2382
      %v2773 = vunpack.c.h.b16 %v2382
      %v2774 = vunpack.c.l.b16 %v2383
      %v2775 = vunpack.c.h.b16 %v2383
      %v2776 = vunpack.c.l.b16 %v2384
      %v2777 = vunpack.c.h.b16 %v2384
      %v2778 = vunpack.c.l.b16 %v2385
      %v2779 = vunpack.c.h.b16 %v2385
      %v2780 = vpack.c.b16 %v2528, %v2524
      %v2781 = vpack.c.b16 %v2529, %v2525
      %v2782 = vpack.c.b16 %v2530, %v2526
      %v2783 = vpack.c.b16 %v2531, %v2527
      %v2784 = vpack.c.b16 %v2536, %v2532
      %v2785 = vpack.c.b16 %v2537, %v2533
      %v2786 = vpack.c.b16 %v2538, %v2534
      %v2787 = vpack.c.b16 %v2539, %v2535
      %v2788 = vpack.c.b16 %v2544, %v2540
      %v2789 = vpack.c.b16 %v2545, %v2541
      %v2790 = vpack.c.b16 %v2546, %v2542
      %v2791 = vpack.c.b16 %v2547, %v2543
      %v2792 = vpack.c.b16 %v2552, %v2548
      %v2793 = vpack.c.b16 %v2553, %v2549
      %v2794 = vpack.c.b16 %v2554, %v2550
      %v2795 = vpack.c.b16 %v2555, %v2551
      %v2796 = vpack.c.b16 %v2560, %v2556
      %v2797 = vpack.c.b16 %v2561, %v2557
      %v2798 = vpack.c.b16 %v2562, %v2558
      %v2799 = vpack.c.b16 %v2563, %v2559
      %v2800 = vpack.c.b16 %v2568, %v2564
      %v2801 = vpack.c.b16 %v2569, %v2565
      %v2802 = vpack.c.b16 %v2570, %v2566
      %v2803 = vpack.c.b16 %v2571, %v2567
      %v2804 = vpack.c.b16 %v2576, %v2572
      %v2805 = vpack.c.b16 %v2577, %v2573
      %v2806 = vpack.c.b16 %v2578, %v2574
      %v2807 = vpack.c.b16 %v2579, %v2575
      %v2808 = vpack.c.b16 %v2584, %v2580
      %v2809 = vpack.c.b16 %v2585, %v2581
      %v2810 = vpack.c.b16 %v2586, %v2582
      %v2811 = vpack.c.b16 %v2587, %v2583
      %v2812 = vpack.c.b16 %v2592, %v2588
      %v2813 = vpack.c.b16 %v2593, %v2589
      %v2814 = vpack.c.b16 %v2594, %v2590
      %v2815 = vpack.c.b16 %v2595, %v2591
      %v2816 = vpack.c.b16 %v2600, %v2596
      %v2817 = vpack.c.b16 %v2601, %v2597
      %v2818 = vpack.c.b16 %v2602, %v2598
      %v2819 = vpack.c.b16 %v2603, %v2599
      %v2820 = vpack.c.b16 %v2608, %v2604
      %v2821 = vpack.c.b16 %v2609, %v2605
      %v2822 = vpack.c.b16 %v2610, %v2606
      %v2823 = vpack.c.b16 %v2611, %v2607
      %v2824 = vpack.c.b16 %v2616, %v2612
      %v2825 = vpack.c.b16 %v2617, %v2613
      %v2826 = vpack.c.b16 %v2618, %v2614
      %v2827 = vpack.c.b16 %v2619, %v2615
      %v2828 = vpack.c.b16 %v2624, %v2620
      %v2829 = vpack.c.b16 %v2625, %v2621
      %v2830 = vpack.c.b16 %v2626, %v2622
      %v2831 = vpack.c.b16 %v2627, %v2623
      %v2832 = vpack.c.b16 %v2632, %v2628
      %v2833 = vpack.c.b16 %v2633, %v2629
      %v2834 = vpack.c.b16 %v2634, %v2630
      %v2835 = vpack.c.b16 %v2635, %v2631
      %v2836 = vpack.c.b16 %v2640, %v2636
      %v2837 = vpack.c.b16 %v2641, %v2637
      %v2838 = vpack.c.b16 %v2642, %v2638
      %v2839 = vpack.c.b16 %v2643, %v2639
      %v2840 = vpack.c.b16 %v2648, %v2644
      %v2841 = vpack.c.b16 %v2649, %v2645
      %v2842 = vpack.c.b16 %v2650, %v2646
      %v2843 = vpack.c.b16 %v2651, %v2647
      %v2844 = vpack.c.b16 %v2656, %v2652
      %v2845 = vpack.c.b16 %v2657, %v2653
      %v2846 = vpack.c.b16 %v2658, %v2654
      %v2847 = vpack.c.b16 %v2659, %v2655
      %v2848 = vpack.c.b16 %v2664, %v2660
      %v2849 = vpack.c.b16 %v2665, %v2661
      %v2850 = vpack.c.b16 %v2666, %v2662
      %v2851 = vpack.c.b16 %v2667, %v2663
      %v2852 = vpack.c.b16 %v2672, %v2668
      %v2853 = vpack.c.b16 %v2673, %v2669
      %v2854 = vpack.c.b16 %v2674, %v2670
      %v2855 = vpack.c.b16 %v2675, %v2671
      %v2856 = vpack.c.b16 %v2680, %v2676
      %v2857 = vpack.c.b16 %v2681, %v2677
      %v2858 = vpack.c.b16 %v2682, %v2678
      %v2859 = vpack.c.b16 %v2683, %v2679
      %v2860 = vpack.c.b16 %v2688, %v2684
      %v2861 = vpack.c.b16 %v2689, %v2685
      %v2862 = vpack.c.b16 %v2690, %v2686
      %v2863 = vpack.c.b16 %v2691, %v2687
      %v2864 = vpack.c.b16 %v2696, %v2692
      %v2865 = vpack.c.b16 %v2697, %v2693
      %v2866 = vpack.c.b16 %v2698, %v2694
      %v2867 = vpack.c.b16 %v2699, %v2695
      %v2868 = vpack.c.b16 %v2704, %v2700
      %v2869 = vpack.c.b16 %v2705, %v2701
      %v2870 = vpack.c.b16 %v2706, %v2702
      %v2871 = vpack.c.b16 %v2707, %v2703
      %v2872 = vpack.c.b16 %v2712, %v2708
      %v2873 = vpack.c.b16 %v2713, %v2709
      %v2874 = vpack.c.b16 %v2714, %v2710
      %v2875 = vpack.c.b16 %v2715, %v2711
      %v2876 = vpack.c.b16 %v2720, %v2716
      %v2877 = vpack.c.b16 %v2721, %v2717
      %v2878 = vpack.c.b16 %v2722, %v2718
      %v2879 = vpack.c.b16 %v2723, %v2719
      %v2880 = vpack.c.b16 %v2728, %v2724
      %v2881 = vpack.c.b16 %v2729, %v2725
      %v2882 = vpack.c.b16 %v2730, %v2726
      %v2883 = vpack.c.b16 %v2731, %v2727
      %v2884 = vpack.c.b16 %v2736, %v2732
      %v2885 = vpack.c.b16 %v2737, %v2733
      %v2886 = vpack.c.b16 %v2738, %v2734
      %v2887 = vpack.c.b16 %v2739, %v2735
      %v2888 = vpack.c.b16 %v2744, %v2740
      %v2889 = vpack.c.b16 %v2745, %v2741
      %v2890 = vpack.c.b16 %v2746, %v2742
      %v2891 = vpack.c.b16 %v2747, %v2743
      %v2892 = vpack.c.b16 %v2752, %v2748
      %v2893 = vpack.c.b16 %v2753, %v2749
      %v2894 = vpack.c.b16 %v2754, %v2750
      %v2895 = vpack.c.b16 %v2755, %v2751
      %v2896 = vpack.c.b16 %v2760, %v2756
      %v2897 = vpack.c.b16 %v2761, %v2757
      %v2898 = vpack.c.b16 %v2762, %v2758
      %v2899 = vpack.c.b16 %v2763, %v2759
      %v2900 = vpack.c.b16 %v2768, %v2764
      %v2901 = vpack.c.b16 %v2769, %v2765
      %v2902 = vpack.c.b16 %v2770, %v2766
      %v2903 = vpack.c.b16 %v2771, %v2767
      %v2904 = vpack.c.b16 %v2776, %v2772
      %v2905 = vpack.c.b16 %v2777, %v2773
      %v2906 = vpack.c.b16 %v2778, %v2774
      %v2907 = vpack.c.b16 %v2779, %v2775
      %3036 = vmatpush.bf16.msra.mxu0 %v2808
      %3037 = vmatpush.bf16.msra.mxu0 %v2804
      %3038 = vmatpush.bf16.msra.mxu0 %v2800
      %3039 = vmatpush.bf16.msra.mxu0 %v2796
      %3040 = vmatpush.bf16.msra.mxu0 %v2792
      %3041 = vmatpush.bf16.msra.mxu0 %v2788
      %3042 = vmatpush.bf16.msra.mxu0 %v2784
      %3043 = vmatpush.bf16.msra.mxu0 %v2780
      %3044 = vmatmul.bf16.gmra.mxu0 %v2254
      %v3045 = vpop.f32.mrf.mxu0
      %v3046 = vadd.f32 %v2388, %v3045
      %v3047 = vpop.f32.mrf.mxu0
      %3048 = vdwg.mxu0
      %3049 = vmatpush.bf16.msra.mxu0 %v2840
      %3050 = vmatpush.bf16.msra.mxu0 %v2836
      %3051 = vmatpush.bf16.msra.mxu0 %v2832
      %3052 = vmatpush.bf16.msra.mxu0 %v2828
      %3053 = vmatpush.bf16.msra.mxu0 %v2824
      %3054 = vmatpush.bf16.msra.mxu0 %v2820
      %3055 = vmatpush.bf16.msra.mxu0 %v2816
      %3056 = vmatpush.bf16.msra.mxu0 %v2812
      %3057 = vmatmul.bf16.gmra.mxu0 %v2255
      %v3058 = vpop.f32.mrf.mxu0
      %v3059 = vadd.f32 %v3046, %v3058
      %v3060 = vpop.f32.mrf.mxu0
      %3061 = vdwg.mxu0
      %3062 = vmatpush.bf16.msra.mxu0 %v2872
      %3063 = vmatpush.bf16.msra.mxu0 %v2868
      %3064 = vmatpush.bf16.msra.mxu0 %v2864
      %3065 = vmatpush.bf16.msra.mxu0 %v2860
      %3066 = vmatpush.bf16.msra.mxu0 %v2856
      %3067 = vmatpush.bf16.msra.mxu0 %v2852
      %3068 = vmatpush.bf16.msra.mxu0 %v2848
      %3069 = vmatpush.bf16.msra.mxu0 %v2844
      %3070 = vmatmul.bf16.gmra.mxu0 %v2256
      %v3071 = vpop.f32.mrf.mxu0
      %v3072 = vadd.f32 %v3059, %v3071
      %v3073 = vpop.f32.mrf.mxu0
      %3074 = vdwg.mxu0
      %3075 = vmatpush.bf16.msra.mxu0 %v2904
      %3076 = vmatpush.bf16.msra.mxu0 %v2900
      %3077 = vmatpush.bf16.msra.mxu0 %v2896
      %3078 = vmatpush.bf16.msra.mxu0 %v2892
      %3079 = vmatpush.bf16.msra.mxu0 %v2888
      %3080 = vmatpush.bf16.msra.mxu0 %v2884
      %3081 = vmatpush.bf16.msra.mxu0 %v2880
      %3082 = vmatpush.bf16.msra.mxu0 %v2876
      %3083 = vmatmul.bf16.gmra.mxu0 %v2257
      %v3084 = vpop.f32.mrf.mxu0
      %v3085 = vadd.f32 %v3072, %v3084
      %v3086 = vpop.f32.mrf.mxu0
      %3087 = vdwg.mxu0
      %3088 = vmatpush.bf16.msra.mxu0 %v2809
      %3089 = vmatpush.bf16.msra.mxu0 %v2805
      %3090 = vmatpush.bf16.msra.mxu0 %v2801
      %3091 = vmatpush.bf16.msra.mxu0 %v2797
      %3092 = vmatpush.bf16.msra.mxu0 %v2793
      %3093 = vmatpush.bf16.msra.mxu0 %v2789
      %3094 = vmatpush.bf16.msra.mxu0 %v2785
      %3095 = vmatpush.bf16.msra.mxu0 %v2781
      %3096 = vmatmul.bf16.gmra.mxu0 %v2254
      %v3097 = vpop.f32.mrf.mxu0
      %v3098 = vadd.f32 %v2389, %v3097
      %v3099 = vpop.f32.mrf.mxu0
      %3100 = vdwg.mxu0
      %3101 = vmatpush.bf16.msra.mxu0 %v2841
      %3102 = vmatpush.bf16.msra.mxu0 %v2837
      %3103 = vmatpush.bf16.msra.mxu0 %v2833
      %3104 = vmatpush.bf16.msra.mxu0 %v2829
      %3105 = vmatpush.bf16.msra.mxu0 %v2825
      %3106 = vmatpush.bf16.msra.mxu0 %v2821
      %3107 = vmatpush.bf16.msra.mxu0 %v2817
      %3108 = vmatpush.bf16.msra.mxu0 %v2813
      %3109 = vmatmul.bf16.gmra.mxu0 %v2255
      %v3110 = vpop.f32.mrf.mxu0
      %v3111 = vadd.f32 %v3098, %v3110
      %v3112 = vpop.f32.mrf.mxu0
      %3113 = vdwg.mxu0
      %3114 = vmatpush.bf16.msra.mxu0 %v2873
      %3115 = vmatpush.bf16.msra.mxu0 %v2869
      %3116 = vmatpush.bf16.msra.mxu0 %v2865
      %3117 = vmatpush.bf16.msra.mxu0 %v2861
      %3118 = vmatpush.bf16.msra.mxu0 %v2857
      %3119 = vmatpush.bf16.msra.mxu0 %v2853
      %3120 = vmatpush.bf16.msra.mxu0 %v2849
      %3121 = vmatpush.bf16.msra.mxu0 %v2845
      %3122 = vmatmul.bf16.gmra.mxu0 %v2256
      %v3123 = vpop.f32.mrf.mxu0
      %v3124 = vadd.f32 %v3111, %v3123
      %v3125 = vpop.f32.mrf.mxu0
      %3126 = vdwg.mxu0
      %3127 = vmatpush.bf16.msra.mxu0 %v2905
      %3128 = vmatpush.bf16.msra.mxu0 %v2901
      %3129 = vmatpush.bf16.msra.mxu0 %v2897
      %3130 = vmatpush.bf16.msra.mxu0 %v2893
      %3131 = vmatpush.bf16.msra.mxu0 %v2889
      %3132 = vmatpush.bf16.msra.mxu0 %v2885
      %3133 = vmatpush.bf16.msra.mxu0 %v2881
      %3134 = vmatpush.bf16.msra.mxu0 %v2877
      %3135 = vmatmul.bf16.gmra.mxu0 %v2257
      %v3136 = vpop.f32.mrf.mxu0
      %v3137 = vadd.f32 %v3124, %v3136
      %v3138 = vpop.f32.mrf.mxu0
      %3139 = vdwg.mxu0
      %3140 = vmatpush.bf16.msra.mxu0 %v2810
      %3141 = vmatpush.bf16.msra.mxu0 %v2806
      %3142 = vmatpush.bf16.msra.mxu0 %v2802
      %3143 = vmatpush.bf16.msra.mxu0 %v2798
      %3144 = vmatpush.bf16.msra.mxu0 %v2794
      %3145 = vmatpush.bf16.msra.mxu0 %v2790
      %3146 = vmatpush.bf16.msra.mxu0 %v2786
      %3147 = vmatpush.bf16.msra.mxu0 %v2782
      %3148 = vmatmul.bf16.gmra.mxu0 %v2254
      %v3149 = vpop.f32.mrf.mxu0
      %v3150 = vadd.f32 %v2390, %v3149
      %v3151 = vpop.f32.mrf.mxu0
      %3152 = vdwg.mxu0
      %3153 = vmatpush.bf16.msra.mxu0 %v2842
      %3154 = vmatpush.bf16.msra.mxu0 %v2838
      %3155 = vmatpush.bf16.msra.mxu0 %v2834
      %3156 = vmatpush.bf16.msra.mxu0 %v2830
      %3157 = vmatpush.bf16.msra.mxu0 %v2826
      %3158 = vmatpush.bf16.msra.mxu0 %v2822
      %3159 = vmatpush.bf16.msra.mxu0 %v2818
      %3160 = vmatpush.bf16.msra.mxu0 %v2814
      %3161 = vmatmul.bf16.gmra.mxu0 %v2255
      %v3162 = vpop.f32.mrf.mxu0
      %v3163 = vadd.f32 %v3150, %v3162
      %v3164 = vpop.f32.mrf.mxu0
      %3165 = vdwg.mxu0
      %3166 = vmatpush.bf16.msra.mxu0 %v2874
      %3167 = vmatpush.bf16.msra.mxu0 %v2870
      %3168 = vmatpush.bf16.msra.mxu0 %v2866
      %3169 = vmatpush.bf16.msra.mxu0 %v2862
      %3170 = vmatpush.bf16.msra.mxu0 %v2858
      %3171 = vmatpush.bf16.msra.mxu0 %v2854
      %3172 = vmatpush.bf16.msra.mxu0 %v2850
      %3173 = vmatpush.bf16.msra.mxu0 %v2846
      %3174 = vmatmul.bf16.gmra.mxu0 %v2256
      %v3175 = vpop.f32.mrf.mxu0
      %v3176 = vadd.f32 %v3163, %v3175
      %v3177 = vpop.f32.mrf.mxu0
      %3178 = vdwg.mxu0
      %3179 = vmatpush.bf16.msra.mxu0 %v2906
      %3180 = vmatpush.bf16.msra.mxu0 %v2902
      %3181 = vmatpush.bf16.msra.mxu0 %v2898
      %3182 = vmatpush.bf16.msra.mxu0 %v2894
      %3183 = vmatpush.bf16.msra.mxu0 %v2890
      %3184 = vmatpush.bf16.msra.mxu0 %v2886
      %3185 = vmatpush.bf16.msra.mxu0 %v2882
      %3186 = vmatpush.bf16.msra.mxu0 %v2878
      %3187 = vmatmul.bf16.gmra.mxu0 %v2257
      %v3188 = vpop.f32.mrf.mxu0
      %v3189 = vadd.f32 %v3176, %v3188
      %v3190 = vpop.f32.mrf.mxu0
      %3191 = vdwg.mxu0
      %3192 = vmatpush.bf16.msra.mxu0 %v2811
      %3193 = vmatpush.bf16.msra.mxu0 %v2807
      %3194 = vmatpush.bf16.msra.mxu0 %v2803
      %3195 = vmatpush.bf16.msra.mxu0 %v2799
      %3196 = vmatpush.bf16.msra.mxu0 %v2795
      %3197 = vmatpush.bf16.msra.mxu0 %v2791
      %3198 = vmatpush.bf16.msra.mxu0 %v2787
      %3199 = vmatpush.bf16.msra.mxu0 %v2783
      %3200 = vmatmul.bf16.gmra.mxu0 %v2254
      %v3201 = vpop.f32.mrf.mxu0
      %v3202 = vadd.f32 %v2391, %v3201
      %v3203 = vpop.f32.mrf.mxu0
      %3204 = vdwg.mxu0
      %3205 = vmatpush.bf16.msra.mxu0 %v2843
      %3206 = vmatpush.bf16.msra.mxu0 %v2839
      %3207 = vmatpush.bf16.msra.mxu0 %v2835
      %3208 = vmatpush.bf16.msra.mxu0 %v2831
      %3209 = vmatpush.bf16.msra.mxu0 %v2827
      %3210 = vmatpush.bf16.msra.mxu0 %v2823
      %3211 = vmatpush.bf16.msra.mxu0 %v2819
      %3212 = vmatpush.bf16.msra.mxu0 %v2815
      %3213 = vmatmul.bf16.gmra.mxu0 %v2255
      %v3214 = vpop.f32.mrf.mxu0
      %v3215 = vadd.f32 %v3202, %v3214
      %v3216 = vpop.f32.mrf.mxu0
      %3217 = vdwg.mxu0
      %3218 = vmatpush.bf16.msra.mxu0 %v2875
      %3219 = vmatpush.bf16.msra.mxu0 %v2871
      %3220 = vmatpush.bf16.msra.mxu0 %v2867
      %3221 = vmatpush.bf16.msra.mxu0 %v2863
      %3222 = vmatpush.bf16.msra.mxu0 %v2859
      %3223 = vmatpush.bf16.msra.mxu0 %v2855
      %3224 = vmatpush.bf16.msra.mxu0 %v2851
      %3225 = vmatpush.bf16.msra.mxu0 %v2847
      %3226 = vmatmul.bf16.gmra.mxu0 %v2256
      %v3227 = vpop.f32.mrf.mxu0
      %v3228 = vadd.f32 %v3215, %v3227
      %v3229 = vpop.f32.mrf.mxu0
      %3230 = vdwg.mxu0
      %3231 = vmatpush.bf16.msra.mxu0 %v2907
      %3232 = vmatpush.bf16.msra.mxu0 %v2903
      %3233 = vmatpush.bf16.msra.mxu0 %v2899
      %3234 = vmatpush.bf16.msra.mxu0 %v2895
      %3235 = vmatpush.bf16.msra.mxu0 %v2891
      %3236 = vmatpush.bf16.msra.mxu0 %v2887
      %3237 = vmatpush.bf16.msra.mxu0 %v2883
      %3238 = vmatpush.bf16.msra.mxu0 %v2879
      %3239 = vmatmul.bf16.gmra.mxu0 %v2257
      %v3240 = vpop.f32.mrf.mxu0
      %v3241 = vadd.f32 %v3228, %v3240
      %v3242 = vpop.f32.mrf.mxu0
      %3243 = vdwg.mxu0
      %v3244 = vmax.f32 %v3085, 0.0
      %v3245 = vmax.f32 %v3137, 0.0
      %v3246 = vmax.f32 %v3189, 0.0
      %v3247 = vmax.f32 %v3241, 0.0
      %v3248 = vpack.c.bf16 %v3244, %v3244
      %v3249 = vpack.c.bf16 %v3245, %v3245
      %v3250 = vpack.c.bf16 %v3246, %v3246
      %v3251 = vpack.c.bf16 %v3247, %v3247
      %v3252 = vld [vmem:[#allocation7] sm:$0xff]
      %v3253 = vld [vmem:[#allocation7 + $0x8] sm:$0xff]
      %v3254 = vld [vmem:[#allocation7 + $0x10] sm:$0xff]
      %v3255 = vld [vmem:[#allocation7 + $0x18] sm:$0xff]
      %v3256 = vld [vmem:[#allocation7 + $0x20] sm:$0xff]
      %v3257 = vld [vmem:[#allocation7 + $0x28] sm:$0xff]
      %v3258 = vld [vmem:[#allocation7 + $0x30] sm:$0xff]
      %v3259 = vld [vmem:[#allocation7 + $0x38] sm:$0xff]
      %v3260 = vld [vmem:[#allocation7 + $0x40] sm:$0xff]
      %v3261 = vld [vmem:[#allocation7 + $0x48] sm:$0xff]
      %v3262 = vld [vmem:[#allocation7 + $0x50] sm:$0xff]
      %v3263 = vld [vmem:[#allocation7 + $0x58] sm:$0xff]
      %v3264 = vld [vmem:[#allocation7 + $0x60] sm:$0xff]
      %v3265 = vld [vmem:[#allocation7 + $0x68] sm:$0xff]
      %v3266 = vld [vmem:[#allocation7 + $0x70] sm:$0xff]
      %v3267 = vld [vmem:[#allocation7 + $0x78] sm:$0xff]
      %v3268 = vld [vmem:[#allocation7 + $0x80] sm:$0xff]
      %v3269 = vld [vmem:[#allocation7 + $0x88] sm:$0xff]
      %v3270 = vld [vmem:[#allocation7 + $0x90] sm:$0xff]
      %v3271 = vld [vmem:[#allocation7 + $0x98] sm:$0xff]
      %v3272 = vld [vmem:[#allocation7 + $0xa0] sm:$0xff]
      %v3273 = vld [vmem:[#allocation7 + $0xa8] sm:$0xff]
      %v3274 = vld [vmem:[#allocation7 + $0xb0] sm:$0xff]
      %v3275 = vld [vmem:[#allocation7 + $0xb8] sm:$0xff]
      %v3276 = vld [vmem:[#allocation7 + $0xc0] sm:$0xff]
      %v3277 = vld [vmem:[#allocation7 + $0xc8] sm:$0xff]
      %v3278 = vld [vmem:[#allocation7 + $0xd0] sm:$0xff]
      %v3279 = vld [vmem:[#allocation7 + $0xd8] sm:$0xff]
      %v3280 = vld [vmem:[#allocation7 + $0xe0] sm:$0xff]
      %v3281 = vld [vmem:[#allocation7 + $0xe8] sm:$0xff]
      %v3282 = vld [vmem:[#allocation7 + $0xf0] sm:$0xff]
      %v3283 = vld [vmem:[#allocation7 + $0xf8] sm:$0xff]
      %v3284 = vld [vmem:[#allocation7 + $0x100] sm:$0xff]
      %v3285 = vld [vmem:[#allocation7 + $0x108] sm:$0xff]
      %v3286 = vld [vmem:[#allocation7 + $0x110] sm:$0xff]
      %v3287 = vld [vmem:[#allocation7 + $0x118] sm:$0xff]
      %v3288 = vld [vmem:[#allocation7 + $0x120] sm:$0xff]
      %v3289 = vld [vmem:[#allocation7 + $0x128] sm:$0xff]
      %v3290 = vld [vmem:[#allocation7 + $0x130] sm:$0xff]
      %v3291 = vld [vmem:[#allocation7 + $0x138] sm:$0xff]
      %v3292 = vld [vmem:[#allocation7 + $0x140] sm:$0xff]
      %v3293 = vld [vmem:[#allocation7 + $0x148] sm:$0xff]
      %v3294 = vld [vmem:[#allocation7 + $0x150] sm:$0xff]
      %v3295 = vld [vmem:[#allocation7 + $0x158] sm:$0xff]
      %v3296 = vld [vmem:[#allocation7 + $0x160] sm:$0xff]
      %v3297 = vld [vmem:[#allocation7 + $0x168] sm:$0xff]
      %v3298 = vld [vmem:[#allocation7 + $0x170] sm:$0xff]
      %v3299 = vld [vmem:[#allocation7 + $0x178] sm:$0xff]
      %v3300 = vld [vmem:[#allocation7 + $0x180] sm:$0xff]
      %v3301 = vld [vmem:[#allocation7 + $0x188] sm:$0xff]
      %v3302 = vld [vmem:[#allocation7 + $0x190] sm:$0xff]
      %v3303 = vld [vmem:[#allocation7 + $0x198] sm:$0xff]
      %v3304 = vld [vmem:[#allocation7 + $0x1a0] sm:$0xff]
      %v3305 = vld [vmem:[#allocation7 + $0x1a8] sm:$0xff]
      %v3306 = vld [vmem:[#allocation7 + $0x1b0] sm:$0xff]
      %v3307 = vld [vmem:[#allocation7 + $0x1b8] sm:$0xff]
      %v3308 = vld [vmem:[#allocation7 + $0x1c0] sm:$0xff]
      %v3309 = vld [vmem:[#allocation7 + $0x1c8] sm:$0xff]
      %v3310 = vld [vmem:[#allocation7 + $0x1d0] sm:$0xff]
      %v3311 = vld [vmem:[#allocation7 + $0x1d8] sm:$0xff]
      %v3312 = vld [vmem:[#allocation7 + $0x1e0] sm:$0xff]
      %v3313 = vld [vmem:[#allocation7 + $0x1e8] sm:$0xff]
      %v3314 = vld [vmem:[#allocation7 + $0x1f0] sm:$0xff]
      %v3315 = vld [vmem:[#allocation7 + $0x1f8] sm:$0xff]
      %v3316 = vld [vmem:[%s12] sm:$0x3]
      %v3318 = vperm.slane %v3316, 0
      %v3319 = vperm.slane %v3316, 1
      %v3386 = vunpack.c.l.b16 %v3252
      %v3387 = vunpack.c.h.b16 %v3252
      %v3388 = vunpack.c.l.b16 %v3253
      %v3389 = vunpack.c.h.b16 %v3253
      %v3390 = vunpack.c.l.b16 %v3254
      %v3391 = vunpack.c.h.b16 %v3254
      %v3392 = vunpack.c.l.b16 %v3255
      %v3393 = vunpack.c.h.b16 %v3255
      %v3394 = vunpack.c.l.b16 %v3256
      %v3395 = vunpack.c.h.b16 %v3256
      %v3396 = vunpack.c.l.b16 %v3257
      %v3397 = vunpack.c.h.b16 %v3257
      %v3398 = vunpack.c.l.b16 %v3258
      %v3399 = vunpack.c.h.b16 %v3258
      %v3400 = vunpack.c.l.b16 %v3259
      %v3401 = vunpack.c.h.b16 %v3259
      %v3402 = vunpack.c.l.b16 %v3260
      %v3403 = vunpack.c.h.b16 %v3260
      %v3404 = vunpack.c.l.b16 %v3261
      %v3405 = vunpack.c.h.b16 %v3261
      %v3406 = vunpack.c.l.b16 %v3262
      %v3407 = vunpack.c.h.b16 %v3262
      %v3408 = vunpack.c.l.b16 %v3263
      %v3409 = vunpack.c.h.b16 %v3263
      %v3410 = vunpack.c.l.b16 %v3264
      %v3411 = vunpack.c.h.b16 %v3264
      %v3412 = vunpack.c.l.b16 %v3265
      %v3413 = vunpack.c.h.b16 %v3265
      %v3414 = vunpack.c.l.b16 %v3266
      %v3415 = vunpack.c.h.b16 %v3266
      %v3416 = vunpack.c.l.b16 %v3267
      %v3417 = vunpack.c.h.b16 %v3267
      %v3418 = vunpack.c.l.b16 %v3268
      %v3419 = vunpack.c.h.b16 %v3268
      %v3420 = vunpack.c.l.b16 %v3269
      %v3421 = vunpack.c.h.b16 %v3269
      %v3422 = vunpack.c.l.b16 %v3270
      %v3423 = vunpack.c.h.b16 %v3270
      %v3424 = vunpack.c.l.b16 %v3271
      %v3425 = vunpack.c.h.b16 %v3271
      %v3426 = vunpack.c.l.b16 %v3272
      %v3427 = vunpack.c.h.b16 %v3272
      %v3428 = vunpack.c.l.b16 %v3273
      %v3429 = vunpack.c.h.b16 %v3273
      %v3430 = vunpack.c.l.b16 %v3274
      %v3431 = vunpack.c.h.b16 %v3274
      %v3432 = vunpack.c.l.b16 %v3275
      %v3433 = vunpack.c.h.b16 %v3275
      %v3434 = vunpack.c.l.b16 %v3276
      %v3435 = vunpack.c.h.b16 %v3276
      %v3436 = vunpack.c.l.b16 %v3277
      %v3437 = vunpack.c.h.b16 %v3277
      %v3438 = vunpack.c.l.b16 %v3278
      %v3439 = vunpack.c.h.b16 %v3278
      %v3440 = vunpack.c.l.b16 %v3279
      %v3441 = vunpack.c.h.b16 %v3279
      %v3442 = vunpack.c.l.b16 %v3280
      %v3443 = vunpack.c.h.b16 %v3280
      %v3444 = vunpack.c.l.b16 %v3281
      %v3445 = vunpack.c.h.b16 %v3281
      %v3446 = vunpack.c.l.b16 %v3282
      %v3447 = vunpack.c.h.b16 %v3282
      %v3448 = vunpack.c.l.b16 %v3283
      %v3449 = vunpack.c.h.b16 %v3283
      %v3450 = vunpack.c.l.b16 %v3284
      %v3451 = vunpack.c.h.b16 %v3284
      %v3452 = vunpack.c.l.b16 %v3285
      %v3453 = vunpack.c.h.b16 %v3285
      %v3454 = vunpack.c.l.b16 %v3286
      %v3455 = vunpack.c.h.b16 %v3286
      %v3456 = vunpack.c.l.b16 %v3287
      %v3457 = vunpack.c.h.b16 %v3287
      %v3458 = vunpack.c.l.b16 %v3288
      %v3459 = vunpack.c.h.b16 %v3288
      %v3460 = vunpack.c.l.b16 %v3289
      %v3461 = vunpack.c.h.b16 %v3289
      %v3462 = vunpack.c.l.b16 %v3290
      %v3463 = vunpack.c.h.b16 %v3290
      %v3464 = vunpack.c.l.b16 %v3291
      %v3465 = vunpack.c.h.b16 %v3291
      %v3466 = vunpack.c.l.b16 %v3292
      %v3467 = vunpack.c.h.b16 %v3292
      %v3468 = vunpack.c.l.b16 %v3293
      %v3469 = vunpack.c.h.b16 %v3293
      %v3470 = vunpack.c.l.b16 %v3294
      %v3471 = vunpack.c.h.b16 %v3294
      %v3472 = vunpack.c.l.b16 %v3295
      %v3473 = vunpack.c.h.b16 %v3295
      %v3474 = vunpack.c.l.b16 %v3296
      %v3475 = vunpack.c.h.b16 %v3296
      %v3476 = vunpack.c.l.b16 %v3297
      %v3477 = vunpack.c.h.b16 %v3297
      %v3478 = vunpack.c.l.b16 %v3298
      %v3479 = vunpack.c.h.b16 %v3298
      %v3480 = vunpack.c.l.b16 %v3299
      %v3481 = vunpack.c.h.b16 %v3299
      %v3482 = vunpack.c.l.b16 %v3300
      %v3483 = vunpack.c.h.b16 %v3300
      %v3484 = vunpack.c.l.b16 %v3301
      %v3485 = vunpack.c.h.b16 %v3301
      %v3486 = vunpack.c.l.b16 %v3302
      %v3487 = vunpack.c.h.b16 %v3302
      %v3488 = vunpack.c.l.b16 %v3303
      %v3489 = vunpack.c.h.b16 %v3303
      %v3490 = vunpack.c.l.b16 %v3304
      %v3491 = vunpack.c.h.b16 %v3304
      %v3492 = vunpack.c.l.b16 %v3305
      %v3493 = vunpack.c.h.b16 %v3305
      %v3494 = vunpack.c.l.b16 %v3306
      %v3495 = vunpack.c.h.b16 %v3306
      %v3496 = vunpack.c.l.b16 %v3307
      %v3497 = vunpack.c.h.b16 %v3307
      %v3498 = vunpack.c.l.b16 %v3308
      %v3499 = vunpack.c.h.b16 %v3308
      %v3500 = vunpack.c.l.b16 %v3309
      %v3501 = vunpack.c.h.b16 %v3309
      %v3502 = vunpack.c.l.b16 %v3310
      %v3503 = vunpack.c.h.b16 %v3310
      %v3504 = vunpack.c.l.b16 %v3311
      %v3505 = vunpack.c.h.b16 %v3311
      %v3506 = vunpack.c.l.b16 %v3312
      %v3507 = vunpack.c.h.b16 %v3312
      %v3508 = vunpack.c.l.b16 %v3313
      %v3509 = vunpack.c.h.b16 %v3313
      %v3510 = vunpack.c.l.b16 %v3314
      %v3511 = vunpack.c.h.b16 %v3314
      %v3512 = vunpack.c.l.b16 %v3315
      %v3513 = vunpack.c.h.b16 %v3315
      %v3514 = vpack.c.b16 %v3388, %v3386
      %v3515 = vpack.c.b16 %v3389, %v3387
      %v3516 = vpack.c.b16 %v3392, %v3390
      %v3517 = vpack.c.b16 %v3393, %v3391
      %v3518 = vpack.c.b16 %v3396, %v3394
      %v3519 = vpack.c.b16 %v3397, %v3395
      %v3520 = vpack.c.b16 %v3400, %v3398
      %v3521 = vpack.c.b16 %v3401, %v3399
      %v3522 = vpack.c.b16 %v3404, %v3402
      %v3523 = vpack.c.b16 %v3405, %v3403
      %v3524 = vpack.c.b16 %v3408, %v3406
      %v3525 = vpack.c.b16 %v3409, %v3407
      %v3526 = vpack.c.b16 %v3412, %v3410
      %v3527 = vpack.c.b16 %v3413, %v3411
      %v3528 = vpack.c.b16 %v3416, %v3414
      %v3529 = vpack.c.b16 %v3417, %v3415
      %v3530 = vpack.c.b16 %v3420, %v3418
      %v3531 = vpack.c.b16 %v3421, %v3419
      %v3532 = vpack.c.b16 %v3424, %v3422
      %v3533 = vpack.c.b16 %v3425, %v3423
      %v3534 = vpack.c.b16 %v3428, %v3426
      %v3535 = vpack.c.b16 %v3429, %v3427
      %v3536 = vpack.c.b16 %v3432, %v3430
      %v3537 = vpack.c.b16 %v3433, %v3431
      %v3538 = vpack.c.b16 %v3436, %v3434
      %v3539 = vpack.c.b16 %v3437, %v3435
      %v3540 = vpack.c.b16 %v3440, %v3438
      %v3541 = vpack.c.b16 %v3441, %v3439
      %v3542 = vpack.c.b16 %v3444, %v3442
      %v3543 = vpack.c.b16 %v3445, %v3443
      %v3544 = vpack.c.b16 %v3448, %v3446
      %v3545 = vpack.c.b16 %v3449, %v3447
      %v3546 = vpack.c.b16 %v3452, %v3450
      %v3547 = vpack.c.b16 %v3453, %v3451
      %v3548 = vpack.c.b16 %v3456, %v3454
      %v3549 = vpack.c.b16 %v3457, %v3455
      %v3550 = vpack.c.b16 %v3460, %v3458
      %v3551 = vpack.c.b16 %v3461, %v3459
      %v3552 = vpack.c.b16 %v3464, %v3462
      %v3553 = vpack.c.b16 %v3465, %v3463
      %v3554 = vpack.c.b16 %v3468, %v3466
      %v3555 = vpack.c.b16 %v3469, %v3467
      %v3556 = vpack.c.b16 %v3472, %v3470
      %v3557 = vpack.c.b16 %v3473, %v3471
      %v3558 = vpack.c.b16 %v3476, %v3474
      %v3559 = vpack.c.b16 %v3477, %v3475
      %v3560 = vpack.c.b16 %v3480, %v3478
      %v3561 = vpack.c.b16 %v3481, %v3479
      %v3562 = vpack.c.b16 %v3484, %v3482
      %v3563 = vpack.c.b16 %v3485, %v3483
      %v3564 = vpack.c.b16 %v3488, %v3486
      %v3565 = vpack.c.b16 %v3489, %v3487
      %v3566 = vpack.c.b16 %v3492, %v3490
      %v3567 = vpack.c.b16 %v3493, %v3491
      %v3568 = vpack.c.b16 %v3496, %v3494
      %v3569 = vpack.c.b16 %v3497, %v3495
      %v3570 = vpack.c.b16 %v3500, %v3498
      %v3571 = vpack.c.b16 %v3501, %v3499
      %v3572 = vpack.c.b16 %v3504, %v3502
      %v3573 = vpack.c.b16 %v3505, %v3503
      %v3574 = vpack.c.b16 %v3508, %v3506
      %v3575 = vpack.c.b16 %v3509, %v3507
      %v3576 = vpack.c.b16 %v3512, %v3510
      %v3577 = vpack.c.b16 %v3513, %v3511
      %3642 = vmatpush.bf16.msra.mxu0 %v3528
      %3643 = vmatpush.bf16.msra.mxu0 %v3526
      %3644 = vmatpush.bf16.msra.mxu0 %v3524
      %3645 = vmatpush.bf16.msra.mxu0 %v3522
      %3646 = vmatpush.bf16.msra.mxu0 %v3520
      %3647 = vmatpush.bf16.msra.mxu0 %v3518
      %3648 = vmatpush.bf16.msra.mxu0 %v3516
      %3649 = vmatpush.bf16.msra.mxu0 %v3514
      %3650 = vmatmul.bf16.gmra.mxu0 %v3248
      %v3651 = vpop.f32.mrf.mxu0
      %v3652 = vadd.f32 %v3318, %v3651
      %v3653 = vpop.f32.mrf.mxu0
      %3654 = vdwg.mxu0
      %3655 = vmatpush.bf16.msra.mxu0 %v3544
      %3656 = vmatpush.bf16.msra.mxu0 %v3542
      %3657 = vmatpush.bf16.msra.mxu0 %v3540
      %3658 = vmatpush.bf16.msra.mxu0 %v3538
      %3659 = vmatpush.bf16.msra.mxu0 %v3536
      %3660 = vmatpush.bf16.msra.mxu0 %v3534
      %3661 = vmatpush.bf16.msra.mxu0 %v3532
      %3662 = vmatpush.bf16.msra.mxu0 %v3530
      %3663 = vmatmul.bf16.gmra.mxu0 %v3249
      %v3664 = vpop.f32.mrf.mxu0
      %v3665 = vadd.f32 %v3652, %v3664
      %v3666 = vpop.f32.mrf.mxu0
      %3667 = vdwg.mxu0
      %3668 = vmatpush.bf16.msra.mxu0 %v3560
      %3669 = vmatpush.bf16.msra.mxu0 %v3558
      %3670 = vmatpush.bf16.msra.mxu0 %v3556
      %3671 = vmatpush.bf16.msra.mxu0 %v3554
      %3672 = vmatpush.bf16.msra.mxu0 %v3552
      %3673 = vmatpush.bf16.msra.mxu0 %v3550
      %3674 = vmatpush.bf16.msra.mxu0 %v3548
      %3675 = vmatpush.bf16.msra.mxu0 %v3546
      %3676 = vmatmul.bf16.gmra.mxu0 %v3250
      %v3677 = vpop.f32.mrf.mxu0
      %v3678 = vadd.f32 %v3665, %v3677
      %v3679 = vpop.f32.mrf.mxu0
      %3680 = vdwg.mxu0
      %3681 = vmatpush.bf16.msra.mxu0 %v3576
      %3682 = vmatpush.bf16.msra.mxu0 %v3574
      %3683 = vmatpush.bf16.msra.mxu0 %v3572
      %3684 = vmatpush.bf16.msra.mxu0 %v3570
      %3685 = vmatpush.bf16.msra.mxu0 %v3568
      %3686 = vmatpush.bf16.msra.mxu0 %v3566
      %3687 = vmatpush.bf16.msra.mxu0 %v3564
      %3688 = vmatpush.bf16.msra.mxu0 %v3562
      %3689 = vmatmul.bf16.gmra.mxu0 %v3251
      %v3690 = vpop.f32.mrf.mxu0
      %v3691 = vadd.f32 %v3678, %v3690
      %v3692 = vpop.f32.mrf.mxu0
      %3693 = vdwg.mxu0
      %3694 = vmatpush.bf16.msra.mxu0 %v3529
      %3695 = vmatpush.bf16.msra.mxu0 %v3527
      %3696 = vmatpush.bf16.msra.mxu0 %v3525
      %3697 = vmatpush.bf16.msra.mxu0 %v3523
      %3698 = vmatpush.bf16.msra.mxu0 %v3521
      %3699 = vmatpush.bf16.msra.mxu0 %v3519
      %3700 = vmatpush.bf16.msra.mxu0 %v3517
      %3701 = vmatpush.bf16.msra.mxu0 %v3515
      %3702 = vmatmul.bf16.gmra.mxu0 %v3248
      %v3703 = vpop.f32.mrf.mxu0
      %v3704 = vadd.f32 %v3319, %v3703
      %v3705 = vpop.f32.mrf.mxu0
      %3706 = vdwg.mxu0
      %3707 = vmatpush.bf16.msra.mxu0 %v3545
      %3708 = vmatpush.bf16.msra.mxu0 %v3543
      %3709 = vmatpush.bf16.msra.mxu0 %v3541
      %3710 = vmatpush.bf16.msra.mxu0 %v3539
      %3711 = vmatpush.bf16.msra.mxu0 %v3537
      %3712 = vmatpush.bf16.msra.mxu0 %v3535
      %3713 = vmatpush.bf16.msra.mxu0 %v3533
      %3714 = vmatpush.bf16.msra.mxu0 %v3531
      %3715 = vmatmul.bf16.gmra.mxu0 %v3249
      %v3716 = vpop.f32.mrf.mxu0
      %v3717 = vadd.f32 %v3704, %v3716
      %v3718 = vpop.f32.mrf.mxu0
      %3719 = vdwg.mxu0
      %3720 = vmatpush.bf16.msra.mxu0 %v3561
      %3721 = vmatpush.bf16.msra.mxu0 %v3559
      %3722 = vmatpush.bf16.msra.mxu0 %v3557
      %3723 = vmatpush.bf16.msra.mxu0 %v3555
      %3724 = vmatpush.bf16.msra.mxu0 %v3553
      %3725 = vmatpush.bf16.msra.mxu0 %v3551
      %3726 = vmatpush.bf16.msra.mxu0 %v3549
      %3727 = vmatpush.bf16.msra.mxu0 %v3547
      %3728 = vmatmul.bf16.gmra.mxu0 %v3250
      %v3729 = vpop.f32.mrf.mxu0
      %v3730 = vadd.f32 %v3717, %v3729
      %v3731 = vpop.f32.mrf.mxu0
      %3732 = vdwg.mxu0
      %3733 = vmatpush.bf16.msra.mxu0 %v3577
      %3734 = vmatpush.bf16.msra.mxu0 %v3575
      %3735 = vmatpush.bf16.msra.mxu0 %v3573
      %3736 = vmatpush.bf16.msra.mxu0 %v3571
      %3737 = vmatpush.bf16.msra.mxu0 %v3569
      %3738 = vmatpush.bf16.msra.mxu0 %v3567
      %3739 = vmatpush.bf16.msra.mxu0 %v3565
      %3740 = vmatpush.bf16.msra.mxu0 %v3563
      %3741 = vmatmul.bf16.gmra.mxu0 %v3251
      %v3742 = vpop.f32.mrf.mxu0
      %v3743 = vadd.f32 %v3730, %v3742
      %v3744 = vpop.f32.mrf.mxu0
      %3745 = vdwg.mxu0
      %v3746 = vmax.f32 %v3691, 0.0
      %v3747 = vmax.f32 %v3743, 0.0
      %v3748 = vpack.c.bf16 %v3746, %v3746
      %v3749 = vpack.c.bf16 %v3747, %v3747
      %v3750 = vld [vmem:[%s13] sm:$0xf]
      %v3751 = vld [vmem:[%s13 + $0x4] sm:$0xf]
      %v3752 = vld [vmem:[%s13 + $0x8] sm:$0xf]
      %v3753 = vld [vmem:[%s13 + $0xc] sm:$0xf]
      %v3754 = vld [vmem:[%s13 + $0x10] sm:$0xf]
      %v3755 = vld [vmem:[%s13 + $0x14] sm:$0xf]
      %v3756 = vld [vmem:[%s13 + $0x18] sm:$0xf]
      %v3757 = vld [vmem:[%s13 + $0x1c] sm:$0xf]
      %v3758 = vld [vmem:[%s13 + $0x20] sm:$0xf]
      %v3759 = vld [vmem:[%s13 + $0x24] sm:$0xf]
      %v3760 = vld [vmem:[%s13 + $0x28] sm:$0xf]
      %v3761 = vld [vmem:[%s13 + $0x2c] sm:$0xf]
      %v3762 = vld [vmem:[%s13 + $0x30] sm:$0xf]
      %v3763 = vld [vmem:[%s13 + $0x34] sm:$0xf]
      %v3764 = vld [vmem:[%s13 + $0x38] sm:$0xf]
      %v3765 = vld [vmem:[%s13 + $0x3c] sm:$0xf]
      %v3766 = vld [vmem:[%s13 + $0x40] sm:$0xf]
      %v3767 = vld [vmem:[%s13 + $0x44] sm:$0xf]
      %v3768 = vld [vmem:[%s13 + $0x48] sm:$0xf]
      %v3769 = vld [vmem:[%s13 + $0x4c] sm:$0xf]
      %v3770 = vld [vmem:[%s13 + $0x50] sm:$0xf]
      %v3771 = vld [vmem:[%s13 + $0x54] sm:$0xf]
      %v3772 = vld [vmem:[%s13 + $0x58] sm:$0xf]
      %v3773 = vld [vmem:[%s13 + $0x5c] sm:$0xf]
      %v3774 = vld [vmem:[%s13 + $0x60] sm:$0xf]
      %v3775 = vld [vmem:[%s13 + $0x64] sm:$0xf]
      %v3776 = vld [vmem:[%s13 + $0x68] sm:$0xf]
      %v3777 = vld [vmem:[%s13 + $0x6c] sm:$0xf]
      %v3778 = vld [vmem:[%s13 + $0x70] sm:$0xf]
      %v3779 = vld [vmem:[%s13 + $0x74] sm:$0xf]
      %v3780 = vld [vmem:[%s13 + $0x78] sm:$0xf]
      %v3781 = vld [vmem:[%s13 + $0x7c] sm:$0xf]
      %v3782 = vld [vmem:[%s14] sm:$0x1]
      %v3784 = vperm.slane %v3782, 0
      %v3818 = vunpack.c.l.b16 %v3750
      %v3819 = vunpack.c.l.b16 %v3751
      %v3820 = vunpack.c.l.b16 %v3752
      %v3821 = vunpack.c.l.b16 %v3753
      %v3822 = vunpack.c.l.b16 %v3754
      %v3823 = vunpack.c.l.b16 %v3755
      %v3824 = vunpack.c.l.b16 %v3756
      %v3825 = vunpack.c.l.b16 %v3757
      %v3826 = vunpack.c.l.b16 %v3758
      %v3827 = vunpack.c.l.b16 %v3759
      %v3828 = vunpack.c.l.b16 %v3760
      %v3829 = vunpack.c.l.b16 %v3761
      %v3830 = vunpack.c.l.b16 %v3762
      %v3831 = vunpack.c.l.b16 %v3763
      %v3832 = vunpack.c.l.b16 %v3764
      %v3833 = vunpack.c.l.b16 %v3765
      %v3834 = vunpack.c.l.b16 %v3766
      %v3835 = vunpack.c.l.b16 %v3767
      %v3836 = vunpack.c.l.b16 %v3768
      %v3837 = vunpack.c.l.b16 %v3769
      %v3838 = vunpack.c.l.b16 %v3770
      %v3839 = vunpack.c.l.b16 %v3771
      %v3840 = vunpack.c.l.b16 %v3772
      %v3841 = vunpack.c.l.b16 %v3773
      %v3842 = vunpack.c.l.b16 %v3774
      %v3843 = vunpack.c.l.b16 %v3775
      %v3844 = vunpack.c.l.b16 %v3776
      %v3845 = vunpack.c.l.b16 %v3777
      %v3846 = vunpack.c.l.b16 %v3778
      %v3847 = vunpack.c.l.b16 %v3779
      %v3848 = vunpack.c.l.b16 %v3780
      %v3849 = vunpack.c.l.b16 %v3781
      %v3850 = vpack.c.b16 %v3819, %v3818
      %v3851 = vpack.c.b16 %v3821, %v3820
      %v3852 = vpack.c.b16 %v3823, %v3822
      %v3853 = vpack.c.b16 %v3825, %v3824
      %v3854 = vpack.c.b16 %v3827, %v3826
      %v3855 = vpack.c.b16 %v3829, %v3828
      %v3856 = vpack.c.b16 %v3831, %v3830
      %v3857 = vpack.c.b16 %v3833, %v3832
      %v3858 = vpack.c.b16 %v3835, %v3834
      %v3859 = vpack.c.b16 %v3837, %v3836
      %v3860 = vpack.c.b16 %v3839, %v3838
      %v3861 = vpack.c.b16 %v3841, %v3840
      %v3862 = vpack.c.b16 %v3843, %v3842
      %v3863 = vpack.c.b16 %v3845, %v3844
      %v3864 = vpack.c.b16 %v3847, %v3846
      %v3865 = vpack.c.b16 %v3849, %v3848
      %3882 = vmatpush.bf16.msra.mxu0 %v3857
      %3883 = vmatpush.bf16.msra.mxu0 %v3856
      %3884 = vmatpush.bf16.msra.mxu0 %v3855
      %3885 = vmatpush.bf16.msra.mxu0 %v3854
      %3886 = vmatpush.bf16.msra.mxu0 %v3853
      %3887 = vmatpush.bf16.msra.mxu0 %v3852
      %3888 = vmatpush.bf16.msra.mxu0 %v3851
      %3889 = vmatpush.bf16.msra.mxu0 %v3850
      %3890 = vmatmul.bf16.gmra.mxu0 %v3748
      %v3891 = vpop.f32.mrf.mxu0
      %v3892 = vadd.f32 %v3784, %v3891
      %v3893 = vpop.f32.mrf.mxu0
      %3894 = vdwg.mxu0
      %3895 = vmatpush.bf16.msra.mxu0 %v3865
      %3896 = vmatpush.bf16.msra.mxu0 %v3864
      %3897 = vmatpush.bf16.msra.mxu0 %v3863
      %3898 = vmatpush.bf16.msra.mxu0 %v3862
      %3899 = vmatpush.bf16.msra.mxu0 %v3861
      %3900 = vmatpush.bf16.msra.mxu0 %v3860
      %3901 = vmatpush.bf16.msra.mxu0 %v3859
      %3902 = vmatpush.bf16.msra.mxu0 %v3858
      %3903 = vmatmul.bf16.gmra.mxu0 %v3749
      %v3904 = vpop.f32.mrf.mxu0
      %v3905 = vadd.f32 %v3892, %v3904
      %v3906 = vpop.f32.mrf.mxu0
      %3907 = vdwg.mxu0
      %v3909 = vrot.slane %v3905, 1
      %3911 = vst [vmem:[%s15] sm:$0x1] %v3905
      %3912 = vst [vmem:[%s15 + $0x1] sm:$0x1] %v3909
    $region81: #{_lambda_.1} parent=1 // pred_fallthru
      _
    // Predicated region
    $region82: #{_lambda_.1} parent=1 // pred_check
      _
    $region83: #{_lambda_.1} parent=1 // pred_check_branch
      %3914 = sbr.rel (0) target = $region85
    $region84: #{_lambda_.1} parent=1 // pred_region
      _
    $region85: #{_lambda_.1} parent=1 // pred_fallthru
      _
    // Predicated region
    $region86: #{_lambda_.1} parent=1 // pred_check
      _
    $region87: #{_lambda_.1} parent=1 // pred_check_branch
      %3916 = sbr.rel (0) target = $region89
    $region88: #{_lambda_.1} parent=1 // pred_region
      _
    $region89: #{_lambda_.1} parent=1 // pred_fallthru
      _
    %3917 = vsyncpa [#allocation4], 1
    %3918 = vsyncpa [#allocation6], 1

</llo_original>
